<compile_context>
chip_gen: v7x
topology: tpu7x:2x2x1
jax: 0.10.0
libtpu: 0.0.40
codegen_flags: <defaults>
</compile_context>

<pallas_src>
import functools

import numpy as np
import jax
import jax.numpy as jnp
from jax.experimental import pallas as pl
from jax.experimental.pallas import tpu as pltpu


# ---------------------------------------------------------------------------
# Pallas kernel: one (batch, query-tile) slab of the decoder layer
# ---------------------------------------------------------------------------

def decoder_layer_kernel(n_heads, tgtq_ref, tgt_ref, mem_ref, mask_ref, *rest):
    out_ref = rest[-1]
    (wq1, bq1, wk1, bk1, wv1, bv1, wo1, bo1,
     wq2, bq2, wk2, bk2, wv2, bv2, wo2, bo2,
     wf1, bf1, wf2, bf2,
     g1, be1, g2, be2, g3, be3) = [r[...] for r in rest[:-1]]

    f32 = jnp.float32
    bf16 = jnp.bfloat16

    tgt_q = tgtq_ref[0].astype(f32)     # (TQ, D)  residual stream (f32)
    tgt_kv = tgt_ref[0]                 # (St, D)  full target rows (self-attn K/V)
    mem_kv = mem_ref[0]                 # (Sm, D)  memory rows (cross-attn K/V)
    keep = mask_ref[0] != 0             # (TQ, St) hoisted once (masked_fill(mask==0))

    def softmax(s):
        m = jnp.max(s, axis=-1, keepdims=True)
        e = jnp.exp(s - m)
        denom = jnp.sum(e, axis=-1, keepdims=True)
        return e * pl.reciprocal(denom, approx=True)

    def layer_norm(x, g, b, eps=1e-5):
        mu = jnp.mean(x, axis=-1, keepdims=True)
        xc = x - mu
        var = jnp.mean(xc * xc, axis=-1, keepdims=True)
        return xc * jax.lax.rsqrt(var + eps) * g + b

    def mha(q_in, kv_in, wq, bq, wk, bk, wv, bv, wo, bo, mask_keep):
        D = wq.shape[0]
        dh = D // n_heads
        scale = f32(1.0 / np.sqrt(dh))

        qb = q_in.astype(bf16)
        kvb = kv_in.astype(bf16)
        # bf16 operands on the MXU, f32 accumulation.
        Q = (jnp.dot(qb, wq, preferred_element_type=f32) + bq).astype(bf16)
        K = (jnp.dot(kvb, wk, preferred_element_type=f32) + bk).astype(bf16)
        V = (jnp.dot(kvb, wv, preferred_element_type=f32) + bv).astype(bf16)

        acc = jnp.zeros((q_in.shape[0], D), f32)
        for h in range(n_heads):
            lo, hi = h * dh, (h + 1) * dh
            qh, kh, vh = Q[:, lo:hi], K[:, lo:hi], V[:, lo:hi]
            # (TQ, dh) x (Skv, dh) contracted over dh  ->  (TQ, Skv), f32
            s = jax.lax.dot_general(qh, kh, (((1,), (1,)), ((), ())),
                                    preferred_element_type=f32) * scale
            if mask_keep is not None:
                s = jnp.where(mask_keep, s, f32(-1e9))
            p = softmax(s)                                           # f32
            ctx = jnp.dot(p.astype(bf16), vh,                        # (TQ, dh)
                          preferred_element_type=f32)
            # fold this head straight through its slice of the output projection
            acc = acc + jnp.dot(ctx.astype(bf16), wo[lo:hi, :],
                                preferred_element_type=f32)
        return acc + bo

    # --- self attention + residual + norm1 (dropout1 == identity) -------------
    a = mha(tgt_q, tgt_kv, wq1, bq1, wk1, bk1, wv1, bv1, wo1, bo1, keep)
    x = layer_norm(tgt_q + a, g1, be1)

    # --- encoder-decoder attention + residual + norm2 (dropout2 == identity) --
    # TODO(synk): for long sequences, precompute the memory K/V projections once
    # (separate pallas_call or leading grid phase) instead of per query tile.
    a = mha(x, mem_kv, wq2, bq2, wk2, bk2, wv2, bv2, wo2, bo2, None)
    x = layer_norm(x + a, g2, be2)

    # --- position-wise FFN + residual + norm3 (dropout3 == identity) ----------
    # TODO(synk): at realistic D/FF (e.g. 1024/4096) tile wf1/wf2 over the hidden
    # dim with pltpu.emit_pipeline so the FFN weights need not be fully resident.
    h = jnp.maximum(
        jnp.dot(x.astype(bf16), wf1, preferred_element_type=f32) + bf1, 0.0)
    f = jnp.dot(h.astype(bf16), wf2, preferred_element_type=f32) + bf2
    x = layer_norm(x + f, g3, be3)

    out_ref[0] = x.astype(out_ref.dtype)


# ---------------------------------------------------------------------------
# wrapper
# ---------------------------------------------------------------------------

def transformer_decoder_layer(target, memory, target_mask, params, n_heads,
                              *, q_tile=None):
    B, St, D = target.shape
    _, Sm, _ = memory.shape
    if q_tile is None:
        q_tile = min(St, 128)
    assert St % q_tile == 0, "target length must be divisible by the query tile"
    n_qt = St // q_tile

    def full_spec(shape):
        nd = len(shape)
        return pl.BlockSpec(shape, lambda b, q, nd=nd: (0,) * nd)

    in_specs = [
        pl.BlockSpec((1, q_tile, D), lambda b, q: (b, q, 0)),    # target query rows
        pl.BlockSpec((1, St, D), lambda b, q: (b, 0, 0)),        # full target (K/V)
        pl.BlockSpec((1, Sm, D), lambda b, q: (b, 0, 0)),        # memory (K/V)
        pl.BlockSpec((1, q_tile, St), lambda b, q: (b, q, 0)),   # mask rows
    ] + [full_spec(tuple(p.shape)) for p in params]

    # advisory cost estimate for the XLA scheduler (matmul flops + softmax exps)
    ffn = params[16].shape[1]
    flops = 2 * B * (4 * St * D * D            # self-attn projections
                     + 2 * St * St * D         # self-attn QK^T + PV
                     + 2 * St * D * D + 2 * Sm * D * D   # cross-attn projections
                     + 2 * St * Sm * D         # cross-attn QK^T + PV
                     + 2 * St * D * ffn)       # FFN
    transcendentals = B * n_heads * (St * St + St * Sm)
    param_bytes = sum(int(np.prod(p.shape)) * p.dtype.itemsize for p in params)
    act_bytes = 4 * (2 * target.size + memory.size + target_mask.size + target.size)
    cost = pl.CostEstimate(flops=int(flops),
                           transcendentals=int(transcendentals),
                           bytes_accessed=int(param_bytes + act_bytes))

    kernel = functools.partial(decoder_layer_kernel, n_heads)
    return pl.pallas_call(
        kernel,
        out_shape=jax.ShapeDtypeStruct((B, St, D), target.dtype),
        grid=(B, n_qt),
        in_specs=in_specs,
        out_specs=pl.BlockSpec((1, q_tile, D), lambda b, q: (b, q, 0)),
        compiler_params=pltpu.CompilerParams(
            dimension_semantics=("parallel", "parallel"),
            vmem_limit_bytes=64 * 1024 * 1024),
        cost_estimate=cost,
    )(target, target, memory, target_mask, *params)


# ---------------------------------------------------------------------------
# deterministic parameter construction + pure-JAX (f32) reference
# ---------------------------------------------------------------------------

def init_params(key, D, dense_dim):
    def lin(k, din, dout):
        k1, k2 = jax.random.split(k)
        w = (jax.random.normal(k1, (din, dout), jnp.float32) * 0.05).astype(jnp.bfloat16)
        b = jax.random.normal(k2, (1, dout), jnp.float32) * 0.05
        return w, b

    keys = iter(jax.random.split(key, 16))
    params = []
    for _ in range(4):                      # self-attn: q, k, v, out projections
        w, b = lin(next(keys), D, D); params += [w, b]
    for _ in range(4):                      # enc-attn: q, k, v, out projections
        w, b = lin(next(keys), D, D); params += [w, b]
    w, b = lin(next(keys), D, dense_dim);   params += [w, b]   # FFN in
    w, b = lin(next(keys), dense_dim, D);   params += [w, b]   # FFN out
    for _ in range(3):                      # norm1/2/3 (torch default init)
        params += [jnp.ones((1, D), jnp.float32), jnp.zeros((1, D), jnp.float32)]
    return params


def _ref_layer_norm(x, g, b, eps=1e-5):
    mu = jnp.mean(x, axis=-1, keepdims=True)
    xc = x - mu
    var = jnp.mean(xc * xc, axis=-1, keepdims=True)
    return xc * jax.lax.rsqrt(var + eps) * g + b


def _ref_mha(q_in, kv_in, wq, bq, wk, bk, wv, bv, wo, bo, n_heads, mask=None):
    D = q_in.shape[-1]
    dh = D // n_heads
    scale = 1.0 / np.sqrt(dh)
    Q = q_in @ wq + bq
    K = kv_in @ wk + bk
    V = kv_in @ wv + bv
    heads = []
    for h in range(n_heads):
        sl = slice(h * dh, (h + 1) * dh)
        s = (Q[:, sl] @ K[:, sl].T) * scale
        if mask is not None:
            s = jnp.where(mask != 0, s, -1e9)
        p = jax.nn.softmax(s, axis=-1)
        heads.append(p @ V[:, sl])
    return jnp.concatenate(heads, axis=-1) @ wo + bo


def reference(target, memory, target_mask, params, n_heads):
    p32 = [jnp.asarray(t, jnp.float32) for t in params]
    (wq1, bq1, wk1, bk1, wv1, bv1, wo1, bo1,
     wq2, bq2, wk2, bk2, wv2, bv2, wo2, bo2,
     wf1, bf1, wf2, bf2,
     g1, be1, g2, be2, g3, be3) = p32

    def one(tgt, mem, m):
        a = _ref_mha(tgt, tgt, wq1, bq1, wk1, bk1, wv1, bv1, wo1, bo1, n_heads, mask=m)
        x = _ref_layer_norm(tgt + a, g1, be1)
        a = _ref_mha(x, mem, wq2, bq2, wk2, bk2, wv2, bv2, wo2, bo2, n_heads, mask=None)
        x = _ref_layer_norm(x + a, g2, be2)
        h = jnp.maximum(x @ wf1 + bf1, 0.0)
        f = h @ wf2 + bf2
        return _ref_layer_norm(x + f, g3, be3)

    return jax.vmap(one)(target, memory, target_mask)


# ---------------------------------------------------------------------------

if __name__ == "__main__":
    # small but lane-dense (D multiple of 128); q_tile=8 exercises query tiling.
    B, St, Sm, D, H, FF = 2, 16, 16, 128, 4, 256

    key = jax.random.PRNGKey(0)
    k1, k2, k3 = jax.random.split(key, 3)
    target = jax.random.normal(k1, (B, St, D), jnp.float32)
    memory = jax.random.normal(k2, (B, Sm, D), jnp.float32)
    causal = jnp.tril(jnp.ones((St, St), jnp.float32))
    target_mask = jnp.broadcast_to(causal, (B, St, St))

    params = init_params(k3, D, FF)

    out = transformer_decoder_layer(target, memory, target_mask, params, H, q_tile=8)
    out = jax.block_until_ready(out)

    ref = reference(target, memory, target_mask, params, H)
    # kernel uses bf16 matmul operands (f32 accumulation) + approx reciprocal,
    # reference is full f32 -> compare with mixed-precision-appropriate tolerance
    assert np.allclose(np.asarray(out), np.asarray(ref), atol=5e-2, rtol=5e-2), \
        "Pallas kernel mismatch vs pure-JAX reference"

    # TODO(synk): dropout layers are treated as identity (eval-mode forward);
    # stochastic training-mode dropout would need pltpu.prng_* inside the kernel.
    print("KERNEL_OK")
</pallas_src>

<mosaic_0001>
module attributes {stable_mosaic.version = 11 : i64} {
  func.func @decoder_layer_kernel(%arg0: i32, %arg1: i32, %arg2: memref<1x8x128xf32, #tpu.memory_space<vmem>>, %arg3: memref<1x16x128xf32, #tpu.memory_space<vmem>>, %arg4: memref<1x16x128xf32, #tpu.memory_space<vmem>>, %arg5: memref<1x8x16xf32, #tpu.memory_space<vmem>>, %arg6: memref<128x128xbf16, #tpu.memory_space<vmem>>, %arg7: memref<1x128xf32, #tpu.memory_space<vmem>>, %arg8: memref<128x128xbf16, #tpu.memory_space<vmem>>, %arg9: memref<1x128xf32, #tpu.memory_space<vmem>>, %arg10: memref<128x128xbf16, #tpu.memory_space<vmem>>, %arg11: memref<1x128xf32, #tpu.memory_space<vmem>>, %arg12: memref<128x128xbf16, #tpu.memory_space<vmem>>, %arg13: memref<1x128xf32, #tpu.memory_space<vmem>>, %arg14: memref<128x128xbf16, #tpu.memory_space<vmem>>, %arg15: memref<1x128xf32, #tpu.memory_space<vmem>>, %arg16: memref<128x128xbf16, #tpu.memory_space<vmem>>, %arg17: memref<1x128xf32, #tpu.memory_space<vmem>>, %arg18: memref<128x128xbf16, #tpu.memory_space<vmem>>, %arg19: memref<1x128xf32, #tpu.memory_space<vmem>>, %arg20: memref<128x128xbf16, #tpu.memory_space<vmem>>, %arg21: memref<1x128xf32, #tpu.memory_space<vmem>>, %arg22: memref<128x256xbf16, #tpu.memory_space<vmem>>, %arg23: memref<1x256xf32, #tpu.memory_space<vmem>>, %arg24: memref<256x128xbf16, #tpu.memory_space<vmem>>, %arg25: memref<1x128xf32, #tpu.memory_space<vmem>>, %arg26: memref<1x128xf32, #tpu.memory_space<vmem>>, %arg27: memref<1x128xf32, #tpu.memory_space<vmem>>, %arg28: memref<1x128xf32, #tpu.memory_space<vmem>>, %arg29: memref<1x128xf32, #tpu.memory_space<vmem>>, %arg30: memref<1x128xf32, #tpu.memory_space<vmem>>, %arg31: memref<1x128xf32, #tpu.memory_space<vmem>>, %arg32: memref<1x8x128xf32, #tpu.memory_space<vmem>>) attributes {dimension_semantics = [#tpu.dimension_semantics<parallel>, #tpu.dimension_semantics<parallel>], iteration_bounds = array<i64: 2, 2>, scalar_prefetch = 0 : i64, scratch_operands = 0 : i64, tpu.core_type = #tpu.core_type<tc>, window_params = [{transform_indices = @transform_0, window_bounds = array<i64: 1, 8, 128>}, {transform_indices = @transform_1, window_bounds = array<i64: 1, 16, 128>}, {transform_indices = @transform_2, window_bounds = array<i64: 1, 16, 128>}, {transform_indices = @transform_3, window_bounds = array<i64: 1, 8, 16>}, {pipeline_mode = #tpu.pipeline_mode<synchronous>, transform_indices = @transform_4, window_bounds = array<i64: 128, 128>}, {pipeline_mode = #tpu.pipeline_mode<synchronous>, transform_indices = @transform_5, window_bounds = array<i64: 1, 128>}, {pipeline_mode = #tpu.pipeline_mode<synchronous>, transform_indices = @transform_6, window_bounds = array<i64: 128, 128>}, {pipeline_mode = #tpu.pipeline_mode<synchronous>, transform_indices = @transform_7, window_bounds = array<i64: 1, 128>}, {pipeline_mode = #tpu.pipeline_mode<synchronous>, transform_indices = @transform_8, window_bounds = array<i64: 128, 128>}, {pipeline_mode = #tpu.pipeline_mode<synchronous>, transform_indices = @transform_9, window_bounds = array<i64: 1, 128>}, {pipeline_mode = #tpu.pipeline_mode<synchronous>, transform_indices = @transform_10, window_bounds = array<i64: 128, 128>}, {pipeline_mode = #tpu.pipeline_mode<synchronous>, transform_indices = @transform_11, window_bounds = array<i64: 1, 128>}, {pipeline_mode = #tpu.pipeline_mode<synchronous>, transform_indices = @transform_12, window_bounds = array<i64: 128, 128>}, {pipeline_mode = #tpu.pipeline_mode<synchronous>, transform_indices = @transform_13, window_bounds = array<i64: 1, 128>}, {pipeline_mode = #tpu.pipeline_mode<synchronous>, transform_indices = @transform_14, window_bounds = array<i64: 128, 128>}, {pipeline_mode = #tpu.pipeline_mode<synchronous>, transform_indices = @transform_15, window_bounds = array<i64: 1, 128>}, {pipeline_mode = #tpu.pipeline_mode<synchronous>, transform_indices = @transform_16, window_bounds = array<i64: 128, 128>}, {pipeline_mode = #tpu.pipeline_mode<synchronous>, transform_indices = @transform_17, window_bounds = array<i64: 1, 128>}, {pipeline_mode = #tpu.pipeline_mode<synchronous>, transform_indices = @transform_18, window_bounds = array<i64: 128, 128>}, {pipeline_mode = #tpu.pipeline_mode<synchronous>, transform_indices = @transform_19, window_bounds = array<i64: 1, 128>}, {pipeline_mode = #tpu.pipeline_mode<synchronous>, transform_indices = @transform_20, window_bounds = array<i64: 128, 256>}, {pipeline_mode = #tpu.pipeline_mode<synchronous>, transform_indices = @transform_21, window_bounds = array<i64: 1, 256>}, {pipeline_mode = #tpu.pipeline_mode<synchronous>, transform_indices = @transform_22, window_bounds = array<i64: 256, 128>}, {pipeline_mode = #tpu.pipeline_mode<synchronous>, transform_indices = @transform_23, window_bounds = array<i64: 1, 128>}, {pipeline_mode = #tpu.pipeline_mode<synchronous>, transform_indices = @transform_24, window_bounds = array<i64: 1, 128>}, {pipeline_mode = #tpu.pipeline_mode<synchronous>, transform_indices = @transform_25, window_bounds = array<i64: 1, 128>}, {pipeline_mode = #tpu.pipeline_mode<synchronous>, transform_indices = @transform_26, window_bounds = array<i64: 1, 128>}, {pipeline_mode = #tpu.pipeline_mode<synchronous>, transform_indices = @transform_27, window_bounds = array<i64: 1, 128>}, {pipeline_mode = #tpu.pipeline_mode<synchronous>, transform_indices = @transform_28, window_bounds = array<i64: 1, 128>}, {pipeline_mode = #tpu.pipeline_mode<synchronous>, transform_indices = @transform_29, window_bounds = array<i64: 1, 128>}, {transform_indices = @transform_30, window_bounds = array<i64: 1, 8, 128>}]} {
    %c0 = arith.constant 0 : index
    %c0_0 = arith.constant 0 : index
    %0 = vector.load %arg6[%c0, %c0_0] : memref<128x128xbf16, #tpu.memory_space<vmem>>, vector<128x128xbf16>
    %c0_1 = arith.constant 0 : index
    %c0_2 = arith.constant 0 : index
    %1 = vector.load %arg7[%c0_1, %c0_2] : memref<1x128xf32, #tpu.memory_space<vmem>>, vector<1x128xf32>
    %c0_3 = arith.constant 0 : index
    %c0_4 = arith.constant 0 : index
    %2 = vector.load %arg8[%c0_3, %c0_4] : memref<128x128xbf16, #tpu.memory_space<vmem>>, vector<128x128xbf16>
    %c0_5 = arith.constant 0 : index
    %c0_6 = arith.constant 0 : index
    %3 = vector.load %arg9[%c0_5, %c0_6] : memref<1x128xf32, #tpu.memory_space<vmem>>, vector<1x128xf32>
    %c0_7 = arith.constant 0 : index
    %c0_8 = arith.constant 0 : index
    %4 = vector.load %arg10[%c0_7, %c0_8] : memref<128x128xbf16, #tpu.memory_space<vmem>>, vector<128x128xbf16>
    %c0_9 = arith.constant 0 : index
    %c0_10 = arith.constant 0 : index
    %5 = vector.load %arg11[%c0_9, %c0_10] : memref<1x128xf32, #tpu.memory_space<vmem>>, vector<1x128xf32>
    %c0_11 = arith.constant 0 : index
    %c0_12 = arith.constant 0 : index
    %6 = vector.load %arg12[%c0_11, %c0_12] : memref<128x128xbf16, #tpu.memory_space<vmem>>, vector<128x128xbf16>
    %c0_13 = arith.constant 0 : index
    %c0_14 = arith.constant 0 : index
    %7 = vector.load %arg13[%c0_13, %c0_14] : memref<1x128xf32, #tpu.memory_space<vmem>>, vector<1x128xf32>
    %c0_15 = arith.constant 0 : index
    %c0_16 = arith.constant 0 : index
    %8 = vector.load %arg14[%c0_15, %c0_16] : memref<128x128xbf16, #tpu.memory_space<vmem>>, vector<128x128xbf16>
    %c0_17 = arith.constant 0 : index
    %c0_18 = arith.constant 0 : index
    %9 = vector.load %arg15[%c0_17, %c0_18] : memref<1x128xf32, #tpu.memory_space<vmem>>, vector<1x128xf32>
    %c0_19 = arith.constant 0 : index
    %c0_20 = arith.constant 0 : index
    %10 = vector.load %arg16[%c0_19, %c0_20] : memref<128x128xbf16, #tpu.memory_space<vmem>>, vector<128x128xbf16>
    %c0_21 = arith.constant 0 : index
    %c0_22 = arith.constant 0 : index
    %11 = vector.load %arg17[%c0_21, %c0_22] : memref<1x128xf32, #tpu.memory_space<vmem>>, vector<1x128xf32>
    %c0_23 = arith.constant 0 : index
    %c0_24 = arith.constant 0 : index
    %12 = vector.load %arg18[%c0_23, %c0_24] : memref<128x128xbf16, #tpu.memory_space<vmem>>, vector<128x128xbf16>
    %c0_25 = arith.constant 0 : index
    %c0_26 = arith.constant 0 : index
    %13 = vector.load %arg19[%c0_25, %c0_26] : memref<1x128xf32, #tpu.memory_space<vmem>>, vector<1x128xf32>
    %c0_27 = arith.constant 0 : index
    %c0_28 = arith.constant 0 : index
    %14 = vector.load %arg20[%c0_27, %c0_28] : memref<128x128xbf16, #tpu.memory_space<vmem>>, vector<128x128xbf16>
    %c0_29 = arith.constant 0 : index
    %c0_30 = arith.constant 0 : index
    %15 = vector.load %arg21[%c0_29, %c0_30] : memref<1x128xf32, #tpu.memory_space<vmem>>, vector<1x128xf32>
    %c0_31 = arith.constant 0 : index
    %c0_32 = arith.constant 0 : index
    %16 = vector.load %arg22[%c0_31, %c0_32] : memref<128x256xbf16, #tpu.memory_space<vmem>>, vector<128x256xbf16>
    %c0_33 = arith.constant 0 : index
    %c0_34 = arith.constant 0 : index
    %17 = vector.load %arg23[%c0_33, %c0_34] : memref<1x256xf32, #tpu.memory_space<vmem>>, vector<1x256xf32>
    %c0_35 = arith.constant 0 : index
    %c0_36 = arith.constant 0 : index
    %18 = vector.load %arg24[%c0_35, %c0_36] : memref<256x128xbf16, #tpu.memory_space<vmem>>, vector<256x128xbf16>
    %c0_37 = arith.constant 0 : index
    %c0_38 = arith.constant 0 : index
    %19 = vector.load %arg25[%c0_37, %c0_38] : memref<1x128xf32, #tpu.memory_space<vmem>>, vector<1x128xf32>
    %c0_39 = arith.constant 0 : index
    %c0_40 = arith.constant 0 : index
    %20 = vector.load %arg26[%c0_39, %c0_40] : memref<1x128xf32, #tpu.memory_space<vmem>>, vector<1x128xf32>
    %c0_41 = arith.constant 0 : index
    %c0_42 = arith.constant 0 : index
    %21 = vector.load %arg27[%c0_41, %c0_42] : memref<1x128xf32, #tpu.memory_space<vmem>>, vector<1x128xf32>
    %c0_43 = arith.constant 0 : index
    %c0_44 = arith.constant 0 : index
    %22 = vector.load %arg28[%c0_43, %c0_44] : memref<1x128xf32, #tpu.memory_space<vmem>>, vector<1x128xf32>
    %c0_45 = arith.constant 0 : index
    %c0_46 = arith.constant 0 : index
    %23 = vector.load %arg29[%c0_45, %c0_46] : memref<1x128xf32, #tpu.memory_space<vmem>>, vector<1x128xf32>
    %c0_47 = arith.constant 0 : index
    %c0_48 = arith.constant 0 : index
    %24 = vector.load %arg30[%c0_47, %c0_48] : memref<1x128xf32, #tpu.memory_space<vmem>>, vector<1x128xf32>
    %c0_49 = arith.constant 0 : index
    %c0_50 = arith.constant 0 : index
    %25 = vector.load %arg31[%c0_49, %c0_50] : memref<1x128xf32, #tpu.memory_space<vmem>>, vector<1x128xf32>
    %c0_51 = arith.constant 0 : index
    %c0_52 = arith.constant 0 : index
    %c0_53 = arith.constant 0 : index
    %26 = vector.load %arg2[%c0_51, %c0_52, %c0_53] : memref<1x8x128xf32, #tpu.memory_space<vmem>>, vector<1x8x128xf32>
    %27 = vector.shape_cast %26 : vector<1x8x128xf32> to vector<8x128xf32>
    %c0_54 = arith.constant 0 : index
    %c0_55 = arith.constant 0 : index
    %c0_56 = arith.constant 0 : index
    %28 = vector.load %arg3[%c0_54, %c0_55, %c0_56] : memref<1x16x128xf32, #tpu.memory_space<vmem>>, vector<1x16x128xf32>
    %29 = vector.shape_cast %28 : vector<1x16x128xf32> to vector<16x128xf32>
    %c0_57 = arith.constant 0 : index
    %c0_58 = arith.constant 0 : index
    %c0_59 = arith.constant 0 : index
    %30 = vector.load %arg4[%c0_57, %c0_58, %c0_59] : memref<1x16x128xf32, #tpu.memory_space<vmem>>, vector<1x16x128xf32>
    %31 = vector.shape_cast %30 : vector<1x16x128xf32> to vector<16x128xf32>
    %c0_60 = arith.constant 0 : index
    %c0_61 = arith.constant 0 : index
    %c0_62 = arith.constant 0 : index
    %32 = vector.load %arg5[%c0_60, %c0_61, %c0_62] : memref<1x8x16xf32, #tpu.memory_space<vmem>>, vector<1x8x16xf32>
    %33 = vector.shape_cast %32 : vector<1x8x16xf32> to vector<8x16xf32>
    %cst = arith.constant 0.000000e+00 : f32
    %34 = vector.broadcast %cst : f32 to vector<8x16xf32>
    %35 = arith.cmpf one, %33, %34 : vector<8x16xf32>
    %36 = arith.truncf %27 : vector<8x128xf32> to vector<8x128xbf16>
    %37 = arith.truncf %29 : vector<16x128xf32> to vector<16x128xbf16>
    %cst_63 = arith.constant dense<0.000000e+00> : vector<8x128xf32>
    %38 = tpu.matmul %36, %0, %cst_63 {dimension_numbers = #tpu.dot_dimension_numbers<[1], [0], [0], [1], [0, 0, 1, 1], [], []>} : vector<8x128xbf16>, vector<128x128xbf16>, vector<8x128xf32> -> vector<8x128xf32>
    %39 = vector.broadcast %1 : vector<1x128xf32> to vector<8x128xf32>
    %40 = arith.addf %38, %39 : vector<8x128xf32>
    %41 = arith.truncf %40 : vector<8x128xf32> to vector<8x128xbf16>
    %cst_64 = arith.constant dense<0.000000e+00> : vector<16x128xf32>
    %42 = tpu.matmul %37, %2, %cst_64 {dimension_numbers = #tpu.dot_dimension_numbers<[1], [0], [0], [1], [0, 0, 1, 1], [], []>} : vector<16x128xbf16>, vector<128x128xbf16>, vector<16x128xf32> -> vector<16x128xf32>
    %43 = vector.broadcast %3 : vector<1x128xf32> to vector<16x128xf32>
    %44 = arith.addf %42, %43 : vector<16x128xf32>
    %45 = arith.truncf %44 : vector<16x128xf32> to vector<16x128xbf16>
    %cst_65 = arith.constant dense<0.000000e+00> : vector<16x128xf32>
    %46 = tpu.matmul %37, %4, %cst_65 {dimension_numbers = #tpu.dot_dimension_numbers<[1], [0], [0], [1], [0, 0, 1, 1], [], []>} : vector<16x128xbf16>, vector<128x128xbf16>, vector<16x128xf32> -> vector<16x128xf32>
    %47 = vector.broadcast %5 : vector<1x128xf32> to vector<16x128xf32>
    %48 = arith.addf %46, %47 : vector<16x128xf32>
    %49 = arith.truncf %48 : vector<16x128xf32> to vector<16x128xbf16>
    %cst_66 = arith.constant 0.000000e+00 : f32
    %50 = vector.broadcast %cst_66 : f32 to vector<8x128xf32>
    %51 = vector.extract_strided_slice %41 {offsets = [0, 0], sizes = [8, 32], strides = [1, 1]} : vector<8x128xbf16> to vector<8x32xbf16>
    %52 = vector.extract_strided_slice %45 {offsets = [0, 0], sizes = [16, 32], strides = [1, 1]} : vector<16x128xbf16> to vector<16x32xbf16>
    %53 = vector.extract_strided_slice %49 {offsets = [0, 0], sizes = [16, 32], strides = [1, 1]} : vector<16x128xbf16> to vector<16x32xbf16>
    %cst_67 = arith.constant dense<0.000000e+00> : vector<8x16xf32>
    %54 = tpu.matmul %51, %52, %cst_67 {dimension_numbers = #tpu.dot_dimension_numbers<[1], [1], [0], [0], [0, 0, 1, 0], [], []>} : vector<8x32xbf16>, vector<16x32xbf16>, vector<8x16xf32> -> vector<8x16xf32>
    %cst_68 = arith.constant 0.176776692 : f32
    %55 = vector.broadcast %cst_68 : f32 to vector<8x16xf32>
    %56 = arith.mulf %54, %55 : vector<8x16xf32>
    %cst_69 = arith.constant -1.000000e+09 : f32
    %57 = vector.broadcast %cst_69 : f32 to vector<8x16xf32>
    %58 = arith.select %35, %56, %57 : vector<8x16xi1>, vector<8x16xf32>
    %cst_70 = arith.constant dense<0xFF800000> : vector<8xf32>
    %59 = vector.multi_reduction <maximumf>, %58, %cst_70 [1] : vector<8x16xf32> to vector<8xf32>
    %60 = vector.shape_cast %59 : vector<8xf32> to vector<8x1xf32>
    %61 = vector.broadcast %60 : vector<8x1xf32> to vector<8x16xf32>
    %62 = arith.subf %58, %61 : vector<8x16xf32>
    %63 = math.exp %62 : vector<8x16xf32>
    %cst_71 = arith.constant dense<0.000000e+00> : vector<8xf32>
    %64 = vector.multi_reduction <add>, %63, %cst_71 [1] : vector<8x16xf32> to vector<8xf32>
    %65 = vector.shape_cast %64 : vector<8xf32> to vector<8x1xf32>
    %66 = tpu.reciprocal %65 {approx = true} : vector<8x1xf32> -> vector<8x1xf32>
    %67 = vector.broadcast %66 : vector<8x1xf32> to vector<8x16xf32>
    %68 = arith.mulf %63, %67 : vector<8x16xf32>
    %69 = arith.truncf %68 : vector<8x16xf32> to vector<8x16xbf16>
    %cst_72 = arith.constant dense<0.000000e+00> : vector<8x32xf32>
    %70 = tpu.matmul %69, %53, %cst_72 {dimension_numbers = #tpu.dot_dimension_numbers<[1], [0], [0], [1], [0, 0, 1, 1], [], []>} : vector<8x16xbf16>, vector<16x32xbf16>, vector<8x32xf32> -> vector<8x32xf32>
    %71 = arith.truncf %70 : vector<8x32xf32> to vector<8x32xbf16>
    %72 = vector.extract_strided_slice %6 {offsets = [0, 0], sizes = [32, 128], strides = [1, 1]} : vector<128x128xbf16> to vector<32x128xbf16>
    %cst_73 = arith.constant dense<0.000000e+00> : vector<8x128xf32>
    %73 = tpu.matmul %71, %72, %cst_73 {dimension_numbers = #tpu.dot_dimension_numbers<[1], [0], [0], [1], [0, 0, 1, 1], [], []>} : vector<8x32xbf16>, vector<32x128xbf16>, vector<8x128xf32> -> vector<8x128xf32>
    %74 = arith.addf %50, %73 : vector<8x128xf32>
    %75 = vector.extract_strided_slice %41 {offsets = [0, 32], sizes = [8, 32], strides = [1, 1]} : vector<8x128xbf16> to vector<8x32xbf16>
    %76 = vector.extract_strided_slice %45 {offsets = [0, 32], sizes = [16, 32], strides = [1, 1]} : vector<16x128xbf16> to vector<16x32xbf16>
    %77 = vector.extract_strided_slice %49 {offsets = [0, 32], sizes = [16, 32], strides = [1, 1]} : vector<16x128xbf16> to vector<16x32xbf16>
    %cst_74 = arith.constant dense<0.000000e+00> : vector<8x16xf32>
    %78 = tpu.matmul %75, %76, %cst_74 {dimension_numbers = #tpu.dot_dimension_numbers<[1], [1], [0], [0], [0, 0, 1, 0], [], []>} : vector<8x32xbf16>, vector<16x32xbf16>, vector<8x16xf32> -> vector<8x16xf32>
    %cst_75 = arith.constant 0.176776692 : f32
    %79 = vector.broadcast %cst_75 : f32 to vector<8x16xf32>
    %80 = arith.mulf %78, %79 : vector<8x16xf32>
    %cst_76 = arith.constant -1.000000e+09 : f32
    %81 = vector.broadcast %cst_76 : f32 to vector<8x16xf32>
    %82 = arith.select %35, %80, %81 : vector<8x16xi1>, vector<8x16xf32>
    %cst_77 = arith.constant dense<0xFF800000> : vector<8xf32>
    %83 = vector.multi_reduction <maximumf>, %82, %cst_77 [1] : vector<8x16xf32> to vector<8xf32>
    %84 = vector.shape_cast %83 : vector<8xf32> to vector<8x1xf32>
    %85 = vector.broadcast %84 : vector<8x1xf32> to vector<8x16xf32>
    %86 = arith.subf %82, %85 : vector<8x16xf32>
    %87 = math.exp %86 : vector<8x16xf32>
    %cst_78 = arith.constant dense<0.000000e+00> : vector<8xf32>
    %88 = vector.multi_reduction <add>, %87, %cst_78 [1] : vector<8x16xf32> to vector<8xf32>
    %89 = vector.shape_cast %88 : vector<8xf32> to vector<8x1xf32>
    %90 = tpu.reciprocal %89 {approx = true} : vector<8x1xf32> -> vector<8x1xf32>
    %91 = vector.broadcast %90 : vector<8x1xf32> to vector<8x16xf32>
    %92 = arith.mulf %87, %91 : vector<8x16xf32>
    %93 = arith.truncf %92 : vector<8x16xf32> to vector<8x16xbf16>
    %cst_79 = arith.constant dense<0.000000e+00> : vector<8x32xf32>
    %94 = tpu.matmul %93, %77, %cst_79 {dimension_numbers = #tpu.dot_dimension_numbers<[1], [0], [0], [1], [0, 0, 1, 1], [], []>} : vector<8x16xbf16>, vector<16x32xbf16>, vector<8x32xf32> -> vector<8x32xf32>
    %95 = arith.truncf %94 : vector<8x32xf32> to vector<8x32xbf16>
    %96 = vector.extract_strided_slice %6 {offsets = [32, 0], sizes = [32, 128], strides = [1, 1]} : vector<128x128xbf16> to vector<32x128xbf16>
    %cst_80 = arith.constant dense<0.000000e+00> : vector<8x128xf32>
    %97 = tpu.matmul %95, %96, %cst_80 {dimension_numbers = #tpu.dot_dimension_numbers<[1], [0], [0], [1], [0, 0, 1, 1], [], []>} : vector<8x32xbf16>, vector<32x128xbf16>, vector<8x128xf32> -> vector<8x128xf32>
    %98 = arith.addf %74, %97 : vector<8x128xf32>
    %99 = vector.extract_strided_slice %41 {offsets = [0, 64], sizes = [8, 32], strides = [1, 1]} : vector<8x128xbf16> to vector<8x32xbf16>
    %100 = vector.extract_strided_slice %45 {offsets = [0, 64], sizes = [16, 32], strides = [1, 1]} : vector<16x128xbf16> to vector<16x32xbf16>
    %101 = vector.extract_strided_slice %49 {offsets = [0, 64], sizes = [16, 32], strides = [1, 1]} : vector<16x128xbf16> to vector<16x32xbf16>
    %cst_81 = arith.constant dense<0.000000e+00> : vector<8x16xf32>
    %102 = tpu.matmul %99, %100, %cst_81 {dimension_numbers = #tpu.dot_dimension_numbers<[1], [1], [0], [0], [0, 0, 1, 0], [], []>} : vector<8x32xbf16>, vector<16x32xbf16>, vector<8x16xf32> -> vector<8x16xf32>
    %cst_82 = arith.constant 0.176776692 : f32
    %103 = vector.broadcast %cst_82 : f32 to vector<8x16xf32>
    %104 = arith.mulf %102, %103 : vector<8x16xf32>
    %cst_83 = arith.constant -1.000000e+09 : f32
    %105 = vector.broadcast %cst_83 : f32 to vector<8x16xf32>
    %106 = arith.select %35, %104, %105 : vector<8x16xi1>, vector<8x16xf32>
    %cst_84 = arith.constant dense<0xFF800000> : vector<8xf32>
    %107 = vector.multi_reduction <maximumf>, %106, %cst_84 [1] : vector<8x16xf32> to vector<8xf32>
    %108 = vector.shape_cast %107 : vector<8xf32> to vector<8x1xf32>
    %109 = vector.broadcast %108 : vector<8x1xf32> to vector<8x16xf32>
    %110 = arith.subf %106, %109 : vector<8x16xf32>
    %111 = math.exp %110 : vector<8x16xf32>
    %cst_85 = arith.constant dense<0.000000e+00> : vector<8xf32>
    %112 = vector.multi_reduction <add>, %111, %cst_85 [1] : vector<8x16xf32> to vector<8xf32>
    %113 = vector.shape_cast %112 : vector<8xf32> to vector<8x1xf32>
    %114 = tpu.reciprocal %113 {approx = true} : vector<8x1xf32> -> vector<8x1xf32>
    %115 = vector.broadcast %114 : vector<8x1xf32> to vector<8x16xf32>
    %116 = arith.mulf %111, %115 : vector<8x16xf32>
    %117 = arith.truncf %116 : vector<8x16xf32> to vector<8x16xbf16>
    %cst_86 = arith.constant dense<0.000000e+00> : vector<8x32xf32>
    %118 = tpu.matmul %117, %101, %cst_86 {dimension_numbers = #tpu.dot_dimension_numbers<[1], [0], [0], [1], [0, 0, 1, 1], [], []>} : vector<8x16xbf16>, vector<16x32xbf16>, vector<8x32xf32> -> vector<8x32xf32>
    %119 = arith.truncf %118 : vector<8x32xf32> to vector<8x32xbf16>
    %120 = vector.extract_strided_slice %6 {offsets = [64, 0], sizes = [32, 128], strides = [1, 1]} : vector<128x128xbf16> to vector<32x128xbf16>
    %cst_87 = arith.constant dense<0.000000e+00> : vector<8x128xf32>
    %121 = tpu.matmul %119, %120, %cst_87 {dimension_numbers = #tpu.dot_dimension_numbers<[1], [0], [0], [1], [0, 0, 1, 1], [], []>} : vector<8x32xbf16>, vector<32x128xbf16>, vector<8x128xf32> -> vector<8x128xf32>
    %122 = arith.addf %98, %121 : vector<8x128xf32>
    %123 = vector.extract_strided_slice %41 {offsets = [0, 96], sizes = [8, 32], strides = [1, 1]} : vector<8x128xbf16> to vector<8x32xbf16>
    %124 = vector.extract_strided_slice %45 {offsets = [0, 96], sizes = [16, 32], strides = [1, 1]} : vector<16x128xbf16> to vector<16x32xbf16>
    %125 = vector.extract_strided_slice %49 {offsets = [0, 96], sizes = [16, 32], strides = [1, 1]} : vector<16x128xbf16> to vector<16x32xbf16>
    %cst_88 = arith.constant dense<0.000000e+00> : vector<8x16xf32>
    %126 = tpu.matmul %123, %124, %cst_88 {dimension_numbers = #tpu.dot_dimension_numbers<[1], [1], [0], [0], [0, 0, 1, 0], [], []>} : vector<8x32xbf16>, vector<16x32xbf16>, vector<8x16xf32> -> vector<8x16xf32>
    %cst_89 = arith.constant 0.176776692 : f32
    %127 = vector.broadcast %cst_89 : f32 to vector<8x16xf32>
    %128 = arith.mulf %126, %127 : vector<8x16xf32>
    %cst_90 = arith.constant -1.000000e+09 : f32
    %129 = vector.broadcast %cst_90 : f32 to vector<8x16xf32>
    %130 = arith.select %35, %128, %129 : vector<8x16xi1>, vector<8x16xf32>
    %cst_91 = arith.constant dense<0xFF800000> : vector<8xf32>
    %131 = vector.multi_reduction <maximumf>, %130, %cst_91 [1] : vector<8x16xf32> to vector<8xf32>
    %132 = vector.shape_cast %131 : vector<8xf32> to vector<8x1xf32>
    %133 = vector.broadcast %132 : vector<8x1xf32> to vector<8x16xf32>
    %134 = arith.subf %130, %133 : vector<8x16xf32>
    %135 = math.exp %134 : vector<8x16xf32>
    %cst_92 = arith.constant dense<0.000000e+00> : vector<8xf32>
    %136 = vector.multi_reduction <add>, %135, %cst_92 [1] : vector<8x16xf32> to vector<8xf32>
    %137 = vector.shape_cast %136 : vector<8xf32> to vector<8x1xf32>
    %138 = tpu.reciprocal %137 {approx = true} : vector<8x1xf32> -> vector<8x1xf32>
    %139 = vector.broadcast %138 : vector<8x1xf32> to vector<8x16xf32>
    %140 = arith.mulf %135, %139 : vector<8x16xf32>
    %141 = arith.truncf %140 : vector<8x16xf32> to vector<8x16xbf16>
    %cst_93 = arith.constant dense<0.000000e+00> : vector<8x32xf32>
    %142 = tpu.matmul %141, %125, %cst_93 {dimension_numbers = #tpu.dot_dimension_numbers<[1], [0], [0], [1], [0, 0, 1, 1], [], []>} : vector<8x16xbf16>, vector<16x32xbf16>, vector<8x32xf32> -> vector<8x32xf32>
    %143 = arith.truncf %142 : vector<8x32xf32> to vector<8x32xbf16>
    %144 = vector.extract_strided_slice %6 {offsets = [96, 0], sizes = [32, 128], strides = [1, 1]} : vector<128x128xbf16> to vector<32x128xbf16>
    %cst_94 = arith.constant dense<0.000000e+00> : vector<8x128xf32>
    %145 = tpu.matmul %143, %144, %cst_94 {dimension_numbers = #tpu.dot_dimension_numbers<[1], [0], [0], [1], [0, 0, 1, 1], [], []>} : vector<8x32xbf16>, vector<32x128xbf16>, vector<8x128xf32> -> vector<8x128xf32>
    %146 = arith.addf %122, %145 : vector<8x128xf32>
    %147 = vector.broadcast %7 : vector<1x128xf32> to vector<8x128xf32>
    %148 = arith.addf %146, %147 : vector<8x128xf32>
    %149 = arith.addf %27, %148 : vector<8x128xf32>
    %cst_95 = arith.constant dense<0.000000e+00> : vector<8xf32>
    %150 = vector.multi_reduction <add>, %149, %cst_95 [1] : vector<8x128xf32> to vector<8xf32>
    %151 = vector.shape_cast %150 : vector<8xf32> to vector<8x1xf32>
    %cst_96 = arith.constant 1.280000e+02 : f32
    %152 = vector.broadcast %cst_96 : f32 to vector<8x1xf32>
    %153 = arith.divf %151, %152 : vector<8x1xf32>
    %154 = vector.broadcast %153 : vector<8x1xf32> to vector<8x128xf32>
    %155 = arith.subf %149, %154 : vector<8x128xf32>
    %156 = arith.mulf %155, %155 : vector<8x128xf32>
    %cst_97 = arith.constant dense<0.000000e+00> : vector<8xf32>
    %157 = vector.multi_reduction <add>, %156, %cst_97 [1] : vector<8x128xf32> to vector<8xf32>
    %158 = vector.shape_cast %157 : vector<8xf32> to vector<8x1xf32>
    %cst_98 = arith.constant 1.280000e+02 : f32
    %159 = vector.broadcast %cst_98 : f32 to vector<8x1xf32>
    %160 = arith.divf %158, %159 : vector<8x1xf32>
    %cst_99 = arith.constant 9.99999974E-6 : f32
    %161 = vector.broadcast %cst_99 : f32 to vector<8x1xf32>
    %162 = arith.addf %160, %161 : vector<8x1xf32>
    %163 = math.rsqrt %162 : vector<8x1xf32>
    %164 = vector.broadcast %163 : vector<8x1xf32> to vector<8x128xf32>
    %165 = arith.mulf %155, %164 : vector<8x128xf32>
    %166 = vector.broadcast %20 : vector<1x128xf32> to vector<8x128xf32>
    %167 = arith.mulf %165, %166 : vector<8x128xf32>
    %168 = vector.broadcast %21 : vector<1x128xf32> to vector<8x128xf32>
    %169 = arith.addf %167, %168 : vector<8x128xf32>
    %170 = arith.truncf %169 : vector<8x128xf32> to vector<8x128xbf16>
    %171 = arith.truncf %31 : vector<16x128xf32> to vector<16x128xbf16>
    %cst_100 = arith.constant dense<0.000000e+00> : vector<8x128xf32>
    %172 = tpu.matmul %170, %8, %cst_100 {dimension_numbers = #tpu.dot_dimension_numbers<[1], [0], [0], [1], [0, 0, 1, 1], [], []>} : vector<8x128xbf16>, vector<128x128xbf16>, vector<8x128xf32> -> vector<8x128xf32>
    %173 = vector.broadcast %9 : vector<1x128xf32> to vector<8x128xf32>
    %174 = arith.addf %172, %173 : vector<8x128xf32>
    %175 = arith.truncf %174 : vector<8x128xf32> to vector<8x128xbf16>
    %cst_101 = arith.constant dense<0.000000e+00> : vector<16x128xf32>
    %176 = tpu.matmul %171, %10, %cst_101 {dimension_numbers = #tpu.dot_dimension_numbers<[1], [0], [0], [1], [0, 0, 1, 1], [], []>} : vector<16x128xbf16>, vector<128x128xbf16>, vector<16x128xf32> -> vector<16x128xf32>
    %177 = vector.broadcast %11 : vector<1x128xf32> to vector<16x128xf32>
    %178 = arith.addf %176, %177 : vector<16x128xf32>
    %179 = arith.truncf %178 : vector<16x128xf32> to vector<16x128xbf16>
    %cst_102 = arith.constant dense<0.000000e+00> : vector<16x128xf32>
    %180 = tpu.matmul %171, %12, %cst_102 {dimension_numbers = #tpu.dot_dimension_numbers<[1], [0], [0], [1], [0, 0, 1, 1], [], []>} : vector<16x128xbf16>, vector<128x128xbf16>, vector<16x128xf32> -> vector<16x128xf32>
    %181 = vector.broadcast %13 : vector<1x128xf32> to vector<16x128xf32>
    %182 = arith.addf %180, %181 : vector<16x128xf32>
    %183 = arith.truncf %182 : vector<16x128xf32> to vector<16x128xbf16>
    %cst_103 = arith.constant 0.000000e+00 : f32
    %184 = vector.broadcast %cst_103 : f32 to vector<8x128xf32>
    %185 = vector.extract_strided_slice %175 {offsets = [0, 0], sizes = [8, 32], strides = [1, 1]} : vector<8x128xbf16> to vector<8x32xbf16>
    %186 = vector.extract_strided_slice %179 {offsets = [0, 0], sizes = [16, 32], strides = [1, 1]} : vector<16x128xbf16> to vector<16x32xbf16>
    %187 = vector.extract_strided_slice %183 {offsets = [0, 0], sizes = [16, 32], strides = [1, 1]} : vector<16x128xbf16> to vector<16x32xbf16>
    %cst_104 = arith.constant dense<0.000000e+00> : vector<8x16xf32>
    %188 = tpu.matmul %185, %186, %cst_104 {dimension_numbers = #tpu.dot_dimension_numbers<[1], [1], [0], [0], [0, 0, 1, 0], [], []>} : vector<8x32xbf16>, vector<16x32xbf16>, vector<8x16xf32> -> vector<8x16xf32>
    %cst_105 = arith.constant 0.176776692 : f32
    %189 = vector.broadcast %cst_105 : f32 to vector<8x16xf32>
    %190 = arith.mulf %188, %189 : vector<8x16xf32>
    %cst_106 = arith.constant dense<0xFF800000> : vector<8xf32>
    %191 = vector.multi_reduction <maximumf>, %190, %cst_106 [1] : vector<8x16xf32> to vector<8xf32>
    %192 = vector.shape_cast %191 : vector<8xf32> to vector<8x1xf32>
    %193 = vector.broadcast %192 : vector<8x1xf32> to vector<8x16xf32>
    %194 = arith.subf %190, %193 : vector<8x16xf32>
    %195 = math.exp %194 : vector<8x16xf32>
    %cst_107 = arith.constant dense<0.000000e+00> : vector<8xf32>
    %196 = vector.multi_reduction <add>, %195, %cst_107 [1] : vector<8x16xf32> to vector<8xf32>
    %197 = vector.shape_cast %196 : vector<8xf32> to vector<8x1xf32>
    %198 = tpu.reciprocal %197 {approx = true} : vector<8x1xf32> -> vector<8x1xf32>
    %199 = vector.broadcast %198 : vector<8x1xf32> to vector<8x16xf32>
    %200 = arith.mulf %195, %199 : vector<8x16xf32>
    %201 = arith.truncf %200 : vector<8x16xf32> to vector<8x16xbf16>
    %cst_108 = arith.constant dense<0.000000e+00> : vector<8x32xf32>
    %202 = tpu.matmul %201, %187, %cst_108 {dimension_numbers = #tpu.dot_dimension_numbers<[1], [0], [0], [1], [0, 0, 1, 1], [], []>} : vector<8x16xbf16>, vector<16x32xbf16>, vector<8x32xf32> -> vector<8x32xf32>
    %203 = arith.truncf %202 : vector<8x32xf32> to vector<8x32xbf16>
    %204 = vector.extract_strided_slice %14 {offsets = [0, 0], sizes = [32, 128], strides = [1, 1]} : vector<128x128xbf16> to vector<32x128xbf16>
    %cst_109 = arith.constant dense<0.000000e+00> : vector<8x128xf32>
    %205 = tpu.matmul %203, %204, %cst_109 {dimension_numbers = #tpu.dot_dimension_numbers<[1], [0], [0], [1], [0, 0, 1, 1], [], []>} : vector<8x32xbf16>, vector<32x128xbf16>, vector<8x128xf32> -> vector<8x128xf32>
    %206 = arith.addf %184, %205 : vector<8x128xf32>
    %207 = vector.extract_strided_slice %175 {offsets = [0, 32], sizes = [8, 32], strides = [1, 1]} : vector<8x128xbf16> to vector<8x32xbf16>
    %208 = vector.extract_strided_slice %179 {offsets = [0, 32], sizes = [16, 32], strides = [1, 1]} : vector<16x128xbf16> to vector<16x32xbf16>
    %209 = vector.extract_strided_slice %183 {offsets = [0, 32], sizes = [16, 32], strides = [1, 1]} : vector<16x128xbf16> to vector<16x32xbf16>
    %cst_110 = arith.constant dense<0.000000e+00> : vector<8x16xf32>
    %210 = tpu.matmul %207, %208, %cst_110 {dimension_numbers = #tpu.dot_dimension_numbers<[1], [1], [0], [0], [0, 0, 1, 0], [], []>} : vector<8x32xbf16>, vector<16x32xbf16>, vector<8x16xf32> -> vector<8x16xf32>
    %cst_111 = arith.constant 0.176776692 : f32
    %211 = vector.broadcast %cst_111 : f32 to vector<8x16xf32>
    %212 = arith.mulf %210, %211 : vector<8x16xf32>
    %cst_112 = arith.constant dense<0xFF800000> : vector<8xf32>
    %213 = vector.multi_reduction <maximumf>, %212, %cst_112 [1] : vector<8x16xf32> to vector<8xf32>
    %214 = vector.shape_cast %213 : vector<8xf32> to vector<8x1xf32>
    %215 = vector.broadcast %214 : vector<8x1xf32> to vector<8x16xf32>
    %216 = arith.subf %212, %215 : vector<8x16xf32>
    %217 = math.exp %216 : vector<8x16xf32>
    %cst_113 = arith.constant dense<0.000000e+00> : vector<8xf32>
    %218 = vector.multi_reduction <add>, %217, %cst_113 [1] : vector<8x16xf32> to vector<8xf32>
    %219 = vector.shape_cast %218 : vector<8xf32> to vector<8x1xf32>
    %220 = tpu.reciprocal %219 {approx = true} : vector<8x1xf32> -> vector<8x1xf32>
    %221 = vector.broadcast %220 : vector<8x1xf32> to vector<8x16xf32>
    %222 = arith.mulf %217, %221 : vector<8x16xf32>
    %223 = arith.truncf %222 : vector<8x16xf32> to vector<8x16xbf16>
    %cst_114 = arith.constant dense<0.000000e+00> : vector<8x32xf32>
    %224 = tpu.matmul %223, %209, %cst_114 {dimension_numbers = #tpu.dot_dimension_numbers<[1], [0], [0], [1], [0, 0, 1, 1], [], []>} : vector<8x16xbf16>, vector<16x32xbf16>, vector<8x32xf32> -> vector<8x32xf32>
    %225 = arith.truncf %224 : vector<8x32xf32> to vector<8x32xbf16>
    %226 = vector.extract_strided_slice %14 {offsets = [32, 0], sizes = [32, 128], strides = [1, 1]} : vector<128x128xbf16> to vector<32x128xbf16>
    %cst_115 = arith.constant dense<0.000000e+00> : vector<8x128xf32>
    %227 = tpu.matmul %225, %226, %cst_115 {dimension_numbers = #tpu.dot_dimension_numbers<[1], [0], [0], [1], [0, 0, 1, 1], [], []>} : vector<8x32xbf16>, vector<32x128xbf16>, vector<8x128xf32> -> vector<8x128xf32>
    %228 = arith.addf %206, %227 : vector<8x128xf32>
    %229 = vector.extract_strided_slice %175 {offsets = [0, 64], sizes = [8, 32], strides = [1, 1]} : vector<8x128xbf16> to vector<8x32xbf16>
    %230 = vector.extract_strided_slice %179 {offsets = [0, 64], sizes = [16, 32], strides = [1, 1]} : vector<16x128xbf16> to vector<16x32xbf16>
    %231 = vector.extract_strided_slice %183 {offsets = [0, 64], sizes = [16, 32], strides = [1, 1]} : vector<16x128xbf16> to vector<16x32xbf16>
    %cst_116 = arith.constant dense<0.000000e+00> : vector<8x16xf32>
    %232 = tpu.matmul %229, %230, %cst_116 {dimension_numbers = #tpu.dot_dimension_numbers<[1], [1], [0], [0], [0, 0, 1, 0], [], []>} : vector<8x32xbf16>, vector<16x32xbf16>, vector<8x16xf32> -> vector<8x16xf32>
    %cst_117 = arith.constant 0.176776692 : f32
    %233 = vector.broadcast %cst_117 : f32 to vector<8x16xf32>
    %234 = arith.mulf %232, %233 : vector<8x16xf32>
    %cst_118 = arith.constant dense<0xFF800000> : vector<8xf32>
    %235 = vector.multi_reduction <maximumf>, %234, %cst_118 [1] : vector<8x16xf32> to vector<8xf32>
    %236 = vector.shape_cast %235 : vector<8xf32> to vector<8x1xf32>
    %237 = vector.broadcast %236 : vector<8x1xf32> to vector<8x16xf32>
    %238 = arith.subf %234, %237 : vector<8x16xf32>
    %239 = math.exp %238 : vector<8x16xf32>
    %cst_119 = arith.constant dense<0.000000e+00> : vector<8xf32>
    %240 = vector.multi_reduction <add>, %239, %cst_119 [1] : vector<8x16xf32> to vector<8xf32>
    %241 = vector.shape_cast %240 : vector<8xf32> to vector<8x1xf32>
    %242 = tpu.reciprocal %241 {approx = true} : vector<8x1xf32> -> vector<8x1xf32>
    %243 = vector.broadcast %242 : vector<8x1xf32> to vector<8x16xf32>
    %244 = arith.mulf %239, %243 : vector<8x16xf32>
    %245 = arith.truncf %244 : vector<8x16xf32> to vector<8x16xbf16>
    %cst_120 = arith.constant dense<0.000000e+00> : vector<8x32xf32>
    %246 = tpu.matmul %245, %231, %cst_120 {dimension_numbers = #tpu.dot_dimension_numbers<[1], [0], [0], [1], [0, 0, 1, 1], [], []>} : vector<8x16xbf16>, vector<16x32xbf16>, vector<8x32xf32> -> vector<8x32xf32>
    %247 = arith.truncf %246 : vector<8x32xf32> to vector<8x32xbf16>
    %248 = vector.extract_strided_slice %14 {offsets = [64, 0], sizes = [32, 128], strides = [1, 1]} : vector<128x128xbf16> to vector<32x128xbf16>
    %cst_121 = arith.constant dense<0.000000e+00> : vector<8x128xf32>
    %249 = tpu.matmul %247, %248, %cst_121 {dimension_numbers = #tpu.dot_dimension_numbers<[1], [0], [0], [1], [0, 0, 1, 1], [], []>} : vector<8x32xbf16>, vector<32x128xbf16>, vector<8x128xf32> -> vector<8x128xf32>
    %250 = arith.addf %228, %249 : vector<8x128xf32>
    %251 = vector.extract_strided_slice %175 {offsets = [0, 96], sizes = [8, 32], strides = [1, 1]} : vector<8x128xbf16> to vector<8x32xbf16>
    %252 = vector.extract_strided_slice %179 {offsets = [0, 96], sizes = [16, 32], strides = [1, 1]} : vector<16x128xbf16> to vector<16x32xbf16>
    %253 = vector.extract_strided_slice %183 {offsets = [0, 96], sizes = [16, 32], strides = [1, 1]} : vector<16x128xbf16> to vector<16x32xbf16>
    %cst_122 = arith.constant dense<0.000000e+00> : vector<8x16xf32>
    %254 = tpu.matmul %251, %252, %cst_122 {dimension_numbers = #tpu.dot_dimension_numbers<[1], [1], [0], [0], [0, 0, 1, 0], [], []>} : vector<8x32xbf16>, vector<16x32xbf16>, vector<8x16xf32> -> vector<8x16xf32>
    %cst_123 = arith.constant 0.176776692 : f32
    %255 = vector.broadcast %cst_123 : f32 to vector<8x16xf32>
    %256 = arith.mulf %254, %255 : vector<8x16xf32>
    %cst_124 = arith.constant dense<0xFF800000> : vector<8xf32>
    %257 = vector.multi_reduction <maximumf>, %256, %cst_124 [1] : vector<8x16xf32> to vector<8xf32>
    %258 = vector.shape_cast %257 : vector<8xf32> to vector<8x1xf32>
    %259 = vector.broadcast %258 : vector<8x1xf32> to vector<8x16xf32>
    %260 = arith.subf %256, %259 : vector<8x16xf32>
    %261 = math.exp %260 : vector<8x16xf32>
    %cst_125 = arith.constant dense<0.000000e+00> : vector<8xf32>
    %262 = vector.multi_reduction <add>, %261, %cst_125 [1] : vector<8x16xf32> to vector<8xf32>
    %263 = vector.shape_cast %262 : vector<8xf32> to vector<8x1xf32>
    %264 = tpu.reciprocal %263 {approx = true} : vector<8x1xf32> -> vector<8x1xf32>
    %265 = vector.broadcast %264 : vector<8x1xf32> to vector<8x16xf32>
    %266 = arith.mulf %261, %265 : vector<8x16xf32>
    %267 = arith.truncf %266 : vector<8x16xf32> to vector<8x16xbf16>
    %cst_126 = arith.constant dense<0.000000e+00> : vector<8x32xf32>
    %268 = tpu.matmul %267, %253, %cst_126 {dimension_numbers = #tpu.dot_dimension_numbers<[1], [0], [0], [1], [0, 0, 1, 1], [], []>} : vector<8x16xbf16>, vector<16x32xbf16>, vector<8x32xf32> -> vector<8x32xf32>
    %269 = arith.truncf %268 : vector<8x32xf32> to vector<8x32xbf16>
    %270 = vector.extract_strided_slice %14 {offsets = [96, 0], sizes = [32, 128], strides = [1, 1]} : vector<128x128xbf16> to vector<32x128xbf16>
    %cst_127 = arith.constant dense<0.000000e+00> : vector<8x128xf32>
    %271 = tpu.matmul %269, %270, %cst_127 {dimension_numbers = #tpu.dot_dimension_numbers<[1], [0], [0], [1], [0, 0, 1, 1], [], []>} : vector<8x32xbf16>, vector<32x128xbf16>, vector<8x128xf32> -> vector<8x128xf32>
    %272 = arith.addf %250, %271 : vector<8x128xf32>
    %273 = vector.broadcast %15 : vector<1x128xf32> to vector<8x128xf32>
    %274 = arith.addf %272, %273 : vector<8x128xf32>
    %275 = arith.addf %169, %274 : vector<8x128xf32>
    %cst_128 = arith.constant dense<0.000000e+00> : vector<8xf32>
    %276 = vector.multi_reduction <add>, %275, %cst_128 [1] : vector<8x128xf32> to vector<8xf32>
    %277 = vector.shape_cast %276 : vector<8xf32> to vector<8x1xf32>
    %cst_129 = arith.constant 1.280000e+02 : f32
    %278 = vector.broadcast %cst_129 : f32 to vector<8x1xf32>
    %279 = arith.divf %277, %278 : vector<8x1xf32>
    %280 = vector.broadcast %279 : vector<8x1xf32> to vector<8x128xf32>
    %281 = arith.subf %275, %280 : vector<8x128xf32>
    %282 = arith.mulf %281, %281 : vector<8x128xf32>
    %cst_130 = arith.constant dense<0.000000e+00> : vector<8xf32>
    %283 = vector.multi_reduction <add>, %282, %cst_130 [1] : vector<8x128xf32> to vector<8xf32>
    %284 = vector.shape_cast %283 : vector<8xf32> to vector<8x1xf32>
    %cst_131 = arith.constant 1.280000e+02 : f32
    %285 = vector.broadcast %cst_131 : f32 to vector<8x1xf32>
    %286 = arith.divf %284, %285 : vector<8x1xf32>
    %cst_132 = arith.constant 9.99999974E-6 : f32
    %287 = vector.broadcast %cst_132 : f32 to vector<8x1xf32>
    %288 = arith.addf %286, %287 : vector<8x1xf32>
    %289 = math.rsqrt %288 : vector<8x1xf32>
    %290 = vector.broadcast %289 : vector<8x1xf32> to vector<8x128xf32>
    %291 = arith.mulf %281, %290 : vector<8x128xf32>
    %292 = vector.broadcast %22 : vector<1x128xf32> to vector<8x128xf32>
    %293 = arith.mulf %291, %292 : vector<8x128xf32>
    %294 = vector.broadcast %23 : vector<1x128xf32> to vector<8x128xf32>
    %295 = arith.addf %293, %294 : vector<8x128xf32>
    %296 = arith.truncf %295 : vector<8x128xf32> to vector<8x128xbf16>
    %cst_133 = arith.constant dense<0.000000e+00> : vector<8x256xf32>
    %297 = tpu.matmul %296, %16, %cst_133 {dimension_numbers = #tpu.dot_dimension_numbers<[1], [0], [0], [1], [0, 0, 1, 1], [], []>} : vector<8x128xbf16>, vector<128x256xbf16>, vector<8x256xf32> -> vector<8x256xf32>
    %298 = vector.broadcast %17 : vector<1x256xf32> to vector<8x256xf32>
    %299 = arith.addf %297, %298 : vector<8x256xf32>
    %cst_134 = arith.constant 0.000000e+00 : f32
    %300 = vector.broadcast %cst_134 : f32 to vector<8x256xf32>
    %301 = arith.maximumf %299, %300 : vector<8x256xf32>
    %302 = arith.truncf %301 : vector<8x256xf32> to vector<8x256xbf16>
    %cst_135 = arith.constant dense<0.000000e+00> : vector<8x128xf32>
    %303 = tpu.matmul %302, %18, %cst_135 {dimension_numbers = #tpu.dot_dimension_numbers<[1], [0], [0], [1], [0, 0, 1, 1], [], []>} : vector<8x256xbf16>, vector<256x128xbf16>, vector<8x128xf32> -> vector<8x128xf32>
    %304 = vector.broadcast %19 : vector<1x128xf32> to vector<8x128xf32>
    %305 = arith.addf %303, %304 : vector<8x128xf32>
    %306 = arith.addf %295, %305 : vector<8x128xf32>
    %cst_136 = arith.constant dense<0.000000e+00> : vector<8xf32>
    %307 = vector.multi_reduction <add>, %306, %cst_136 [1] : vector<8x128xf32> to vector<8xf32>
    %308 = vector.shape_cast %307 : vector<8xf32> to vector<8x1xf32>
    %cst_137 = arith.constant 1.280000e+02 : f32
    %309 = vector.broadcast %cst_137 : f32 to vector<8x1xf32>
    %310 = arith.divf %308, %309 : vector<8x1xf32>
    %311 = vector.broadcast %310 : vector<8x1xf32> to vector<8x128xf32>
    %312 = arith.subf %306, %311 : vector<8x128xf32>
    %313 = arith.mulf %312, %312 : vector<8x128xf32>
    %cst_138 = arith.constant dense<0.000000e+00> : vector<8xf32>
    %314 = vector.multi_reduction <add>, %313, %cst_138 [1] : vector<8x128xf32> to vector<8xf32>
    %315 = vector.shape_cast %314 : vector<8xf32> to vector<8x1xf32>
    %cst_139 = arith.constant 1.280000e+02 : f32
    %316 = vector.broadcast %cst_139 : f32 to vector<8x1xf32>
    %317 = arith.divf %315, %316 : vector<8x1xf32>
    %cst_140 = arith.constant 9.99999974E-6 : f32
    %318 = vector.broadcast %cst_140 : f32 to vector<8x1xf32>
    %319 = arith.addf %317, %318 : vector<8x1xf32>
    %320 = math.rsqrt %319 : vector<8x1xf32>
    %321 = vector.broadcast %320 : vector<8x1xf32> to vector<8x128xf32>
    %322 = arith.mulf %312, %321 : vector<8x128xf32>
    %323 = vector.broadcast %24 : vector<1x128xf32> to vector<8x128xf32>
    %324 = arith.mulf %322, %323 : vector<8x128xf32>
    %325 = vector.broadcast %25 : vector<1x128xf32> to vector<8x128xf32>
    %326 = arith.addf %324, %325 : vector<8x128xf32>
    %c0_141 = arith.constant 0 : index
    %c0_142 = arith.constant 0 : index
    %c0_143 = arith.constant 0 : index
    %327 = vector.load %arg32[%c0_141, %c0_142, %c0_143] : memref<1x8x128xf32, #tpu.memory_space<vmem>>, vector<1x8x128xf32>
    %328 = vector.shape_cast %327 : vector<1x8x128xf32> to vector<8x128xf32>
    %329 = vector.shape_cast %326 : vector<8x128xf32> to vector<1x8x128xf32>
    tpu.vector_store %arg32[%c0_141, %c0_142, %c0_143], %329 {strides = array<i32>} : memref<1x8x128xf32, #tpu.memory_space<vmem>>, vector<1x8x128xf32>,
    return
  }
  func.func @transform_0(%arg0: i32, %arg1: i32) -> (i32, i32, i32) {
    %c0_i32 = arith.constant 0 : i32
    %c0_i32_0 = arith.constant 0 : i32
    return %arg0, %arg1, %c0_i32 : i32, i32, i32
  }
  func.func @transform_1(%arg0: i32, %arg1: i32) -> (i32, i32, i32) {
    %c0_i32 = arith.constant 0 : i32
    %c0_i32_0 = arith.constant 0 : i32
    %c0_i32_1 = arith.constant 0 : i32
    return %arg0, %c0_i32, %c0_i32_0 : i32, i32, i32
  }
  func.func @transform_2(%arg0: i32, %arg1: i32) -> (i32, i32, i32) {
    %c0_i32 = arith.constant 0 : i32
    %c0_i32_0 = arith.constant 0 : i32
    %c0_i32_1 = arith.constant 0 : i32
    return %arg0, %c0_i32, %c0_i32_0 : i32, i32, i32
  }
  func.func @transform_3(%arg0: i32, %arg1: i32) -> (i32, i32, i32) {
    %c0_i32 = arith.constant 0 : i32
    %c0_i32_0 = arith.constant 0 : i32
    return %arg0, %arg1, %c0_i32 : i32, i32, i32
  }
  func.func @transform_4(%arg0: i32, %arg1: i32) -> (i32, i32) {
    %c0_i32 = arith.constant 0 : i32
    %c0_i32_0 = arith.constant 0 : i32
    %c0_i32_1 = arith.constant 0 : i32
    return %c0_i32, %c0_i32_0 : i32, i32
  }
  func.func @transform_5(%arg0: i32, %arg1: i32) -> (i32, i32) {
    %c0_i32 = arith.constant 0 : i32
    %c0_i32_0 = arith.constant 0 : i32
    %c0_i32_1 = arith.constant 0 : i32
    return %c0_i32, %c0_i32_0 : i32, i32
  }
  func.func @transform_6(%arg0: i32, %arg1: i32) -> (i32, i32) {
    %c0_i32 = arith.constant 0 : i32
    %c0_i32_0 = arith.constant 0 : i32
    %c0_i32_1 = arith.constant 0 : i32
    return %c0_i32, %c0_i32_0 : i32, i32
  }
  func.func @transform_7(%arg0: i32, %arg1: i32) -> (i32, i32) {
    %c0_i32 = arith.constant 0 : i32
    %c0_i32_0 = arith.constant 0 : i32
    %c0_i32_1 = arith.constant 0 : i32
    return %c0_i32, %c0_i32_0 : i32, i32
  }
  func.func @transform_8(%arg0: i32, %arg1: i32) -> (i32, i32) {
    %c0_i32 = arith.constant 0 : i32
    %c0_i32_0 = arith.constant 0 : i32
    %c0_i32_1 = arith.constant 0 : i32
    return %c0_i32, %c0_i32_0 : i32, i32
  }
  func.func @transform_9(%arg0: i32, %arg1: i32) -> (i32, i32) {
    %c0_i32 = arith.constant 0 : i32
    %c0_i32_0 = arith.constant 0 : i32
    %c0_i32_1 = arith.constant 0 : i32
    return %c0_i32, %c0_i32_0 : i32, i32
  }
  func.func @transform_10(%arg0: i32, %arg1: i32) -> (i32, i32) {
    %c0_i32 = arith.constant 0 : i32
    %c0_i32_0 = arith.constant 0 : i32
    %c0_i32_1 = arith.constant 0 : i32
    return %c0_i32, %c0_i32_0 : i32, i32
  }
  func.func @transform_11(%arg0: i32, %arg1: i32) -> (i32, i32) {
    %c0_i32 = arith.constant 0 : i32
    %c0_i32_0 = arith.constant 0 : i32
    %c0_i32_1 = arith.constant 0 : i32
    return %c0_i32, %c0_i32_0 : i32, i32
  }
  func.func @transform_12(%arg0: i32, %arg1: i32) -> (i32, i32) {
    %c0_i32 = arith.constant 0 : i32
    %c0_i32_0 = arith.constant 0 : i32
    %c0_i32_1 = arith.constant 0 : i32
    return %c0_i32, %c0_i32_0 : i32, i32
  }
  func.func @transform_13(%arg0: i32, %arg1: i32) -> (i32, i32) {
    %c0_i32 = arith.constant 0 : i32
    %c0_i32_0 = arith.constant 0 : i32
    %c0_i32_1 = arith.constant 0 : i32
    return %c0_i32, %c0_i32_0 : i32, i32
  }
  func.func @transform_14(%arg0: i32, %arg1: i32) -> (i32, i32) {
    %c0_i32 = arith.constant 0 : i32
    %c0_i32_0 = arith.constant 0 : i32
    %c0_i32_1 = arith.constant 0 : i32
    return %c0_i32, %c0_i32_0 : i32, i32
  }
  func.func @transform_15(%arg0: i32, %arg1: i32) -> (i32, i32) {
    %c0_i32 = arith.constant 0 : i32
    %c0_i32_0 = arith.constant 0 : i32
    %c0_i32_1 = arith.constant 0 : i32
    return %c0_i32, %c0_i32_0 : i32, i32
  }
  func.func @transform_16(%arg0: i32, %arg1: i32) -> (i32, i32) {
    %c0_i32 = arith.constant 0 : i32
    %c0_i32_0 = arith.constant 0 : i32
    %c0_i32_1 = arith.constant 0 : i32
    return %c0_i32, %c0_i32_0 : i32, i32
  }
  func.func @transform_17(%arg0: i32, %arg1: i32) -> (i32, i32) {
    %c0_i32 = arith.constant 0 : i32
    %c0_i32_0 = arith.constant 0 : i32
    %c0_i32_1 = arith.constant 0 : i32
    return %c0_i32, %c0_i32_0 : i32, i32
  }
  func.func @transform_18(%arg0: i32, %arg1: i32) -> (i32, i32) {
    %c0_i32 = arith.constant 0 : i32
    %c0_i32_0 = arith.constant 0 : i32
    %c0_i32_1 = arith.constant 0 : i32
    return %c0_i32, %c0_i32_0 : i32, i32
  }
  func.func @transform_19(%arg0: i32, %arg1: i32) -> (i32, i32) {
    %c0_i32 = arith.constant 0 : i32
    %c0_i32_0 = arith.constant 0 : i32
    %c0_i32_1 = arith.constant 0 : i32
    return %c0_i32, %c0_i32_0 : i32, i32
  }
  func.func @transform_20(%arg0: i32, %arg1: i32) -> (i32, i32) {
    %c0_i32 = arith.constant 0 : i32
    %c0_i32_0 = arith.constant 0 : i32
    %c0_i32_1 = arith.constant 0 : i32
    return %c0_i32, %c0_i32_0 : i32, i32
  }
  func.func @transform_21(%arg0: i32, %arg1: i32) -> (i32, i32) {
    %c0_i32 = arith.constant 0 : i32
    %c0_i32_0 = arith.constant 0 : i32
    %c0_i32_1 = arith.constant 0 : i32
    return %c0_i32, %c0_i32_0 : i32, i32
  }
  func.func @transform_22(%arg0: i32, %arg1: i32) -> (i32, i32) {
    %c0_i32 = arith.constant 0 : i32
    %c0_i32_0 = arith.constant 0 : i32
    %c0_i32_1 = arith.constant 0 : i32
    return %c0_i32, %c0_i32_0 : i32, i32
  }
  func.func @transform_23(%arg0: i32, %arg1: i32) -> (i32, i32) {
    %c0_i32 = arith.constant 0 : i32
    %c0_i32_0 = arith.constant 0 : i32
    %c0_i32_1 = arith.constant 0 : i32
    return %c0_i32, %c0_i32_0 : i32, i32
  }
  func.func @transform_24(%arg0: i32, %arg1: i32) -> (i32, i32) {
    %c0_i32 = arith.constant 0 : i32
    %c0_i32_0 = arith.constant 0 : i32
    %c0_i32_1 = arith.constant 0 : i32
    return %c0_i32, %c0_i32_0 : i32, i32
  }
  func.func @transform_25(%arg0: i32, %arg1: i32) -> (i32, i32) {
    %c0_i32 = arith.constant 0 : i32
    %c0_i32_0 = arith.constant 0 : i32
    %c0_i32_1 = arith.constant 0 : i32
    return %c0_i32, %c0_i32_0 : i32, i32
  }
  func.func @transform_26(%arg0: i32, %arg1: i32) -> (i32, i32) {
    %c0_i32 = arith.constant 0 : i32
    %c0_i32_0 = arith.constant 0 : i32
    %c0_i32_1 = arith.constant 0 : i32
    return %c0_i32, %c0_i32_0 : i32, i32
  }
  func.func @transform_27(%arg0: i32, %arg1: i32) -> (i32, i32) {
    %c0_i32 = arith.constant 0 : i32
    %c0_i32_0 = arith.constant 0 : i32
    %c0_i32_1 = arith.constant 0 : i32
    return %c0_i32, %c0_i32_0 : i32, i32
  }
  func.func @transform_28(%arg0: i32, %arg1: i32) -> (i32, i32) {
    %c0_i32 = arith.constant 0 : i32
    %c0_i32_0 = arith.constant 0 : i32
    %c0_i32_1 = arith.constant 0 : i32
    return %c0_i32, %c0_i32_0 : i32, i32
  }
  func.func @transform_29(%arg0: i32, %arg1: i32) -> (i32, i32) {
    %c0_i32 = arith.constant 0 : i32
    %c0_i32_0 = arith.constant 0 : i32
    %c0_i32_1 = arith.constant 0 : i32
    return %c0_i32, %c0_i32_0 : i32, i32
  }
  func.func @transform_30(%arg0: i32, %arg1: i32) -> (i32, i32, i32) {
    %c0_i32 = arith.constant 0 : i32
    %c0_i32_0 = arith.constant 0 : i32
    return %arg0, %arg1, %c0_i32 : i32, i32, i32
  }
}

</mosaic_0001>

<llo_original>
// kernel: tpu_custom_call.1
$region0: #{tpu_custom_call.1}
  #allocation0 [shape = 'u32[]', space=smem, size = 0x4, offset = 0x4, fixed_abs, tag = 'smem constant byte address 0x4 - core index']
  #allocation1 [shape = 'u32[144,128]{1,0:T(1,128)}', space=vmem, size = 0x12000, scoped, tag = 'internal scratch']
  %s0 = inlined_call_operand.smem [shape: u32[31], index: -1, kind: input, shape index: {}]
  %s1 = sld [smem:[%s0]]
  %s2 = scalar_lea.smem %s0, 1
  %s3 = sld [smem:[%s2]]
  %s4 = scalar_lea.smem %s0, 2
  %s5 = sld [smem:[%s4]]
  %s6 = scalar_lea.smem %s0, 3
  %s7 = sld [smem:[%s6]]
  %s8 = scalar_lea.smem %s0, 4
  %s9 = sld [smem:[%s8]]
  %s10 = scalar_lea.smem %s0, 5
  %s11 = sld [smem:[%s10]]
  %s12 = scalar_lea.smem %s0, 6
  %s13 = sld [smem:[%s12]]
  %s14 = scalar_lea.smem %s0, 7
  %s15 = sld [smem:[%s14]]
  %s16 = scalar_lea.smem %s0, 8
  %s17 = sld [smem:[%s16]]
  %s18 = scalar_lea.smem %s0, 9
  %s19 = sld [smem:[%s18]]
  %s20 = scalar_lea.smem %s0, 10
  %s21 = sld [smem:[%s20]]
  %s22 = scalar_lea.smem %s0, 11
  %s23 = sld [smem:[%s22]]
  %s24 = scalar_lea.smem %s0, 12
  %s25 = sld [smem:[%s24]]
  %s26 = scalar_lea.smem %s0, 13
  %s27 = sld [smem:[%s26]]
  %s28 = scalar_lea.smem %s0, 14
  %s29 = sld [smem:[%s28]]
  %s30 = scalar_lea.smem %s0, 15
  %s31 = sld [smem:[%s30]]
  %s32 = scalar_lea.smem %s0, 16
  %s33 = sld [smem:[%s32]]
  %s34 = scalar_lea.smem %s0, 17
  %s35 = sld [smem:[%s34]]
  %s36 = scalar_lea.smem %s0, 18
  %s37 = sld [smem:[%s36]]
  %s38 = scalar_lea.smem %s0, 19
  %s39 = sld [smem:[%s38]]
  %s40 = scalar_lea.smem %s0, 20
  %s41 = sld [smem:[%s40]]
  %s42 = scalar_lea.smem %s0, 21
  %s43 = sld [smem:[%s42]]
  %s44 = scalar_lea.smem %s0, 22
  %s45 = sld [smem:[%s44]]
  %s46 = scalar_lea.smem %s0, 23
  %s47 = sld [smem:[%s46]]
  %s48 = scalar_lea.smem %s0, 24
  %s49 = sld [smem:[%s48]]
  %s50 = scalar_lea.smem %s0, 25
  %s51 = sld [smem:[%s50]]
  %s52 = scalar_lea.smem %s0, 26
  %s53 = sld [smem:[%s52]]
  %s54 = scalar_lea.smem %s0, 27
  %s55 = sld [smem:[%s54]]
  %s56 = scalar_lea.smem %s0, 28
  %s57 = sld [smem:[%s56]]
  %s58 = scalar_lea.smem %s0, 29
  %s59 = sld [smem:[%s58]]
  %s60 = scalar_lea.smem %s0, 30
  %s61 = sld [smem:[%s60]]
  %s62 = sld [smem:[#allocation0]]
  $region273: #{tpu_custom_call.1} parent=0
    _
  %s64 = ssub.s32 1, %s62
  %s65 = scalar_select 0, %s64, %s62
  $region1: #{tpu_custom_call.1} parent=0
    #allocation2 [shape = 'u8[8192]{0}', space=vmem, size = 0x2000, scoped, tag = 'input window, operand 0']
    #allocation3 [shape = 's32[2]{0}', space=sflag, size = 0x8, scoped, tag = 'scoped memory for tpu_custom_call.1']
    #allocation4 [shape = 's32[2]{0}', space=sflag, size = 0x8, scoped, tag = 'scoped memory for tpu_custom_call.1']
    #allocation5 [shape = 'u8[16384]{0}', space=vmem, size = 0x4000, scoped, tag = 'input window, operand 1']
    #allocation6 [shape = 's32[2]{0}', space=sflag, size = 0x8, scoped, tag = 'scoped memory for tpu_custom_call.1']
    #allocation7 [shape = 'u8[16384]{0}', space=vmem, size = 0x4000, scoped, tag = 'input window, operand 2']
    #allocation8 [shape = 'u8[8192]{0}', space=vmem, size = 0x2000, scoped, tag = 'input window, operand 3']
    #allocation9 [shape = 's32[2]{0}', space=sflag, size = 0x8, scoped, tag = 'scoped memory for tpu_custom_call.1']
    #allocation10 [shape = 'u8[32768]{0}', space=vmem, size = 0x8000, scoped, tag = 'input window, operand 4, single buffered']
    #allocation11 [shape = 'u8[512]{0}', space=vmem, size = 0x400, scoped, tag = 'input window, operand 5, single buffered']
    #allocation12 [shape = 's32[1]{0}', space=sflag, size = 0x4, scoped, tag = 'scoped memory for tpu_custom_call.1']
    #allocation13 [shape = 'u8[32768]{0}', space=vmem, size = 0x8000, scoped, tag = 'input window, operand 6, single buffered']
    #allocation14 [shape = 'u8[512]{0}', space=vmem, size = 0x400, scoped, tag = 'input window, operand 7, single buffered']
    #allocation15 [shape = 's32[1]{0}', space=sflag, size = 0x4, scoped, tag = 'scoped memory for tpu_custom_call.1']
    #allocation16 [shape = 'u8[32768]{0}', space=vmem, size = 0x8000, scoped, tag = 'input window, operand 8, single buffered']
    #allocation17 [shape = 'u8[512]{0}', space=vmem, size = 0x400, scoped, tag = 'input window, operand 9, single buffered']
    #allocation18 [shape = 's32[1]{0}', space=sflag, size = 0x4, scoped, tag = 'scoped memory for tpu_custom_call.1']
    #allocation19 [shape = 'u8[32768]{0}', space=vmem, size = 0x8000, scoped, tag = 'input window, operand 10, single buffered']
    #allocation20 [shape = 'u8[512]{0}', space=vmem, size = 0x400, scoped, tag = 'input window, operand 11, single buffered']
    #allocation21 [shape = 's32[1]{0}', space=sflag, size = 0x4, scoped, tag = 'scoped memory for tpu_custom_call.1']
    #allocation22 [shape = 'u8[32768]{0}', space=vmem, size = 0x8000, scoped, tag = 'input window, operand 12, single buffered']
    #allocation23 [shape = 'u8[512]{0}', space=vmem, size = 0x400, scoped, tag = 'input window, operand 13, single buffered']
    #allocation24 [shape = 's32[1]{0}', space=sflag, size = 0x4, scoped, tag = 'scoped memory for tpu_custom_call.1']
    #allocation25 [shape = 'u8[32768]{0}', space=vmem, size = 0x8000, scoped, tag = 'input window, operand 14, single buffered']
    #allocation26 [shape = 'u8[512]{0}', space=vmem, size = 0x400, scoped, tag = 'input window, operand 15, single buffered']
    #allocation27 [shape = 's32[1]{0}', space=sflag, size = 0x4, scoped, tag = 'scoped memory for tpu_custom_call.1']
    #allocation28 [shape = 'u8[32768]{0}', space=vmem, size = 0x8000, scoped, tag = 'input window, operand 16, single buffered']
    #allocation29 [shape = 'u8[512]{0}', space=vmem, size = 0x400, scoped, tag = 'input window, operand 17, single buffered']
    #allocation30 [shape = 's32[1]{0}', space=sflag, size = 0x4, scoped, tag = 'scoped memory for tpu_custom_call.1']
    #allocation31 [shape = 'u8[32768]{0}', space=vmem, size = 0x8000, scoped, tag = 'input window, operand 18, single buffered']
    #allocation32 [shape = 'u8[512]{0}', space=vmem, size = 0x400, scoped, tag = 'input window, operand 19, single buffered']
    #allocation33 [shape = 's32[1]{0}', space=sflag, size = 0x4, scoped, tag = 'scoped memory for tpu_custom_call.1']
    #allocation34 [shape = 'u8[65536]{0}', space=vmem, size = 0x10000, scoped, tag = 'input window, operand 20, single buffered']
    #allocation35 [shape = 'u8[1024]{0}', space=vmem, size = 0x400, scoped, tag = 'input window, operand 21, single buffered']
    #allocation36 [shape = 's32[1]{0}', space=sflag, size = 0x4, scoped, tag = 'scoped memory for tpu_custom_call.1']
    #allocation37 [shape = 'u8[65536]{0}', space=vmem, size = 0x10000, scoped, tag = 'input window, operand 22, single buffered']
    #allocation38 [shape = 'u8[512]{0}', space=vmem, size = 0x400, scoped, tag = 'input window, operand 23, single buffered']
    #allocation39 [shape = 's32[1]{0}', space=sflag, size = 0x4, scoped, tag = 'scoped memory for tpu_custom_call.1']
    #allocation40 [shape = 'u8[512]{0}', space=vmem, size = 0x400, scoped, tag = 'input window, operand 24, single buffered']
    #allocation41 [shape = 'u8[512]{0}', space=vmem, size = 0x400, scoped, tag = 'input window, operand 25, single buffered']
    #allocation42 [shape = 's32[1]{0}', space=sflag, size = 0x4, scoped, tag = 'scoped memory for tpu_custom_call.1']
    #allocation43 [shape = 'u8[512]{0}', space=vmem, size = 0x400, scoped, tag = 'input window, operand 26, single buffered']
    #allocation44 [shape = 'u8[512]{0}', space=vmem, size = 0x400, scoped, tag = 'input window, operand 27, single buffered']
    #allocation45 [shape = 's32[1]{0}', space=sflag, size = 0x4, scoped, tag = 'scoped memory for tpu_custom_call.1']
    #allocation46 [shape = 'u8[512]{0}', space=vmem, size = 0x400, scoped, tag = 'input window, operand 28, single buffered']
    #allocation47 [shape = 'u8[512]{0}', space=vmem, size = 0x400, scoped, tag = 'input window, operand 29, single buffered']
    #allocation48 [shape = 's32[1]{0}', space=sflag, size = 0x4, scoped, tag = 'scoped memory for tpu_custom_call.1']
    #allocation49 [shape = 'u8[8192]{0}', space=vmem, size = 0x2000, scoped, tag = 'output window, operand 0']
    %66 = vsyncpa [#allocation3], 0
    %s67 = scalar_lea.sflag [#allocation3], 1
    %68 = vsyncpa %s67, 0
    %69 = vsyncpa [#allocation6], 0
    %s70 = scalar_lea.sflag [#allocation6], 1
    %71 = vsyncpa %s70, 0
    %72 = vsyncpa [#allocation9], 0
    %s73 = scalar_lea.sflag [#allocation9], 1
    %74 = vsyncpa %s73, 0
    %75 = vsyncpa [#allocation12], 0
    %76 = vsyncpa [#allocation15], 0
    %77 = vsyncpa [#allocation18], 0
    %78 = vsyncpa [#allocation21], 0
    %79 = vsyncpa [#allocation24], 0
    %80 = vsyncpa [#allocation27], 0
    %81 = vsyncpa [#allocation30], 0
    %82 = vsyncpa [#allocation33], 0
    %83 = vsyncpa [#allocation36], 0
    %84 = vsyncpa [#allocation39], 0
    %85 = vsyncpa [#allocation42], 0
    %86 = vsyncpa [#allocation45], 0
    %87 = vsyncpa [#allocation48], 0
    %88 = vsyncpa [#allocation4], 0
    %s89 = scalar_lea.sflag [#allocation4], 1
    %90 = vsyncpa %s89, 0
    loop: start=0, step=1, limit=6
    $region2: #{tpu_custom_call.1} parent=1 // loop_pre_header
      _
    $region3: #{tpu_custom_call.1} parent=1 // loop_header
      %s92 = sphi 0, %s96
      %p93 = scmp.ge.s32.totalorder %s92, 6
      %s99 = sphi 0, %s111
      %s100 = sphi 0, %s107
      %s101 = sphi 0, %s99
      %s102 = sphi 0, %s100
      %s103 = sphi 0, %s101
      %s104 = sphi 0, %s102
      %s116 = sphi 0, %s118
      %s119 = sphi 0, %s116
      %s120 = sphi 0, %s119
      %s136 = sphi 0, %s120
      %s142 = sphi 0, %s144
      %s145 = sphi 0, %s142
      %s146 = sphi 0, %s145
      %s162 = sphi 0, %s146
      %s168 = sphi 0, %s170
      %s171 = sphi 0, %s168
      %s172 = sphi 0, %s171
      %s188 = sphi 0, %s172
      %s196 = sphi 0, %s198
      %s199 = sphi 0, %s196
      %s200 = sphi 0, %s199
      %s216 = sphi 0, %s200
      %s220 = sphi 0, %s220
      %s222 = sphi 0, %s220
      %s223 = sphi 0, %s222
      %s237 = sphi 0, %s223
      %s241 = sphi 0, %s241
      %s243 = sphi 0, %s241
      %s244 = sphi 0, %s243
      %s258 = sphi 0, %s244
      %s262 = sphi 0, %s262
      %s264 = sphi 0, %s262
      %s265 = sphi 0, %s264
      %s279 = sphi 0, %s265
      %s283 = sphi 0, %s283
      %s285 = sphi 0, %s283
      %s286 = sphi 0, %s285
      %s300 = sphi 0, %s286
      %s304 = sphi 0, %s304
      %s306 = sphi 0, %s304
      %s307 = sphi 0, %s306
      %s321 = sphi 0, %s307
      %s325 = sphi 0, %s325
      %s327 = sphi 0, %s325
      %s328 = sphi 0, %s327
      %s342 = sphi 0, %s328
      %s346 = sphi 0, %s346
      %s348 = sphi 0, %s346
      %s349 = sphi 0, %s348
      %s363 = sphi 0, %s349
      %s367 = sphi 0, %s367
      %s369 = sphi 0, %s367
      %s370 = sphi 0, %s369
      %s384 = sphi 0, %s370
      %s388 = sphi 0, %s388
      %s390 = sphi 0, %s388
      %s391 = sphi 0, %s390
      %s405 = sphi 0, %s391
      %s409 = sphi 0, %s409
      %s411 = sphi 0, %s409
      %s412 = sphi 0, %s411
      %s426 = sphi 0, %s412
      %s430 = sphi 0, %s430
      %s432 = sphi 0, %s430
      %s433 = sphi 0, %s432
      %s447 = sphi 0, %s433
      %s451 = sphi 0, %s451
      %s453 = sphi 0, %s451
      %s454 = sphi 0, %s453
      %s468 = sphi 0, %s454
      %s472 = sphi 0, %s472
      %s474 = sphi 0, %s472
      %s475 = sphi 0, %s474
      %s489 = sphi 0, %s475
      %s493 = sphi 0, %s493
      %s495 = sphi 0, %s493
      %s496 = sphi 0, %s495
      %s510 = sphi 0, %s496
      %s514 = sphi 0, %s514
      %s516 = sphi 0, %s514
      %s517 = sphi 0, %s516
      %s531 = sphi 0, %s517
      %s535 = sphi 0, %s535
      %s537 = sphi 0, %s535
      %s538 = sphi 0, %s537
      %s552 = sphi 0, %s538
      %s556 = sphi 0, %s556
      %s558 = sphi 0, %s556
      %s559 = sphi 0, %s558
      %s573 = sphi 0, %s559
      %s577 = sphi 0, %s577
      %s579 = sphi 0, %s577
      %s580 = sphi 0, %s579
      %s594 = sphi 0, %s580
      %s598 = sphi 0, %s598
      %s600 = sphi 0, %s598
      %s601 = sphi 0, %s600
      %s615 = sphi 0, %s601
      %s619 = sphi 0, %s619
      %s621 = sphi 0, %s619
      %s622 = sphi 0, %s621
      %s636 = sphi 0, %s622
      %s640 = sphi 0, %s640
      %s642 = sphi 0, %s640
      %s643 = sphi 0, %s642
      %s657 = sphi 0, %s643
      %s661 = sphi 0, %s661
      %s663 = sphi 0, %s661
      %s664 = sphi 0, %s663
      %s678 = sphi 0, %s664
      %s682 = sphi 0, %s682
      %s684 = sphi 0, %s682
      %s685 = sphi 0, %s684
      %s699 = sphi 0, %s685
      %s703 = sphi 0, %s703
      %s705 = sphi 0, %s703
      %s706 = sphi 0, %s705
      %s720 = sphi 0, %s706
      %s724 = sphi 0, %s724
      %s726 = sphi 0, %s724
      %s727 = sphi 0, %s726
      %s741 = sphi 0, %s727
      %s745 = sphi 0, %s745
      %s747 = sphi 0, %s745
      %s748 = sphi 0, %s747
      %s762 = sphi 0, %s748
      %s770 = sphi 0, %s772
      %s773 = sphi 0, %s770
      %s774 = sphi 0, %s773
      %s790 = sphi 0, %s774
    $region4: #{tpu_custom_call.1} parent=1 // loop_header_branch
      %95 = sbr.rel (%p93) target = $region8
    $region5: #{tpu_custom_call.1} parent=1 // loop_body
      %s97 = ssub.s32 %s92, 1
      %s98 = ssub.s32 %s92, 2
      %s105 = sadd.s32 1, %s100
      %p106 = scmp.ge.s32.totalorder %s105, 2
      %s107 = scalar_select %p106, 0, %s105
      %s108 = sadd.s32 1, %s99
      %s109 = scalar_select %p106, %s108, %s99
      %p110 = scmp.ge.s32.totalorder %s109, 2
      %s111 = scalar_select %p110, 0, %s109
      %s112 = ssub.s32 %s99, %s111
      %s113 = ssub.s32 %s100, %s107
      %s114 = sor.u32 %s112, %s113
      %p115 = scmp.eq.s32.totalorder %s114, 0
      %s117 = sadd.s32 %s116, 1
      %s118 = scalar_select %p115, %s116, %s117
      %p121 = pneg %p115
      %p122 = scmp.eq.s32.totalorder %s92, 3
      %p123 = por %p121, %p122
      %p124 = scmp.ne.s32.totalorder %s116, %s119
      %p125 = scmp.eq.s32.totalorder %s92, 0
      %p126 = por %p124, %p125
      %p127 = scmp.ne.s32.totalorder %s116, %s119
      %p128 = scmp.eq.s32.totalorder %s97, 3
      %p129 = por %p127, %p128
      %p130 = scmp.ne.s32.totalorder %s119, %s120
      %p131 = scmp.eq.s32.totalorder %s97, 0
      %p132 = por %p130, %p131
      %p133 = scmp.ne.s32.totalorder %s119, %s120
      %p134 = scmp.eq.s32.totalorder %s98, 3
      %p135 = por %p133, %p134
      %p137 = scmp.ne.s32.totalorder %s120, %s136
      %p138 = scmp.eq.s32.totalorder %s98, 0
      %p139 = por %p137, %p138
      %s140 = ssub.s32 %s99, %s111
      %p141 = scmp.eq.s32.totalorder %s140, 0
      %s143 = sadd.s32 %s142, 1
      %s144 = scalar_select %p141, %s142, %s143
      %p147 = pneg %p141
      %p148 = scmp.eq.s32.totalorder %s92, 3
      %p149 = por %p147, %p148
      %p150 = scmp.ne.s32.totalorder %s142, %s145
      %p151 = scmp.eq.s32.totalorder %s92, 0
      %p152 = por %p150, %p151
      %p153 = scmp.ne.s32.totalorder %s142, %s145
      %p154 = scmp.eq.s32.totalorder %s97, 3
      %p155 = por %p153, %p154
      %p156 = scmp.ne.s32.totalorder %s145, %s146
      %p157 = scmp.eq.s32.totalorder %s97, 0
      %p158 = por %p156, %p157
      %p159 = scmp.ne.s32.totalorder %s145, %s146
      %p160 = scmp.eq.s32.totalorder %s98, 3
      %p161 = por %p159, %p160
      %p163 = scmp.ne.s32.totalorder %s146, %s162
      %p164 = scmp.eq.s32.totalorder %s98, 0
      %p165 = por %p163, %p164
      %s166 = ssub.s32 %s99, %s111
      %p167 = scmp.eq.s32.totalorder %s166, 0
      %s169 = sadd.s32 %s168, 1
      %s170 = scalar_select %p167, %s168, %s169
      %p173 = pneg %p167
      %p174 = scmp.eq.s32.totalorder %s92, 3
      %p175 = por %p173, %p174
      %p176 = scmp.ne.s32.totalorder %s168, %s171
      %p177 = scmp.eq.s32.totalorder %s92, 0
      %p178 = por %p176, %p177
      %p179 = scmp.ne.s32.totalorder %s168, %s171
      %p180 = scmp.eq.s32.totalorder %s97, 3
      %p181 = por %p179, %p180
      %p182 = scmp.ne.s32.totalorder %s171, %s172
      %p183 = scmp.eq.s32.totalorder %s97, 0
      %p184 = por %p182, %p183
      %p185 = scmp.ne.s32.totalorder %s171, %s172
      %p186 = scmp.eq.s32.totalorder %s98, 3
      %p187 = por %p185, %p186
      %p189 = scmp.ne.s32.totalorder %s172, %s188
      %p190 = scmp.eq.s32.totalorder %s98, 0
      %p191 = por %p189, %p190
      %s192 = ssub.s32 %s99, %s111
      %s193 = ssub.s32 %s100, %s107
      %s194 = sor.u32 %s192, %s193
      %p195 = scmp.eq.s32.totalorder %s194, 0
      %s197 = sadd.s32 %s196, 1
      %s198 = scalar_select %p195, %s196, %s197
      %p201 = pneg %p195
      %p202 = scmp.eq.s32.totalorder %s92, 3
      %p203 = por %p201, %p202
      %p204 = scmp.ne.s32.totalorder %s196, %s199
      %p205 = scmp.eq.s32.totalorder %s92, 0
      %p206 = por %p204, %p205
      %p207 = scmp.ne.s32.totalorder %s196, %s199
      %p208 = scmp.eq.s32.totalorder %s97, 3
      %p209 = por %p207, %p208
      %p210 = scmp.ne.s32.totalorder %s199, %s200
      %p211 = scmp.eq.s32.totalorder %s97, 0
      %p212 = por %p210, %p211
      %p213 = scmp.ne.s32.totalorder %s199, %s200
      %p214 = scmp.eq.s32.totalorder %s98, 3
      %p215 = por %p213, %p214
      %p217 = scmp.ne.s32.totalorder %s200, %s216
      %p218 = scmp.eq.s32.totalorder %s98, 0
      %p219 = por %p217, %p218
      %s221 = sadd.s32 %s220, 1
      %p224 = scmp.eq.s32.totalorder %s92, 3
      %p225 = scmp.ne.s32.totalorder %s220, %s222
      %p226 = scmp.eq.s32.totalorder %s92, 0
      %p227 = por %p225, %p226
      %p228 = scmp.ne.s32.totalorder %s220, %s222
      %p229 = scmp.eq.s32.totalorder %s97, 3
      %p230 = por %p228, %p229
      %p231 = scmp.ne.s32.totalorder %s222, %s223
      %p232 = scmp.eq.s32.totalorder %s97, 0
      %p233 = por %p231, %p232
      %p234 = scmp.ne.s32.totalorder %s222, %s223
      %p235 = scmp.eq.s32.totalorder %s98, 3
      %p236 = por %p234, %p235
      %p238 = scmp.ne.s32.totalorder %s223, %s237
      %p239 = scmp.eq.s32.totalorder %s98, 0
      %p240 = por %p238, %p239
      %s242 = sadd.s32 %s241, 1
      %p245 = scmp.eq.s32.totalorder %s92, 3
      %p246 = scmp.ne.s32.totalorder %s241, %s243
      %p247 = scmp.eq.s32.totalorder %s92, 0
      %p248 = por %p246, %p247
      %p249 = scmp.ne.s32.totalorder %s241, %s243
      %p250 = scmp.eq.s32.totalorder %s97, 3
      %p251 = por %p249, %p250
      %p252 = scmp.ne.s32.totalorder %s243, %s244
      %p253 = scmp.eq.s32.totalorder %s97, 0
      %p254 = por %p252, %p253
      %p255 = scmp.ne.s32.totalorder %s243, %s244
      %p256 = scmp.eq.s32.totalorder %s98, 3
      %p257 = por %p255, %p256
      %p259 = scmp.ne.s32.totalorder %s244, %s258
      %p260 = scmp.eq.s32.totalorder %s98, 0
      %p261 = por %p259, %p260
      %s263 = sadd.s32 %s262, 1
      %p266 = scmp.eq.s32.totalorder %s92, 3
      %p267 = scmp.ne.s32.totalorder %s262, %s264
      %p268 = scmp.eq.s32.totalorder %s92, 0
      %p269 = por %p267, %p268
      %p270 = scmp.ne.s32.totalorder %s262, %s264
      %p271 = scmp.eq.s32.totalorder %s97, 3
      %p272 = por %p270, %p271
      %p273 = scmp.ne.s32.totalorder %s264, %s265
      %p274 = scmp.eq.s32.totalorder %s97, 0
      %p275 = por %p273, %p274
      %p276 = scmp.ne.s32.totalorder %s264, %s265
      %p277 = scmp.eq.s32.totalorder %s98, 3
      %p278 = por %p276, %p277
      %p280 = scmp.ne.s32.totalorder %s265, %s279
      %p281 = scmp.eq.s32.totalorder %s98, 0
      %p282 = por %p280, %p281
      %s284 = sadd.s32 %s283, 1
      %p287 = scmp.eq.s32.totalorder %s92, 3
      %p288 = scmp.ne.s32.totalorder %s283, %s285
      %p289 = scmp.eq.s32.totalorder %s92, 0
      %p290 = por %p288, %p289
      %p291 = scmp.ne.s32.totalorder %s283, %s285
      %p292 = scmp.eq.s32.totalorder %s97, 3
      %p293 = por %p291, %p292
      %p294 = scmp.ne.s32.totalorder %s285, %s286
      %p295 = scmp.eq.s32.totalorder %s97, 0
      %p296 = por %p294, %p295
      %p297 = scmp.ne.s32.totalorder %s285, %s286
      %p298 = scmp.eq.s32.totalorder %s98, 3
      %p299 = por %p297, %p298
      %p301 = scmp.ne.s32.totalorder %s286, %s300
      %p302 = scmp.eq.s32.totalorder %s98, 0
      %p303 = por %p301, %p302
      %s305 = sadd.s32 %s304, 1
      %p308 = scmp.eq.s32.totalorder %s92, 3
      %p309 = scmp.ne.s32.totalorder %s304, %s306
      %p310 = scmp.eq.s32.totalorder %s92, 0
      %p311 = por %p309, %p310
      %p312 = scmp.ne.s32.totalorder %s304, %s306
      %p313 = scmp.eq.s32.totalorder %s97, 3
      %p314 = por %p312, %p313
      %p315 = scmp.ne.s32.totalorder %s306, %s307
      %p316 = scmp.eq.s32.totalorder %s97, 0
      %p317 = por %p315, %p316
      %p318 = scmp.ne.s32.totalorder %s306, %s307
      %p319 = scmp.eq.s32.totalorder %s98, 3
      %p320 = por %p318, %p319
      %p322 = scmp.ne.s32.totalorder %s307, %s321
      %p323 = scmp.eq.s32.totalorder %s98, 0
      %p324 = por %p322, %p323
      %s326 = sadd.s32 %s325, 1
      %p329 = scmp.eq.s32.totalorder %s92, 3
      %p330 = scmp.ne.s32.totalorder %s325, %s327
      %p331 = scmp.eq.s32.totalorder %s92, 0
      %p332 = por %p330, %p331
      %p333 = scmp.ne.s32.totalorder %s325, %s327
      %p334 = scmp.eq.s32.totalorder %s97, 3
      %p335 = por %p333, %p334
      %p336 = scmp.ne.s32.totalorder %s327, %s328
      %p337 = scmp.eq.s32.totalorder %s97, 0
      %p338 = por %p336, %p337
      %p339 = scmp.ne.s32.totalorder %s327, %s328
      %p340 = scmp.eq.s32.totalorder %s98, 3
      %p341 = por %p339, %p340
      %p343 = scmp.ne.s32.totalorder %s328, %s342
      %p344 = scmp.eq.s32.totalorder %s98, 0
      %p345 = por %p343, %p344
      %s347 = sadd.s32 %s346, 1
      %p350 = scmp.eq.s32.totalorder %s92, 3
      %p351 = scmp.ne.s32.totalorder %s346, %s348
      %p352 = scmp.eq.s32.totalorder %s92, 0
      %p353 = por %p351, %p352
      %p354 = scmp.ne.s32.totalorder %s346, %s348
      %p355 = scmp.eq.s32.totalorder %s97, 3
      %p356 = por %p354, %p355
      %p357 = scmp.ne.s32.totalorder %s348, %s349
      %p358 = scmp.eq.s32.totalorder %s97, 0
      %p359 = por %p357, %p358
      %p360 = scmp.ne.s32.totalorder %s348, %s349
      %p361 = scmp.eq.s32.totalorder %s98, 3
      %p362 = por %p360, %p361
      %p364 = scmp.ne.s32.totalorder %s349, %s363
      %p365 = scmp.eq.s32.totalorder %s98, 0
      %p366 = por %p364, %p365
      %s368 = sadd.s32 %s367, 1
      %p371 = scmp.eq.s32.totalorder %s92, 3
      %p372 = scmp.ne.s32.totalorder %s367, %s369
      %p373 = scmp.eq.s32.totalorder %s92, 0
      %p374 = por %p372, %p373
      %p375 = scmp.ne.s32.totalorder %s367, %s369
      %p376 = scmp.eq.s32.totalorder %s97, 3
      %p377 = por %p375, %p376
      %p378 = scmp.ne.s32.totalorder %s369, %s370
      %p379 = scmp.eq.s32.totalorder %s97, 0
      %p380 = por %p378, %p379
      %p381 = scmp.ne.s32.totalorder %s369, %s370
      %p382 = scmp.eq.s32.totalorder %s98, 3
      %p383 = por %p381, %p382
      %p385 = scmp.ne.s32.totalorder %s370, %s384
      %p386 = scmp.eq.s32.totalorder %s98, 0
      %p387 = por %p385, %p386
      %s389 = sadd.s32 %s388, 1
      %p392 = scmp.eq.s32.totalorder %s92, 3
      %p393 = scmp.ne.s32.totalorder %s388, %s390
      %p394 = scmp.eq.s32.totalorder %s92, 0
      %p395 = por %p393, %p394
      %p396 = scmp.ne.s32.totalorder %s388, %s390
      %p397 = scmp.eq.s32.totalorder %s97, 3
      %p398 = por %p396, %p397
      %p399 = scmp.ne.s32.totalorder %s390, %s391
      %p400 = scmp.eq.s32.totalorder %s97, 0
      %p401 = por %p399, %p400
      %p402 = scmp.ne.s32.totalorder %s390, %s391
      %p403 = scmp.eq.s32.totalorder %s98, 3
      %p404 = por %p402, %p403
      %p406 = scmp.ne.s32.totalorder %s391, %s405
      %p407 = scmp.eq.s32.totalorder %s98, 0
      %p408 = por %p406, %p407
      %s410 = sadd.s32 %s409, 1
      %p413 = scmp.eq.s32.totalorder %s92, 3
      %p414 = scmp.ne.s32.totalorder %s409, %s411
      %p415 = scmp.eq.s32.totalorder %s92, 0
      %p416 = por %p414, %p415
      %p417 = scmp.ne.s32.totalorder %s409, %s411
      %p418 = scmp.eq.s32.totalorder %s97, 3
      %p419 = por %p417, %p418
      %p420 = scmp.ne.s32.totalorder %s411, %s412
      %p421 = scmp.eq.s32.totalorder %s97, 0
      %p422 = por %p420, %p421
      %p423 = scmp.ne.s32.totalorder %s411, %s412
      %p424 = scmp.eq.s32.totalorder %s98, 3
      %p425 = por %p423, %p424
      %p427 = scmp.ne.s32.totalorder %s412, %s426
      %p428 = scmp.eq.s32.totalorder %s98, 0
      %p429 = por %p427, %p428
      %s431 = sadd.s32 %s430, 1
      %p434 = scmp.eq.s32.totalorder %s92, 3
      %p435 = scmp.ne.s32.totalorder %s430, %s432
      %p436 = scmp.eq.s32.totalorder %s92, 0
      %p437 = por %p435, %p436
      %p438 = scmp.ne.s32.totalorder %s430, %s432
      %p439 = scmp.eq.s32.totalorder %s97, 3
      %p440 = por %p438, %p439
      %p441 = scmp.ne.s32.totalorder %s432, %s433
      %p442 = scmp.eq.s32.totalorder %s97, 0
      %p443 = por %p441, %p442
      %p444 = scmp.ne.s32.totalorder %s432, %s433
      %p445 = scmp.eq.s32.totalorder %s98, 3
      %p446 = por %p444, %p445
      %p448 = scmp.ne.s32.totalorder %s433, %s447
      %p449 = scmp.eq.s32.totalorder %s98, 0
      %p450 = por %p448, %p449
      %s452 = sadd.s32 %s451, 1
      %p455 = scmp.eq.s32.totalorder %s92, 3
      %p456 = scmp.ne.s32.totalorder %s451, %s453
      %p457 = scmp.eq.s32.totalorder %s92, 0
      %p458 = por %p456, %p457
      %p459 = scmp.ne.s32.totalorder %s451, %s453
      %p460 = scmp.eq.s32.totalorder %s97, 3
      %p461 = por %p459, %p460
      %p462 = scmp.ne.s32.totalorder %s453, %s454
      %p463 = scmp.eq.s32.totalorder %s97, 0
      %p464 = por %p462, %p463
      %p465 = scmp.ne.s32.totalorder %s453, %s454
      %p466 = scmp.eq.s32.totalorder %s98, 3
      %p467 = por %p465, %p466
      %p469 = scmp.ne.s32.totalorder %s454, %s468
      %p470 = scmp.eq.s32.totalorder %s98, 0
      %p471 = por %p469, %p470
      %s473 = sadd.s32 %s472, 1
      %p476 = scmp.eq.s32.totalorder %s92, 3
      %p477 = scmp.ne.s32.totalorder %s472, %s474
      %p478 = scmp.eq.s32.totalorder %s92, 0
      %p479 = por %p477, %p478
      %p480 = scmp.ne.s32.totalorder %s472, %s474
      %p481 = scmp.eq.s32.totalorder %s97, 3
      %p482 = por %p480, %p481
      %p483 = scmp.ne.s32.totalorder %s474, %s475
      %p484 = scmp.eq.s32.totalorder %s97, 0
      %p485 = por %p483, %p484
      %p486 = scmp.ne.s32.totalorder %s474, %s475
      %p487 = scmp.eq.s32.totalorder %s98, 3
      %p488 = por %p486, %p487
      %p490 = scmp.ne.s32.totalorder %s475, %s489
      %p491 = scmp.eq.s32.totalorder %s98, 0
      %p492 = por %p490, %p491
      %s494 = sadd.s32 %s493, 1
      %p497 = scmp.eq.s32.totalorder %s92, 3
      %p498 = scmp.ne.s32.totalorder %s493, %s495
      %p499 = scmp.eq.s32.totalorder %s92, 0
      %p500 = por %p498, %p499
      %p501 = scmp.ne.s32.totalorder %s493, %s495
      %p502 = scmp.eq.s32.totalorder %s97, 3
      %p503 = por %p501, %p502
      %p504 = scmp.ne.s32.totalorder %s495, %s496
      %p505 = scmp.eq.s32.totalorder %s97, 0
      %p506 = por %p504, %p505
      %p507 = scmp.ne.s32.totalorder %s495, %s496
      %p508 = scmp.eq.s32.totalorder %s98, 3
      %p509 = por %p507, %p508
      %p511 = scmp.ne.s32.totalorder %s496, %s510
      %p512 = scmp.eq.s32.totalorder %s98, 0
      %p513 = por %p511, %p512
      %s515 = sadd.s32 %s514, 1
      %p518 = scmp.eq.s32.totalorder %s92, 3
      %p519 = scmp.ne.s32.totalorder %s514, %s516
      %p520 = scmp.eq.s32.totalorder %s92, 0
      %p521 = por %p519, %p520
      %p522 = scmp.ne.s32.totalorder %s514, %s516
      %p523 = scmp.eq.s32.totalorder %s97, 3
      %p524 = por %p522, %p523
      %p525 = scmp.ne.s32.totalorder %s516, %s517
      %p526 = scmp.eq.s32.totalorder %s97, 0
      %p527 = por %p525, %p526
      %p528 = scmp.ne.s32.totalorder %s516, %s517
      %p529 = scmp.eq.s32.totalorder %s98, 3
      %p530 = por %p528, %p529
      %p532 = scmp.ne.s32.totalorder %s517, %s531
      %p533 = scmp.eq.s32.totalorder %s98, 0
      %p534 = por %p532, %p533
      %s536 = sadd.s32 %s535, 1
      %p539 = scmp.eq.s32.totalorder %s92, 3
      %p540 = scmp.ne.s32.totalorder %s535, %s537
      %p541 = scmp.eq.s32.totalorder %s92, 0
      %p542 = por %p540, %p541
      %p543 = scmp.ne.s32.totalorder %s535, %s537
      %p544 = scmp.eq.s32.totalorder %s97, 3
      %p545 = por %p543, %p544
      %p546 = scmp.ne.s32.totalorder %s537, %s538
      %p547 = scmp.eq.s32.totalorder %s97, 0
      %p548 = por %p546, %p547
      %p549 = scmp.ne.s32.totalorder %s537, %s538
      %p550 = scmp.eq.s32.totalorder %s98, 3
      %p551 = por %p549, %p550
      %p553 = scmp.ne.s32.totalorder %s538, %s552
      %p554 = scmp.eq.s32.totalorder %s98, 0
      %p555 = por %p553, %p554
      %s557 = sadd.s32 %s556, 1
      %p560 = scmp.eq.s32.totalorder %s92, 3
      %p561 = scmp.ne.s32.totalorder %s556, %s558
      %p562 = scmp.eq.s32.totalorder %s92, 0
      %p563 = por %p561, %p562
      %p564 = scmp.ne.s32.totalorder %s556, %s558
      %p565 = scmp.eq.s32.totalorder %s97, 3
      %p566 = por %p564, %p565
      %p567 = scmp.ne.s32.totalorder %s558, %s559
      %p568 = scmp.eq.s32.totalorder %s97, 0
      %p569 = por %p567, %p568
      %p570 = scmp.ne.s32.totalorder %s558, %s559
      %p571 = scmp.eq.s32.totalorder %s98, 3
      %p572 = por %p570, %p571
      %p574 = scmp.ne.s32.totalorder %s559, %s573
      %p575 = scmp.eq.s32.totalorder %s98, 0
      %p576 = por %p574, %p575
      %s578 = sadd.s32 %s577, 1
      %p581 = scmp.eq.s32.totalorder %s92, 3
      %p582 = scmp.ne.s32.totalorder %s577, %s579
      %p583 = scmp.eq.s32.totalorder %s92, 0
      %p584 = por %p582, %p583
      %p585 = scmp.ne.s32.totalorder %s577, %s579
      %p586 = scmp.eq.s32.totalorder %s97, 3
      %p587 = por %p585, %p586
      %p588 = scmp.ne.s32.totalorder %s579, %s580
      %p589 = scmp.eq.s32.totalorder %s97, 0
      %p590 = por %p588, %p589
      %p591 = scmp.ne.s32.totalorder %s579, %s580
      %p592 = scmp.eq.s32.totalorder %s98, 3
      %p593 = por %p591, %p592
      %p595 = scmp.ne.s32.totalorder %s580, %s594
      %p596 = scmp.eq.s32.totalorder %s98, 0
      %p597 = por %p595, %p596
      %s599 = sadd.s32 %s598, 1
      %p602 = scmp.eq.s32.totalorder %s92, 3
      %p603 = scmp.ne.s32.totalorder %s598, %s600
      %p604 = scmp.eq.s32.totalorder %s92, 0
      %p605 = por %p603, %p604
      %p606 = scmp.ne.s32.totalorder %s598, %s600
      %p607 = scmp.eq.s32.totalorder %s97, 3
      %p608 = por %p606, %p607
      %p609 = scmp.ne.s32.totalorder %s600, %s601
      %p610 = scmp.eq.s32.totalorder %s97, 0
      %p611 = por %p609, %p610
      %p612 = scmp.ne.s32.totalorder %s600, %s601
      %p613 = scmp.eq.s32.totalorder %s98, 3
      %p614 = por %p612, %p613
      %p616 = scmp.ne.s32.totalorder %s601, %s615
      %p617 = scmp.eq.s32.totalorder %s98, 0
      %p618 = por %p616, %p617
      %s620 = sadd.s32 %s619, 1
      %p623 = scmp.eq.s32.totalorder %s92, 3
      %p624 = scmp.ne.s32.totalorder %s619, %s621
      %p625 = scmp.eq.s32.totalorder %s92, 0
      %p626 = por %p624, %p625
      %p627 = scmp.ne.s32.totalorder %s619, %s621
      %p628 = scmp.eq.s32.totalorder %s97, 3
      %p629 = por %p627, %p628
      %p630 = scmp.ne.s32.totalorder %s621, %s622
      %p631 = scmp.eq.s32.totalorder %s97, 0
      %p632 = por %p630, %p631
      %p633 = scmp.ne.s32.totalorder %s621, %s622
      %p634 = scmp.eq.s32.totalorder %s98, 3
      %p635 = por %p633, %p634
      %p637 = scmp.ne.s32.totalorder %s622, %s636
      %p638 = scmp.eq.s32.totalorder %s98, 0
      %p639 = por %p637, %p638
      %s641 = sadd.s32 %s640, 1
      %p644 = scmp.eq.s32.totalorder %s92, 3
      %p645 = scmp.ne.s32.totalorder %s640, %s642
      %p646 = scmp.eq.s32.totalorder %s92, 0
      %p647 = por %p645, %p646
      %p648 = scmp.ne.s32.totalorder %s640, %s642
      %p649 = scmp.eq.s32.totalorder %s97, 3
      %p650 = por %p648, %p649
      %p651 = scmp.ne.s32.totalorder %s642, %s643
      %p652 = scmp.eq.s32.totalorder %s97, 0
      %p653 = por %p651, %p652
      %p654 = scmp.ne.s32.totalorder %s642, %s643
      %p655 = scmp.eq.s32.totalorder %s98, 3
      %p656 = por %p654, %p655
      %p658 = scmp.ne.s32.totalorder %s643, %s657
      %p659 = scmp.eq.s32.totalorder %s98, 0
      %p660 = por %p658, %p659
      %s662 = sadd.s32 %s661, 1
      %p665 = scmp.eq.s32.totalorder %s92, 3
      %p666 = scmp.ne.s32.totalorder %s661, %s663
      %p667 = scmp.eq.s32.totalorder %s92, 0
      %p668 = por %p666, %p667
      %p669 = scmp.ne.s32.totalorder %s661, %s663
      %p670 = scmp.eq.s32.totalorder %s97, 3
      %p671 = por %p669, %p670
      %p672 = scmp.ne.s32.totalorder %s663, %s664
      %p673 = scmp.eq.s32.totalorder %s97, 0
      %p674 = por %p672, %p673
      %p675 = scmp.ne.s32.totalorder %s663, %s664
      %p676 = scmp.eq.s32.totalorder %s98, 3
      %p677 = por %p675, %p676
      %p679 = scmp.ne.s32.totalorder %s664, %s678
      %p680 = scmp.eq.s32.totalorder %s98, 0
      %p681 = por %p679, %p680
      %s683 = sadd.s32 %s682, 1
      %p686 = scmp.eq.s32.totalorder %s92, 3
      %p687 = scmp.ne.s32.totalorder %s682, %s684
      %p688 = scmp.eq.s32.totalorder %s92, 0
      %p689 = por %p687, %p688
      %p690 = scmp.ne.s32.totalorder %s682, %s684
      %p691 = scmp.eq.s32.totalorder %s97, 3
      %p692 = por %p690, %p691
      %p693 = scmp.ne.s32.totalorder %s684, %s685
      %p694 = scmp.eq.s32.totalorder %s97, 0
      %p695 = por %p693, %p694
      %p696 = scmp.ne.s32.totalorder %s684, %s685
      %p697 = scmp.eq.s32.totalorder %s98, 3
      %p698 = por %p696, %p697
      %p700 = scmp.ne.s32.totalorder %s685, %s699
      %p701 = scmp.eq.s32.totalorder %s98, 0
      %p702 = por %p700, %p701
      %s704 = sadd.s32 %s703, 1
      %p707 = scmp.eq.s32.totalorder %s92, 3
      %p708 = scmp.ne.s32.totalorder %s703, %s705
      %p709 = scmp.eq.s32.totalorder %s92, 0
      %p710 = por %p708, %p709
      %p711 = scmp.ne.s32.totalorder %s703, %s705
      %p712 = scmp.eq.s32.totalorder %s97, 3
      %p713 = por %p711, %p712
      %p714 = scmp.ne.s32.totalorder %s705, %s706
      %p715 = scmp.eq.s32.totalorder %s97, 0
      %p716 = por %p714, %p715
      %p717 = scmp.ne.s32.totalorder %s705, %s706
      %p718 = scmp.eq.s32.totalorder %s98, 3
      %p719 = por %p717, %p718
      %p721 = scmp.ne.s32.totalorder %s706, %s720
      %p722 = scmp.eq.s32.totalorder %s98, 0
      %p723 = por %p721, %p722
      %s725 = sadd.s32 %s724, 1
      %p728 = scmp.eq.s32.totalorder %s92, 3
      %p729 = scmp.ne.s32.totalorder %s724, %s726
      %p730 = scmp.eq.s32.totalorder %s92, 0
      %p731 = por %p729, %p730
      %p732 = scmp.ne.s32.totalorder %s724, %s726
      %p733 = scmp.eq.s32.totalorder %s97, 3
      %p734 = por %p732, %p733
      %p735 = scmp.ne.s32.totalorder %s726, %s727
      %p736 = scmp.eq.s32.totalorder %s97, 0
      %p737 = por %p735, %p736
      %p738 = scmp.ne.s32.totalorder %s726, %s727
      %p739 = scmp.eq.s32.totalorder %s98, 3
      %p740 = por %p738, %p739
      %p742 = scmp.ne.s32.totalorder %s727, %s741
      %p743 = scmp.eq.s32.totalorder %s98, 0
      %p744 = por %p742, %p743
      %s746 = sadd.s32 %s745, 1
      %p749 = scmp.eq.s32.totalorder %s92, 3
      %p750 = scmp.ne.s32.totalorder %s745, %s747
      %p751 = scmp.eq.s32.totalorder %s92, 0
      %p752 = por %p750, %p751
      %p753 = scmp.ne.s32.totalorder %s745, %s747
      %p754 = scmp.eq.s32.totalorder %s97, 3
      %p755 = por %p753, %p754
      %p756 = scmp.ne.s32.totalorder %s747, %s748
      %p757 = scmp.eq.s32.totalorder %s97, 0
      %p758 = por %p756, %p757
      %p759 = scmp.ne.s32.totalorder %s747, %s748
      %p760 = scmp.eq.s32.totalorder %s98, 3
      %p761 = por %p759, %p760
      %p763 = scmp.ne.s32.totalorder %s748, %s762
      %p764 = scmp.eq.s32.totalorder %s98, 0
      %p765 = por %p763, %p764
      %s766 = ssub.s32 %s99, %s111
      %s767 = ssub.s32 %s100, %s107
      %s768 = sor.u32 %s766, %s767
      %p769 = scmp.eq.s32.totalorder %s768, 0
      %s771 = sadd.s32 %s770, 1
      %s772 = scalar_select %p769, %s770, %s771
      %p775 = pneg %p769
      %p776 = scmp.eq.s32.totalorder %s92, 3
      %p777 = por %p775, %p776
      %p778 = scmp.ne.s32.totalorder %s770, %s773
      %p779 = scmp.eq.s32.totalorder %s92, 0
      %p780 = por %p778, %p779
      %p781 = scmp.ne.s32.totalorder %s770, %s773
      %p782 = scmp.eq.s32.totalorder %s97, 3
      %p783 = por %p781, %p782
      %p784 = scmp.ne.s32.totalorder %s773, %s774
      %p785 = scmp.eq.s32.totalorder %s97, 0
      %p786 = por %p784, %p785
      %p787 = scmp.ne.s32.totalorder %s773, %s774
      %p788 = scmp.eq.s32.totalorder %s98, 3
      %p789 = por %p787, %p788
      %p791 = scmp.ne.s32.totalorder %s774, %s790
      %p792 = scmp.eq.s32.totalorder %s98, 0
      %p793 = por %p791, %p792
      %p794 = scmp.le.s32.totalorder 1, %s92
      %p795 = scmp.lt.s32.totalorder %s92, 5
      %p796 = pnand %p794, %p795
      %p797 = pneg %p796
      // Predicated region
      $region9: #{tpu_custom_call.1} parent=5 // pred_check
        _
      $region10: #{tpu_custom_call.1} parent=5 // pred_check_branch
        %799 = sbr.rel (%p796) target = $region12
      $region11: #{tpu_custom_call.1} parent=5 // pred_region
        %s800 = ssub.s32 %s92, 1
        // Predicated region
        $region13: #{tpu_custom_call.1} parent=11 // pred_check
          %p801 = pneg %p233
        $region14: #{tpu_custom_call.1} parent=11 // pred_check_branch
          %803 = sbr.rel (%p801) target = $region16
        $region15: #{tpu_custom_call.1} parent=11 // pred_region
          %s805 = ssub.s32 1024, 1024
          %806 = vsyncadd [#allocation9], %s805
          %s807 = sshll.u32 [#allocation10], 4
          %s808 = int_to_ptr.vmem [resolvable:$true] %s807
          %813 = dma.hbm_to_vmem [thread:$0]  %s9, 1024, %s808, [#allocation9], 64, 64, 4
        $region16: #{tpu_custom_call.1} parent=11 // pred_fallthru
          _
        // Predicated region
        $region17: #{tpu_custom_call.1} parent=11 // pred_check
          %p814 = pneg %p254
        $region18: #{tpu_custom_call.1} parent=11 // pred_check_branch
          %816 = sbr.rel (%p814) target = $region20
        $region19: #{tpu_custom_call.1} parent=11 // pred_region
          %s818 = ssub.s32 16, 16
          %819 = vsyncadd [#allocation12], %s818
          %s821 = sshll.u32 [#allocation11], 4
          %s822 = int_to_ptr.vmem [resolvable:$true] %s821
          %824 = dma.hbm_to_vmem [thread:$0]  %s11, 16, %s822, [#allocation12]
        $region20: #{tpu_custom_call.1} parent=11 // pred_fallthru
          _
        // Predicated region
        $region21: #{tpu_custom_call.1} parent=11 // pred_check
          %p825 = pneg %p275
        $region22: #{tpu_custom_call.1} parent=11 // pred_check_branch
          %827 = sbr.rel (%p825) target = $region24
        $region23: #{tpu_custom_call.1} parent=11 // pred_region
          %s829 = ssub.s32 1024, 1024
          %830 = vsyncadd [#allocation12], %s829
          %s831 = sshll.u32 [#allocation13], 4
          %s832 = int_to_ptr.vmem [resolvable:$true] %s831
          %837 = dma.hbm_to_vmem [thread:$0]  %s13, 1024, %s832, [#allocation12], 64, 64, 4
        $region24: #{tpu_custom_call.1} parent=11 // pred_fallthru
          _
        // Predicated region
        $region25: #{tpu_custom_call.1} parent=11 // pred_check
          %p838 = pneg %p296
        $region26: #{tpu_custom_call.1} parent=11 // pred_check_branch
          %840 = sbr.rel (%p838) target = $region28
        $region27: #{tpu_custom_call.1} parent=11 // pred_region
          %s842 = ssub.s32 16, 16
          %843 = vsyncadd [#allocation15], %s842
          %s845 = sshll.u32 [#allocation14], 4
          %s846 = int_to_ptr.vmem [resolvable:$true] %s845
          %848 = dma.hbm_to_vmem [thread:$0]  %s15, 16, %s846, [#allocation15]
        $region28: #{tpu_custom_call.1} parent=11 // pred_fallthru
          _
        // Predicated region
        $region29: #{tpu_custom_call.1} parent=11 // pred_check
          %p849 = pneg %p317
        $region30: #{tpu_custom_call.1} parent=11 // pred_check_branch
          %851 = sbr.rel (%p849) target = $region32
        $region31: #{tpu_custom_call.1} parent=11 // pred_region
          %s853 = ssub.s32 1024, 1024
          %854 = vsyncadd [#allocation15], %s853
          %s855 = sshll.u32 [#allocation16], 4
          %s856 = int_to_ptr.vmem [resolvable:$true] %s855
          %861 = dma.hbm_to_vmem [thread:$0]  %s17, 1024, %s856, [#allocation15], 64, 64, 4
        $region32: #{tpu_custom_call.1} parent=11 // pred_fallthru
          _
        // Predicated region
        $region33: #{tpu_custom_call.1} parent=11 // pred_check
          %p862 = pneg %p338
        $region34: #{tpu_custom_call.1} parent=11 // pred_check_branch
          %864 = sbr.rel (%p862) target = $region36
        $region35: #{tpu_custom_call.1} parent=11 // pred_region
          %s866 = ssub.s32 16, 16
          %867 = vsyncadd [#allocation18], %s866
          %s869 = sshll.u32 [#allocation17], 4
          %s870 = int_to_ptr.vmem [resolvable:$true] %s869
          %872 = dma.hbm_to_vmem [thread:$0]  %s19, 16, %s870, [#allocation18]
        $region36: #{tpu_custom_call.1} parent=11 // pred_fallthru
          _
        // Predicated region
        $region37: #{tpu_custom_call.1} parent=11 // pred_check
          %p873 = pneg %p359
        $region38: #{tpu_custom_call.1} parent=11 // pred_check_branch
          %875 = sbr.rel (%p873) target = $region40
        $region39: #{tpu_custom_call.1} parent=11 // pred_region
          %s877 = ssub.s32 1024, 1024
          %878 = vsyncadd [#allocation18], %s877
          %s879 = sshll.u32 [#allocation19], 4
          %s880 = int_to_ptr.vmem [resolvable:$true] %s879
          %885 = dma.hbm_to_vmem [thread:$0]  %s21, 1024, %s880, [#allocation18], 64, 64, 4
        $region40: #{tpu_custom_call.1} parent=11 // pred_fallthru
          _
        // Predicated region
        $region41: #{tpu_custom_call.1} parent=11 // pred_check
          %p886 = pneg %p380
        $region42: #{tpu_custom_call.1} parent=11 // pred_check_branch
          %888 = sbr.rel (%p886) target = $region44
        $region43: #{tpu_custom_call.1} parent=11 // pred_region
          %s890 = ssub.s32 16, 16
          %891 = vsyncadd [#allocation21], %s890
          %s893 = sshll.u32 [#allocation20], 4
          %s894 = int_to_ptr.vmem [resolvable:$true] %s893
          %896 = dma.hbm_to_vmem [thread:$0]  %s23, 16, %s894, [#allocation21]
        $region44: #{tpu_custom_call.1} parent=11 // pred_fallthru
          _
        // Predicated region
        $region45: #{tpu_custom_call.1} parent=11 // pred_check
          %p897 = pneg %p401
        $region46: #{tpu_custom_call.1} parent=11 // pred_check_branch
          %899 = sbr.rel (%p897) target = $region48
        $region47: #{tpu_custom_call.1} parent=11 // pred_region
          %s901 = ssub.s32 1024, 1024
          %902 = vsyncadd [#allocation21], %s901
          %s903 = sshll.u32 [#allocation22], 4
          %s904 = int_to_ptr.vmem [resolvable:$true] %s903
          %909 = dma.hbm_to_vmem [thread:$0]  %s25, 1024, %s904, [#allocation21], 64, 64, 4
        $region48: #{tpu_custom_call.1} parent=11 // pred_fallthru
          _
        // Predicated region
        $region49: #{tpu_custom_call.1} parent=11 // pred_check
          %p910 = pneg %p422
        $region50: #{tpu_custom_call.1} parent=11 // pred_check_branch
          %912 = sbr.rel (%p910) target = $region52
        $region51: #{tpu_custom_call.1} parent=11 // pred_region
          %s914 = ssub.s32 16, 16
          %915 = vsyncadd [#allocation24], %s914
          %s917 = sshll.u32 [#allocation23], 4
          %s918 = int_to_ptr.vmem [resolvable:$true] %s917
          %920 = dma.hbm_to_vmem [thread:$0]  %s27, 16, %s918, [#allocation24]
        $region52: #{tpu_custom_call.1} parent=11 // pred_fallthru
          _
        // Predicated region
        $region53: #{tpu_custom_call.1} parent=11 // pred_check
          %p921 = pneg %p443
        $region54: #{tpu_custom_call.1} parent=11 // pred_check_branch
          %923 = sbr.rel (%p921) target = $region56
        $region55: #{tpu_custom_call.1} parent=11 // pred_region
          %s925 = ssub.s32 1024, 1024
          %926 = vsyncadd [#allocation24], %s925
          %s927 = sshll.u32 [#allocation25], 4
          %s928 = int_to_ptr.vmem [resolvable:$true] %s927
          %933 = dma.hbm_to_vmem [thread:$0]  %s29, 1024, %s928, [#allocation24], 64, 64, 4
        $region56: #{tpu_custom_call.1} parent=11 // pred_fallthru
          _
        // Predicated region
        $region57: #{tpu_custom_call.1} parent=11 // pred_check
          %p934 = pneg %p464
        $region58: #{tpu_custom_call.1} parent=11 // pred_check_branch
          %936 = sbr.rel (%p934) target = $region60
        $region59: #{tpu_custom_call.1} parent=11 // pred_region
          %s938 = ssub.s32 16, 16
          %939 = vsyncadd [#allocation27], %s938
          %s941 = sshll.u32 [#allocation26], 4
          %s942 = int_to_ptr.vmem [resolvable:$true] %s941
          %944 = dma.hbm_to_vmem [thread:$0]  %s31, 16, %s942, [#allocation27]
        $region60: #{tpu_custom_call.1} parent=11 // pred_fallthru
          _
        // Predicated region
        $region61: #{tpu_custom_call.1} parent=11 // pred_check
          %p945 = pneg %p485
        $region62: #{tpu_custom_call.1} parent=11 // pred_check_branch
          %947 = sbr.rel (%p945) target = $region64
        $region63: #{tpu_custom_call.1} parent=11 // pred_region
          %s949 = ssub.s32 1024, 1024
          %950 = vsyncadd [#allocation27], %s949
          %s951 = sshll.u32 [#allocation28], 4
          %s952 = int_to_ptr.vmem [resolvable:$true] %s951
          %957 = dma.hbm_to_vmem [thread:$0]  %s33, 1024, %s952, [#allocation27], 64, 64, 4
        $region64: #{tpu_custom_call.1} parent=11 // pred_fallthru
          _
        // Predicated region
        $region65: #{tpu_custom_call.1} parent=11 // pred_check
          %p958 = pneg %p506
        $region66: #{tpu_custom_call.1} parent=11 // pred_check_branch
          %960 = sbr.rel (%p958) target = $region68
        $region67: #{tpu_custom_call.1} parent=11 // pred_region
          %s962 = ssub.s32 16, 16
          %963 = vsyncadd [#allocation30], %s962
          %s965 = sshll.u32 [#allocation29], 4
          %s966 = int_to_ptr.vmem [resolvable:$true] %s965
          %968 = dma.hbm_to_vmem [thread:$0]  %s35, 16, %s966, [#allocation30]
        $region68: #{tpu_custom_call.1} parent=11 // pred_fallthru
          _
        // Predicated region
        $region69: #{tpu_custom_call.1} parent=11 // pred_check
          %p969 = pneg %p527
        $region70: #{tpu_custom_call.1} parent=11 // pred_check_branch
          %971 = sbr.rel (%p969) target = $region72
        $region71: #{tpu_custom_call.1} parent=11 // pred_region
          %s973 = ssub.s32 1024, 1024
          %974 = vsyncadd [#allocation30], %s973
          %s975 = sshll.u32 [#allocation31], 4
          %s976 = int_to_ptr.vmem [resolvable:$true] %s975
          %981 = dma.hbm_to_vmem [thread:$0]  %s37, 1024, %s976, [#allocation30], 64, 64, 4
        $region72: #{tpu_custom_call.1} parent=11 // pred_fallthru
          _
        // Predicated region
        $region73: #{tpu_custom_call.1} parent=11 // pred_check
          %p982 = pneg %p548
        $region74: #{tpu_custom_call.1} parent=11 // pred_check_branch
          %984 = sbr.rel (%p982) target = $region76
        $region75: #{tpu_custom_call.1} parent=11 // pred_region
          %s986 = ssub.s32 16, 16
          %987 = vsyncadd [#allocation33], %s986
          %s989 = sshll.u32 [#allocation32], 4
          %s990 = int_to_ptr.vmem [resolvable:$true] %s989
          %992 = dma.hbm_to_vmem [thread:$0]  %s39, 16, %s990, [#allocation33]
        $region76: #{tpu_custom_call.1} parent=11 // pred_fallthru
          _
        // Predicated region
        $region77: #{tpu_custom_call.1} parent=11 // pred_check
          %p993 = pneg %p569
        $region78: #{tpu_custom_call.1} parent=11 // pred_check_branch
          %995 = sbr.rel (%p993) target = $region80
        $region79: #{tpu_custom_call.1} parent=11 // pred_region
          %s997 = ssub.s32 2048, 2048
          %998 = vsyncadd [#allocation33], %s997
          %s999 = sshll.u32 [#allocation34], 4
          %s1000 = int_to_ptr.vmem [resolvable:$true] %s999
          %1005 = dma.hbm_to_vmem [thread:$0]  %s41, 2048, %s1000, [#allocation33], 128, 128, 8
        $region80: #{tpu_custom_call.1} parent=11 // pred_fallthru
          _
        // Predicated region
        $region81: #{tpu_custom_call.1} parent=11 // pred_check
          %p1006 = pneg %p590
        $region82: #{tpu_custom_call.1} parent=11 // pred_check_branch
          %1008 = sbr.rel (%p1006) target = $region84
        $region83: #{tpu_custom_call.1} parent=11 // pred_region
          %s1010 = ssub.s32 32, 32
          %1011 = vsyncadd [#allocation36], %s1010
          %s1013 = sshll.u32 [#allocation35], 4
          %s1014 = int_to_ptr.vmem [resolvable:$true] %s1013
          %1016 = dma.hbm_to_vmem [thread:$0]  %s43, 32, %s1014, [#allocation36]
        $region84: #{tpu_custom_call.1} parent=11 // pred_fallthru
          _
        // Predicated region
        $region85: #{tpu_custom_call.1} parent=11 // pred_check
          %p1017 = pneg %p611
        $region86: #{tpu_custom_call.1} parent=11 // pred_check_branch
          %1019 = sbr.rel (%p1017) target = $region88
        $region87: #{tpu_custom_call.1} parent=11 // pred_region
          %s1021 = ssub.s32 2048, 2048
          %1022 = vsyncadd [#allocation36], %s1021
          %s1023 = sshll.u32 [#allocation37], 4
          %s1024 = int_to_ptr.vmem [resolvable:$true] %s1023
          %1029 = dma.hbm_to_vmem [thread:$0]  %s45, 2048, %s1024, [#allocation36], 64, 64, 4
        $region88: #{tpu_custom_call.1} parent=11 // pred_fallthru
          _
        // Predicated region
        $region89: #{tpu_custom_call.1} parent=11 // pred_check
          %p1030 = pneg %p632
        $region90: #{tpu_custom_call.1} parent=11 // pred_check_branch
          %1032 = sbr.rel (%p1030) target = $region92
        $region91: #{tpu_custom_call.1} parent=11 // pred_region
          %s1034 = ssub.s32 16, 16
          %1035 = vsyncadd [#allocation39], %s1034
          %s1037 = sshll.u32 [#allocation38], 4
          %s1038 = int_to_ptr.vmem [resolvable:$true] %s1037
          %1040 = dma.hbm_to_vmem [thread:$0]  %s47, 16, %s1038, [#allocation39]
        $region92: #{tpu_custom_call.1} parent=11 // pred_fallthru
          _
        // Predicated region
        $region93: #{tpu_custom_call.1} parent=11 // pred_check
          %p1041 = pneg %p653
        $region94: #{tpu_custom_call.1} parent=11 // pred_check_branch
          %1043 = sbr.rel (%p1041) target = $region96
        $region95: #{tpu_custom_call.1} parent=11 // pred_region
          %s1045 = ssub.s32 16, 16
          %1046 = vsyncadd [#allocation39], %s1045
          %s1048 = sshll.u32 [#allocation40], 4
          %s1049 = int_to_ptr.vmem [resolvable:$true] %s1048
          %1051 = dma.hbm_to_vmem [thread:$0]  %s49, 16, %s1049, [#allocation39]
        $region96: #{tpu_custom_call.1} parent=11 // pred_fallthru
          _
        // Predicated region
        $region97: #{tpu_custom_call.1} parent=11 // pred_check
          %p1052 = pneg %p674
        $region98: #{tpu_custom_call.1} parent=11 // pred_check_branch
          %1054 = sbr.rel (%p1052) target = $region100
        $region99: #{tpu_custom_call.1} parent=11 // pred_region
          %s1056 = ssub.s32 16, 16
          %1057 = vsyncadd [#allocation42], %s1056
          %s1059 = sshll.u32 [#allocation41], 4
          %s1060 = int_to_ptr.vmem [resolvable:$true] %s1059
          %1062 = dma.hbm_to_vmem [thread:$0]  %s51, 16, %s1060, [#allocation42]
        $region100: #{tpu_custom_call.1} parent=11 // pred_fallthru
          _
        // Predicated region
        $region101: #{tpu_custom_call.1} parent=11 // pred_check
          %p1063 = pneg %p695
        $region102: #{tpu_custom_call.1} parent=11 // pred_check_branch
          %1065 = sbr.rel (%p1063) target = $region104
        $region103: #{tpu_custom_call.1} parent=11 // pred_region
          %s1067 = ssub.s32 16, 16
          %1068 = vsyncadd [#allocation42], %s1067
          %s1070 = sshll.u32 [#allocation43], 4
          %s1071 = int_to_ptr.vmem [resolvable:$true] %s1070
          %1073 = dma.hbm_to_vmem [thread:$0]  %s53, 16, %s1071, [#allocation42]
        $region104: #{tpu_custom_call.1} parent=11 // pred_fallthru
          _
        // Predicated region
        $region105: #{tpu_custom_call.1} parent=11 // pred_check
          %p1074 = pneg %p716
        $region106: #{tpu_custom_call.1} parent=11 // pred_check_branch
          %1076 = sbr.rel (%p1074) target = $region108
        $region107: #{tpu_custom_call.1} parent=11 // pred_region
          %s1078 = ssub.s32 16, 16
          %1079 = vsyncadd [#allocation45], %s1078
          %s1081 = sshll.u32 [#allocation44], 4
          %s1082 = int_to_ptr.vmem [resolvable:$true] %s1081
          %1084 = dma.hbm_to_vmem [thread:$0]  %s55, 16, %s1082, [#allocation45]
        $region108: #{tpu_custom_call.1} parent=11 // pred_fallthru
          _
        // Predicated region
        $region109: #{tpu_custom_call.1} parent=11 // pred_check
          %p1085 = pneg %p737
        $region110: #{tpu_custom_call.1} parent=11 // pred_check_branch
          %1087 = sbr.rel (%p1085) target = $region112
        $region111: #{tpu_custom_call.1} parent=11 // pred_region
          %s1089 = ssub.s32 16, 16
          %1090 = vsyncadd [#allocation45], %s1089
          %s1092 = sshll.u32 [#allocation46], 4
          %s1093 = int_to_ptr.vmem [resolvable:$true] %s1092
          %1095 = dma.hbm_to_vmem [thread:$0]  %s57, 16, %s1093, [#allocation45]
        $region112: #{tpu_custom_call.1} parent=11 // pred_fallthru
          _
        // Predicated region
        $region113: #{tpu_custom_call.1} parent=11 // pred_check
          %p1096 = pneg %p758
        $region114: #{tpu_custom_call.1} parent=11 // pred_check_branch
          %1098 = sbr.rel (%p1096) target = $region116
        $region115: #{tpu_custom_call.1} parent=11 // pred_region
          %s1100 = ssub.s32 16, 16
          %1101 = vsyncadd [#allocation48], %s1100
          %s1103 = sshll.u32 [#allocation47], 4
          %s1104 = int_to_ptr.vmem [resolvable:$true] %s1103
          %1106 = dma.hbm_to_vmem [thread:$0]  %s59, 16, %s1104, [#allocation48]
        $region116: #{tpu_custom_call.1} parent=11 // pred_fallthru
          _
      $region12: #{tpu_custom_call.1} parent=5 // pred_fallthru
        _
      %p1107 = scmp.lt.s32.totalorder %s92, 4
      // Predicated region
      $region117: #{tpu_custom_call.1} parent=5 // pred_check
        %p1108 = pneg %p1107
      $region118: #{tpu_custom_call.1} parent=5 // pred_check_branch
        %1110 = sbr.rel (%p1108) target = $region120
      $region119: #{tpu_custom_call.1} parent=5 // pred_region
        // Predicated region
        $region121: #{tpu_custom_call.1} parent=119 // pred_check
          %p1111 = pneg %p126
        $region122: #{tpu_custom_call.1} parent=119 // pred_check_branch
          %1113 = sbr.rel (%p1111) target = $region124
        $region123: #{tpu_custom_call.1} parent=119 // pred_region
          %s1114 = sand.u32 %s116, 1
          %s1115 = scalar_lea.sflag [#allocation3], %s1114
          %s1116 = sand.u32 %s116, 1
          %s1117 = smul.addr %s1116, 8
          %s1118 = scalar_lea.vmem [#allocation2], %s1117
          %s1120 = ssub.s32 128, 128
          %1121 = vsyncadd %s1115, %s1120
          %s1122 = smul.addr %s99, 2
          %s1123 = sadd.s32 %s100, %s1122
          %s1124 = smul.addr %s1123, 128
          %s1125 = scalar_lea.hbm %s1, %s1124
          %s1127 = sshll.u32 %s1118, 4
          %s1128 = int_to_ptr.vmem [resolvable:$true] %s1127
          %1130 = dma.hbm_to_vmem [thread:$0]  %s1125, 128, %s1128, %s1115
        $region124: #{tpu_custom_call.1} parent=119 // pred_fallthru
          _
        // Predicated region
        $region125: #{tpu_custom_call.1} parent=119 // pred_check
          %p1131 = pneg %p152
        $region126: #{tpu_custom_call.1} parent=119 // pred_check_branch
          %1133 = sbr.rel (%p1131) target = $region128
        $region127: #{tpu_custom_call.1} parent=119 // pred_region
          %s1134 = sand.u32 %s92, 1
          %s1135 = scalar_lea.sflag [#allocation6], %s1134
          %s1136 = sand.u32 %s142, 1
          %s1137 = smul.addr %s1136, 16
          %s1138 = scalar_lea.vmem [#allocation5], %s1137
          %s1140 = ssub.s32 256, 256
          %1141 = vsyncadd %s1135, %s1140
          %s1142 = smul.addr %s99, 2
          %s1143 = smul.addr %s1142, 128
          %s1144 = scalar_lea.hbm %s3, %s1143
          %s1145 = sshll.u32 %s1138, 4
          %s1146 = int_to_ptr.vmem [resolvable:$true] %s1145
          %1151 = dma.hbm_to_vmem [thread:$0]  %s1144, 256, %s1146, %s1135, 128, 128, 8
        $region128: #{tpu_custom_call.1} parent=119 // pred_fallthru
          _
        // Predicated region
        $region129: #{tpu_custom_call.1} parent=119 // pred_check
          %p1152 = pneg %p178
        $region130: #{tpu_custom_call.1} parent=119 // pred_check_branch
          %1154 = sbr.rel (%p1152) target = $region132
        $region131: #{tpu_custom_call.1} parent=119 // pred_region
          %s1155 = sand.u32 %s92, 1
          %s1156 = scalar_lea.sflag [#allocation6], %s1155
          %s1157 = sand.u32 %s168, 1
          %s1158 = smul.addr %s1157, 16
          %s1159 = scalar_lea.vmem [#allocation7], %s1158
          %s1161 = ssub.s32 256, 256
          %1162 = vsyncadd %s1156, %s1161
          %s1163 = smul.addr %s99, 2
          %s1164 = smul.addr %s1163, 128
          %s1165 = scalar_lea.hbm %s5, %s1164
          %s1166 = sshll.u32 %s1159, 4
          %s1167 = int_to_ptr.vmem [resolvable:$true] %s1166
          %1172 = dma.hbm_to_vmem [thread:$0]  %s1165, 256, %s1167, %s1156, 128, 128, 8
        $region132: #{tpu_custom_call.1} parent=119 // pred_fallthru
          _
        // Predicated region
        $region133: #{tpu_custom_call.1} parent=119 // pred_check
          %p1173 = pneg %p206
        $region134: #{tpu_custom_call.1} parent=119 // pred_check_branch
          %1175 = sbr.rel (%p1173) target = $region136
        $region135: #{tpu_custom_call.1} parent=119 // pred_region
          %s1176 = sand.u32 %s92, 1
          %s1177 = scalar_lea.sflag [#allocation9], %s1176
          %s1178 = sand.u32 %s196, 1
          %s1179 = smul.addr %s1178, 8
          %s1180 = scalar_lea.vmem [#allocation8], %s1179
          %s1182 = ssub.s32 128, 128
          %1183 = vsyncadd %s1177, %s1182
          %s1184 = smul.addr %s99, 2
          %s1185 = sadd.s32 %s100, %s1184
          %s1186 = smul.addr %s1185, 128
          %s1187 = scalar_lea.hbm %s7, %s1186
          %s1189 = sshll.u32 %s1180, 4
          %s1190 = int_to_ptr.vmem [resolvable:$true] %s1189
          %1192 = dma.hbm_to_vmem [thread:$0]  %s1187, 128, %s1190, %s1177
        $region136: #{tpu_custom_call.1} parent=119 // pred_fallthru
          _
      $region120: #{tpu_custom_call.1} parent=5 // pred_fallthru
        _
      %p1193 = scmp.le.s32.totalorder 1, %s92
      %p1194 = scmp.lt.s32.totalorder %s92, 5
      %p1195 = pnand %p1193, %p1194
      %p1196 = pneg %p1195
      // Predicated region
      $region137: #{tpu_custom_call.1} parent=5 // pred_check
        _
      $region138: #{tpu_custom_call.1} parent=5 // pred_check_branch
        %1198 = sbr.rel (%p1195) target = $region140
      $region139: #{tpu_custom_call.1} parent=5 // pred_region
        %s1199 = ssub.s32 %s92, 1
        %s1200 = sand.u32 %s119, 1
        %s1201 = scalar_lea.sflag [#allocation3], %s1200
        %s1202 = sand.u32 %s119, 1
        %s1203 = smul.addr %s1202, 8
        %s1204 = scalar_lea.vmem [#allocation2], %s1203
        // Predicated region
        $region141: #{tpu_custom_call.1} parent=139 // pred_check
          %p1205 = pneg %p132
        $region142: #{tpu_custom_call.1} parent=139 // pred_check_branch
          %1207 = sbr.rel (%p1205) target = $region144
        $region143: #{tpu_custom_call.1} parent=139 // pred_region
          %1208 = dma.done %s1201, 128
        $region144: #{tpu_custom_call.1} parent=139 // pred_fallthru
          _
        %s1209 = sand.u32 %s97, 1
        %s1210 = scalar_lea.sflag [#allocation6], %s1209
        %s1211 = sand.u32 %s145, 1
        %s1212 = smul.addr %s1211, 16
        %s1213 = scalar_lea.vmem [#allocation5], %s1212
        // Predicated region
        $region145: #{tpu_custom_call.1} parent=139 // pred_check
          %p1214 = pneg %p158
        $region146: #{tpu_custom_call.1} parent=139 // pred_check_branch
          %1216 = sbr.rel (%p1214) target = $region148
        $region147: #{tpu_custom_call.1} parent=139 // pred_region
          %1217 = dma.done %s1210, 256
        $region148: #{tpu_custom_call.1} parent=139 // pred_fallthru
          _
        %s1218 = sand.u32 %s97, 1
        %s1219 = scalar_lea.sflag [#allocation6], %s1218
        %s1220 = sand.u32 %s171, 1
        %s1221 = smul.addr %s1220, 16
        %s1222 = scalar_lea.vmem [#allocation7], %s1221
        // Predicated region
        $region149: #{tpu_custom_call.1} parent=139 // pred_check
          %p1223 = pneg %p184
        $region150: #{tpu_custom_call.1} parent=139 // pred_check_branch
          %1225 = sbr.rel (%p1223) target = $region152
        $region151: #{tpu_custom_call.1} parent=139 // pred_region
          %1226 = dma.done %s1219, 256
        $region152: #{tpu_custom_call.1} parent=139 // pred_fallthru
          _
        %s1227 = sand.u32 %s97, 1
        %s1228 = scalar_lea.sflag [#allocation9], %s1227
        %s1229 = sand.u32 %s199, 1
        %s1230 = smul.addr %s1229, 8
        %s1231 = scalar_lea.vmem [#allocation8], %s1230
        // Predicated region
        $region153: #{tpu_custom_call.1} parent=139 // pred_check
          %p1232 = pneg %p212
        $region154: #{tpu_custom_call.1} parent=139 // pred_check_branch
          %1234 = sbr.rel (%p1232) target = $region156
        $region155: #{tpu_custom_call.1} parent=139 // pred_region
          %1235 = dma.done %s1228, 128
        $region156: #{tpu_custom_call.1} parent=139 // pred_fallthru
          _
        // Predicated region
        $region157: #{tpu_custom_call.1} parent=139 // pred_check
          %p1236 = pneg %p233
        $region158: #{tpu_custom_call.1} parent=139 // pred_check_branch
          %1238 = sbr.rel (%p1236) target = $region160
        $region159: #{tpu_custom_call.1} parent=139 // pred_region
          %1239 = dma.done [#allocation9], 1024
        $region160: #{tpu_custom_call.1} parent=139 // pred_fallthru
          _
        // Predicated region
        $region161: #{tpu_custom_call.1} parent=139 // pred_check
          %p1240 = pneg %p254
        $region162: #{tpu_custom_call.1} parent=139 // pred_check_branch
          %1242 = sbr.rel (%p1240) target = $region164
        $region163: #{tpu_custom_call.1} parent=139 // pred_region
          %1243 = dma.done [#allocation12], 16
        $region164: #{tpu_custom_call.1} parent=139 // pred_fallthru
          _
        // Predicated region
        $region165: #{tpu_custom_call.1} parent=139 // pred_check
          %p1244 = pneg %p275
        $region166: #{tpu_custom_call.1} parent=139 // pred_check_branch
          %1246 = sbr.rel (%p1244) target = $region168
        $region167: #{tpu_custom_call.1} parent=139 // pred_region
          %1247 = dma.done [#allocation12], 1024
        $region168: #{tpu_custom_call.1} parent=139 // pred_fallthru
          _
        // Predicated region
        $region169: #{tpu_custom_call.1} parent=139 // pred_check
          %p1248 = pneg %p296
        $region170: #{tpu_custom_call.1} parent=139 // pred_check_branch
          %1250 = sbr.rel (%p1248) target = $region172
        $region171: #{tpu_custom_call.1} parent=139 // pred_region
          %1251 = dma.done [#allocation15], 16
        $region172: #{tpu_custom_call.1} parent=139 // pred_fallthru
          _
        // Predicated region
        $region173: #{tpu_custom_call.1} parent=139 // pred_check
          %p1252 = pneg %p317
        $region174: #{tpu_custom_call.1} parent=139 // pred_check_branch
          %1254 = sbr.rel (%p1252) target = $region176
        $region175: #{tpu_custom_call.1} parent=139 // pred_region
          %1255 = dma.done [#allocation15], 1024
        $region176: #{tpu_custom_call.1} parent=139 // pred_fallthru
          _
        // Predicated region
        $region177: #{tpu_custom_call.1} parent=139 // pred_check
          %p1256 = pneg %p338
        $region178: #{tpu_custom_call.1} parent=139 // pred_check_branch
          %1258 = sbr.rel (%p1256) target = $region180
        $region179: #{tpu_custom_call.1} parent=139 // pred_region
          %1259 = dma.done [#allocation18], 16
        $region180: #{tpu_custom_call.1} parent=139 // pred_fallthru
          _
        // Predicated region
        $region181: #{tpu_custom_call.1} parent=139 // pred_check
          %p1260 = pneg %p359
        $region182: #{tpu_custom_call.1} parent=139 // pred_check_branch
          %1262 = sbr.rel (%p1260) target = $region184
        $region183: #{tpu_custom_call.1} parent=139 // pred_region
          %1263 = dma.done [#allocation18], 1024
        $region184: #{tpu_custom_call.1} parent=139 // pred_fallthru
          _
        // Predicated region
        $region185: #{tpu_custom_call.1} parent=139 // pred_check
          %p1264 = pneg %p380
        $region186: #{tpu_custom_call.1} parent=139 // pred_check_branch
          %1266 = sbr.rel (%p1264) target = $region188
        $region187: #{tpu_custom_call.1} parent=139 // pred_region
          %1267 = dma.done [#allocation21], 16
        $region188: #{tpu_custom_call.1} parent=139 // pred_fallthru
          _
        // Predicated region
        $region189: #{tpu_custom_call.1} parent=139 // pred_check
          %p1268 = pneg %p401
        $region190: #{tpu_custom_call.1} parent=139 // pred_check_branch
          %1270 = sbr.rel (%p1268) target = $region192
        $region191: #{tpu_custom_call.1} parent=139 // pred_region
          %1271 = dma.done [#allocation21], 1024
        $region192: #{tpu_custom_call.1} parent=139 // pred_fallthru
          _
        // Predicated region
        $region193: #{tpu_custom_call.1} parent=139 // pred_check
          %p1272 = pneg %p422
        $region194: #{tpu_custom_call.1} parent=139 // pred_check_branch
          %1274 = sbr.rel (%p1272) target = $region196
        $region195: #{tpu_custom_call.1} parent=139 // pred_region
          %1275 = dma.done [#allocation24], 16
        $region196: #{tpu_custom_call.1} parent=139 // pred_fallthru
          _
        // Predicated region
        $region197: #{tpu_custom_call.1} parent=139 // pred_check
          %p1276 = pneg %p443
        $region198: #{tpu_custom_call.1} parent=139 // pred_check_branch
          %1278 = sbr.rel (%p1276) target = $region200
        $region199: #{tpu_custom_call.1} parent=139 // pred_region
          %1279 = dma.done [#allocation24], 1024
        $region200: #{tpu_custom_call.1} parent=139 // pred_fallthru
          _
        // Predicated region
        $region201: #{tpu_custom_call.1} parent=139 // pred_check
          %p1280 = pneg %p464
        $region202: #{tpu_custom_call.1} parent=139 // pred_check_branch
          %1282 = sbr.rel (%p1280) target = $region204
        $region203: #{tpu_custom_call.1} parent=139 // pred_region
          %1283 = dma.done [#allocation27], 16
        $region204: #{tpu_custom_call.1} parent=139 // pred_fallthru
          _
        // Predicated region
        $region205: #{tpu_custom_call.1} parent=139 // pred_check
          %p1284 = pneg %p485
        $region206: #{tpu_custom_call.1} parent=139 // pred_check_branch
          %1286 = sbr.rel (%p1284) target = $region208
        $region207: #{tpu_custom_call.1} parent=139 // pred_region
          %1287 = dma.done [#allocation27], 1024
        $region208: #{tpu_custom_call.1} parent=139 // pred_fallthru
          _
        // Predicated region
        $region209: #{tpu_custom_call.1} parent=139 // pred_check
          %p1288 = pneg %p506
        $region210: #{tpu_custom_call.1} parent=139 // pred_check_branch
          %1290 = sbr.rel (%p1288) target = $region212
        $region211: #{tpu_custom_call.1} parent=139 // pred_region
          %1291 = dma.done [#allocation30], 16
        $region212: #{tpu_custom_call.1} parent=139 // pred_fallthru
          _
        // Predicated region
        $region213: #{tpu_custom_call.1} parent=139 // pred_check
          %p1292 = pneg %p527
        $region214: #{tpu_custom_call.1} parent=139 // pred_check_branch
          %1294 = sbr.rel (%p1292) target = $region216
        $region215: #{tpu_custom_call.1} parent=139 // pred_region
          %1295 = dma.done [#allocation30], 1024
        $region216: #{tpu_custom_call.1} parent=139 // pred_fallthru
          _
        // Predicated region
        $region217: #{tpu_custom_call.1} parent=139 // pred_check
          %p1296 = pneg %p548
        $region218: #{tpu_custom_call.1} parent=139 // pred_check_branch
          %1298 = sbr.rel (%p1296) target = $region220
        $region219: #{tpu_custom_call.1} parent=139 // pred_region
          %1299 = dma.done [#allocation33], 16
        $region220: #{tpu_custom_call.1} parent=139 // pred_fallthru
          _
        // Predicated region
        $region221: #{tpu_custom_call.1} parent=139 // pred_check
          %p1300 = pneg %p569
        $region222: #{tpu_custom_call.1} parent=139 // pred_check_branch
          %1302 = sbr.rel (%p1300) target = $region224
        $region223: #{tpu_custom_call.1} parent=139 // pred_region
          %1303 = dma.done [#allocation33], 2048
        $region224: #{tpu_custom_call.1} parent=139 // pred_fallthru
          _
        // Predicated region
        $region225: #{tpu_custom_call.1} parent=139 // pred_check
          %p1304 = pneg %p590
        $region226: #{tpu_custom_call.1} parent=139 // pred_check_branch
          %1306 = sbr.rel (%p1304) target = $region228
        $region227: #{tpu_custom_call.1} parent=139 // pred_region
          %1307 = dma.done [#allocation36], 32
        $region228: #{tpu_custom_call.1} parent=139 // pred_fallthru
          _
        // Predicated region
        $region229: #{tpu_custom_call.1} parent=139 // pred_check
          %p1308 = pneg %p611
        $region230: #{tpu_custom_call.1} parent=139 // pred_check_branch
          %1310 = sbr.rel (%p1308) target = $region232
        $region231: #{tpu_custom_call.1} parent=139 // pred_region
          %1311 = dma.done [#allocation36], 2048
        $region232: #{tpu_custom_call.1} parent=139 // pred_fallthru
          _
        // Predicated region
        $region233: #{tpu_custom_call.1} parent=139 // pred_check
          %p1312 = pneg %p632
        $region234: #{tpu_custom_call.1} parent=139 // pred_check_branch
          %1314 = sbr.rel (%p1312) target = $region236
        $region235: #{tpu_custom_call.1} parent=139 // pred_region
          %1315 = dma.done [#allocation39], 16
        $region236: #{tpu_custom_call.1} parent=139 // pred_fallthru
          _
        // Predicated region
        $region237: #{tpu_custom_call.1} parent=139 // pred_check
          %p1316 = pneg %p653
        $region238: #{tpu_custom_call.1} parent=139 // pred_check_branch
          %1318 = sbr.rel (%p1316) target = $region240
        $region239: #{tpu_custom_call.1} parent=139 // pred_region
          %1319 = dma.done [#allocation39], 16
        $region240: #{tpu_custom_call.1} parent=139 // pred_fallthru
          _
        // Predicated region
        $region241: #{tpu_custom_call.1} parent=139 // pred_check
          %p1320 = pneg %p674
        $region242: #{tpu_custom_call.1} parent=139 // pred_check_branch
          %1322 = sbr.rel (%p1320) target = $region244
        $region243: #{tpu_custom_call.1} parent=139 // pred_region
          %1323 = dma.done [#allocation42], 16
        $region244: #{tpu_custom_call.1} parent=139 // pred_fallthru
          _
        // Predicated region
        $region245: #{tpu_custom_call.1} parent=139 // pred_check
          %p1324 = pneg %p695
        $region246: #{tpu_custom_call.1} parent=139 // pred_check_branch
          %1326 = sbr.rel (%p1324) target = $region248
        $region247: #{tpu_custom_call.1} parent=139 // pred_region
          %1327 = dma.done [#allocation42], 16
        $region248: #{tpu_custom_call.1} parent=139 // pred_fallthru
          _
        // Predicated region
        $region249: #{tpu_custom_call.1} parent=139 // pred_check
          %p1328 = pneg %p716
        $region250: #{tpu_custom_call.1} parent=139 // pred_check_branch
          %1330 = sbr.rel (%p1328) target = $region252
        $region251: #{tpu_custom_call.1} parent=139 // pred_region
          %1331 = dma.done [#allocation45], 16
        $region252: #{tpu_custom_call.1} parent=139 // pred_fallthru
          _
        // Predicated region
        $region253: #{tpu_custom_call.1} parent=139 // pred_check
          %p1332 = pneg %p737
        $region254: #{tpu_custom_call.1} parent=139 // pred_check_branch
          %1334 = sbr.rel (%p1332) target = $region256
        $region255: #{tpu_custom_call.1} parent=139 // pred_region
          %1335 = dma.done [#allocation45], 16
        $region256: #{tpu_custom_call.1} parent=139 // pred_fallthru
          _
        // Predicated region
        $region257: #{tpu_custom_call.1} parent=139 // pred_check
          %p1336 = pneg %p758
        $region258: #{tpu_custom_call.1} parent=139 // pred_check_branch
          %1338 = sbr.rel (%p1336) target = $region260
        $region259: #{tpu_custom_call.1} parent=139 // pred_region
          %1339 = dma.done [#allocation48], 16
        $region260: #{tpu_custom_call.1} parent=139 // pred_fallthru
          _
        %s1340 = sand.u32 %s119, 1
        %s1341 = scalar_lea.sflag [#allocation3], %s1340
        %s1342 = sand.u32 %s119, 1
        %s1343 = smul.addr %s1342, 8
        %s1344 = scalar_lea.vmem [#allocation2], %s1343
        %p1345 = pneg %p132
        %p1346 = pneg %p129
        %s1347 = sand.u32 %s97, 1
        %s1348 = scalar_lea.sflag [#allocation6], %s1347
        %s1349 = sand.u32 %s145, 1
        %s1350 = smul.addr %s1349, 16
        %s1351 = scalar_lea.vmem [#allocation5], %s1350
        %p1352 = pneg %p158
        %p1353 = pneg %p155
        %s1354 = sand.u32 %s97, 1
        %s1355 = scalar_lea.sflag [#allocation6], %s1354
        %s1356 = sand.u32 %s171, 1
        %s1357 = smul.addr %s1356, 16
        %s1358 = scalar_lea.vmem [#allocation7], %s1357
        %p1359 = pneg %p184
        %p1360 = pneg %p181
        %s1361 = sand.u32 %s97, 1
        %s1362 = scalar_lea.sflag [#allocation9], %s1361
        %s1363 = sand.u32 %s199, 1
        %s1364 = smul.addr %s1363, 8
        %s1365 = scalar_lea.vmem [#allocation8], %s1364
        %p1366 = pneg %p212
        %p1367 = pneg %p209
        %p1368 = pneg %p233
        %p1369 = pneg %p230
        %p1370 = pneg %p254
        %p1371 = pneg %p251
        %p1372 = pneg %p275
        %p1373 = pneg %p272
        %p1374 = pneg %p296
        %p1375 = pneg %p293
        %p1376 = pneg %p317
        %p1377 = pneg %p314
        %p1378 = pneg %p338
        %p1379 = pneg %p335
        %p1380 = pneg %p359
        %p1381 = pneg %p356
        %p1382 = pneg %p380
        %p1383 = pneg %p377
        %p1384 = pneg %p401
        %p1385 = pneg %p398
        %p1386 = pneg %p422
        %p1387 = pneg %p419
        %p1388 = pneg %p443
        %p1389 = pneg %p440
        %p1390 = pneg %p464
        %p1391 = pneg %p461
        %p1392 = pneg %p485
        %p1393 = pneg %p482
        %p1394 = pneg %p506
        %p1395 = pneg %p503
        %p1396 = pneg %p527
        %p1397 = pneg %p524
        %p1398 = pneg %p548
        %p1399 = pneg %p545
        %p1400 = pneg %p569
        %p1401 = pneg %p566
        %p1402 = pneg %p590
        %p1403 = pneg %p587
        %p1404 = pneg %p611
        %p1405 = pneg %p608
        %p1406 = pneg %p632
        %p1407 = pneg %p629
        %p1408 = pneg %p653
        %p1409 = pneg %p650
        %p1410 = pneg %p674
        %p1411 = pneg %p671
        %p1412 = pneg %p695
        %p1413 = pneg %p692
        %p1414 = pneg %p716
        %p1415 = pneg %p713
        %p1416 = pneg %p737
        %p1417 = pneg %p734
        %p1418 = pneg %p758
        %p1419 = pneg %p755
        %p1420 = pneg %p786
        %p1421 = pneg %p783
        %s1422 = sand.u32 %s773, 1
        %s1423 = scalar_lea.sflag [#allocation4], %s1422
        %s1424 = sand.u32 %s773, 1
        %s1425 = smul.addr %s1424, 8
        %s1426 = scalar_lea.vmem [#allocation49], %s1425
        %v1428 = vld [vmem:[#allocation10] sm:$0xf]
        %v1429 = vld [vmem:[#allocation10 + $0x4] sm:$0xf]
        %v1430 = vld [vmem:[#allocation10 + $0x8] sm:$0xf]
        %v1431 = vld [vmem:[#allocation10 + $0xc] sm:$0xf]
        %v1432 = vld [vmem:[#allocation10 + $0x10] sm:$0xf]
        %v1433 = vld [vmem:[#allocation10 + $0x14] sm:$0xf]
        %v1434 = vld [vmem:[#allocation10 + $0x18] sm:$0xf]
        %v1435 = vld [vmem:[#allocation10 + $0x1c] sm:$0xf]
        %v1436 = vld [vmem:[#allocation10 + $0x20] sm:$0xf]
        %v1437 = vld [vmem:[#allocation10 + $0x24] sm:$0xf]
        %v1438 = vld [vmem:[#allocation10 + $0x28] sm:$0xf]
        %v1439 = vld [vmem:[#allocation10 + $0x2c] sm:$0xf]
        %v1440 = vld [vmem:[#allocation10 + $0x30] sm:$0xf]
        %v1441 = vld [vmem:[#allocation10 + $0x34] sm:$0xf]
        %v1442 = vld [vmem:[#allocation10 + $0x38] sm:$0xf]
        %v1443 = vld [vmem:[#allocation10 + $0x3c] sm:$0xf]
        %v1444 = vld [vmem:[#allocation11] sm:$0x1]
        %v1445 = vld [vmem:[#allocation13] sm:$0xf]
        %v1446 = vld [vmem:[#allocation13 + $0x4] sm:$0xf]
        %v1447 = vld [vmem:[#allocation13 + $0x8] sm:$0xf]
        %v1448 = vld [vmem:[#allocation13 + $0xc] sm:$0xf]
        %v1449 = vld [vmem:[#allocation13 + $0x10] sm:$0xf]
        %v1450 = vld [vmem:[#allocation13 + $0x14] sm:$0xf]
        %v1451 = vld [vmem:[#allocation13 + $0x18] sm:$0xf]
        %v1452 = vld [vmem:[#allocation13 + $0x1c] sm:$0xf]
        %v1453 = vld [vmem:[#allocation13 + $0x20] sm:$0xf]
        %v1454 = vld [vmem:[#allocation13 + $0x24] sm:$0xf]
        %v1455 = vld [vmem:[#allocation13 + $0x28] sm:$0xf]
        %v1456 = vld [vmem:[#allocation13 + $0x2c] sm:$0xf]
        %v1457 = vld [vmem:[#allocation13 + $0x30] sm:$0xf]
        %v1458 = vld [vmem:[#allocation13 + $0x34] sm:$0xf]
        %v1459 = vld [vmem:[#allocation13 + $0x38] sm:$0xf]
        %v1460 = vld [vmem:[#allocation13 + $0x3c] sm:$0xf]
        %v1461 = vld [vmem:[#allocation14] sm:$0x1]
        %v1462 = vld [vmem:[#allocation16] sm:$0xf]
        %v1463 = vld [vmem:[#allocation16 + $0x4] sm:$0xf]
        %v1464 = vld [vmem:[#allocation16 + $0x8] sm:$0xf]
        %v1465 = vld [vmem:[#allocation16 + $0xc] sm:$0xf]
        %v1466 = vld [vmem:[#allocation16 + $0x10] sm:$0xf]
        %v1467 = vld [vmem:[#allocation16 + $0x14] sm:$0xf]
        %v1468 = vld [vmem:[#allocation16 + $0x18] sm:$0xf]
        %v1469 = vld [vmem:[#allocation16 + $0x1c] sm:$0xf]
        %v1470 = vld [vmem:[#allocation16 + $0x20] sm:$0xf]
        %v1471 = vld [vmem:[#allocation16 + $0x24] sm:$0xf]
        %v1472 = vld [vmem:[#allocation16 + $0x28] sm:$0xf]
        %v1473 = vld [vmem:[#allocation16 + $0x2c] sm:$0xf]
        %v1474 = vld [vmem:[#allocation16 + $0x30] sm:$0xf]
        %v1475 = vld [vmem:[#allocation16 + $0x34] sm:$0xf]
        %v1476 = vld [vmem:[#allocation16 + $0x38] sm:$0xf]
        %v1477 = vld [vmem:[#allocation16 + $0x3c] sm:$0xf]
        %v1478 = vld [vmem:[#allocation17] sm:$0x1]
        %v1479 = vld [vmem:[#allocation19] sm:$0xf]
        %v1480 = vld [vmem:[#allocation19 + $0x4] sm:$0xf]
        %v1481 = vld [vmem:[#allocation19 + $0x8] sm:$0xf]
        %v1482 = vld [vmem:[#allocation19 + $0xc] sm:$0xf]
        %v1483 = vld [vmem:[#allocation19 + $0x10] sm:$0xf]
        %v1484 = vld [vmem:[#allocation19 + $0x14] sm:$0xf]
        %v1485 = vld [vmem:[#allocation19 + $0x18] sm:$0xf]
        %v1486 = vld [vmem:[#allocation19 + $0x1c] sm:$0xf]
        %v1487 = vld [vmem:[#allocation19 + $0x20] sm:$0xf]
        %v1488 = vld [vmem:[#allocation19 + $0x24] sm:$0xf]
        %v1489 = vld [vmem:[#allocation19 + $0x28] sm:$0xf]
        %v1490 = vld [vmem:[#allocation19 + $0x2c] sm:$0xf]
        %v1491 = vld [vmem:[#allocation19 + $0x30] sm:$0xf]
        %v1492 = vld [vmem:[#allocation19 + $0x34] sm:$0xf]
        %v1493 = vld [vmem:[#allocation19 + $0x38] sm:$0xf]
        %v1494 = vld [vmem:[#allocation19 + $0x3c] sm:$0xf]
        %v1495 = vld [vmem:[#allocation20] sm:$0x1]
        %v1496 = vld [vmem:[#allocation22] sm:$0xf]
        %v1497 = vld [vmem:[#allocation22 + $0x4] sm:$0xf]
        %v1498 = vld [vmem:[#allocation22 + $0x8] sm:$0xf]
        %v1499 = vld [vmem:[#allocation22 + $0xc] sm:$0xf]
        %v1500 = vld [vmem:[#allocation22 + $0x10] sm:$0xf]
        %v1501 = vld [vmem:[#allocation22 + $0x14] sm:$0xf]
        %v1502 = vld [vmem:[#allocation22 + $0x18] sm:$0xf]
        %v1503 = vld [vmem:[#allocation22 + $0x1c] sm:$0xf]
        %v1504 = vld [vmem:[#allocation22 + $0x20] sm:$0xf]
        %v1505 = vld [vmem:[#allocation22 + $0x24] sm:$0xf]
        %v1506 = vld [vmem:[#allocation22 + $0x28] sm:$0xf]
        %v1507 = vld [vmem:[#allocation22 + $0x2c] sm:$0xf]
        %v1508 = vld [vmem:[#allocation22 + $0x30] sm:$0xf]
        %v1509 = vld [vmem:[#allocation22 + $0x34] sm:$0xf]
        %v1510 = vld [vmem:[#allocation22 + $0x38] sm:$0xf]
        %v1511 = vld [vmem:[#allocation22 + $0x3c] sm:$0xf]
        %v1512 = vld [vmem:[#allocation23] sm:$0x1]
        %v1513 = vld [vmem:[#allocation25] sm:$0xf]
        %v1514 = vld [vmem:[#allocation25 + $0x4] sm:$0xf]
        %v1515 = vld [vmem:[#allocation25 + $0x8] sm:$0xf]
        %v1516 = vld [vmem:[#allocation25 + $0xc] sm:$0xf]
        %v1517 = vld [vmem:[#allocation25 + $0x10] sm:$0xf]
        %v1518 = vld [vmem:[#allocation25 + $0x14] sm:$0xf]
        %v1519 = vld [vmem:[#allocation25 + $0x18] sm:$0xf]
        %v1520 = vld [vmem:[#allocation25 + $0x1c] sm:$0xf]
        %v1521 = vld [vmem:[#allocation25 + $0x20] sm:$0xf]
        %v1522 = vld [vmem:[#allocation25 + $0x24] sm:$0xf]
        %v1523 = vld [vmem:[#allocation25 + $0x28] sm:$0xf]
        %v1524 = vld [vmem:[#allocation25 + $0x2c] sm:$0xf]
        %v1525 = vld [vmem:[#allocation25 + $0x30] sm:$0xf]
        %v1526 = vld [vmem:[#allocation25 + $0x34] sm:$0xf]
        %v1527 = vld [vmem:[#allocation25 + $0x38] sm:$0xf]
        %v1528 = vld [vmem:[#allocation25 + $0x3c] sm:$0xf]
        %v1529 = vld [vmem:[#allocation26] sm:$0x1]
        %v1530 = vld [vmem:[#allocation28] sm:$0xf]
        %v1531 = vld [vmem:[#allocation28 + $0x4] sm:$0xf]
        %v1532 = vld [vmem:[#allocation28 + $0x8] sm:$0xf]
        %v1533 = vld [vmem:[#allocation28 + $0xc] sm:$0xf]
        %v1534 = vld [vmem:[#allocation28 + $0x10] sm:$0xf]
        %v1535 = vld [vmem:[#allocation28 + $0x14] sm:$0xf]
        %v1536 = vld [vmem:[#allocation28 + $0x18] sm:$0xf]
        %v1537 = vld [vmem:[#allocation28 + $0x1c] sm:$0xf]
        %v1538 = vld [vmem:[#allocation28 + $0x20] sm:$0xf]
        %v1539 = vld [vmem:[#allocation28 + $0x24] sm:$0xf]
        %v1540 = vld [vmem:[#allocation28 + $0x28] sm:$0xf]
        %v1541 = vld [vmem:[#allocation28 + $0x2c] sm:$0xf]
        %v1542 = vld [vmem:[#allocation28 + $0x30] sm:$0xf]
        %v1543 = vld [vmem:[#allocation28 + $0x34] sm:$0xf]
        %v1544 = vld [vmem:[#allocation28 + $0x38] sm:$0xf]
        %v1545 = vld [vmem:[#allocation28 + $0x3c] sm:$0xf]
        %v1546 = vld [vmem:[#allocation29] sm:$0x1]
        %v1547 = vld [vmem:[#allocation31] sm:$0xf]
        %v1548 = vld [vmem:[#allocation31 + $0x4] sm:$0xf]
        %v1549 = vld [vmem:[#allocation31 + $0x8] sm:$0xf]
        %v1550 = vld [vmem:[#allocation31 + $0xc] sm:$0xf]
        %v1551 = vld [vmem:[#allocation31 + $0x10] sm:$0xf]
        %v1552 = vld [vmem:[#allocation31 + $0x14] sm:$0xf]
        %v1553 = vld [vmem:[#allocation31 + $0x18] sm:$0xf]
        %v1554 = vld [vmem:[#allocation31 + $0x1c] sm:$0xf]
        %v1555 = vld [vmem:[#allocation31 + $0x20] sm:$0xf]
        %v1556 = vld [vmem:[#allocation31 + $0x24] sm:$0xf]
        %v1557 = vld [vmem:[#allocation31 + $0x28] sm:$0xf]
        %v1558 = vld [vmem:[#allocation31 + $0x2c] sm:$0xf]
        %v1559 = vld [vmem:[#allocation31 + $0x30] sm:$0xf]
        %v1560 = vld [vmem:[#allocation31 + $0x34] sm:$0xf]
        %v1561 = vld [vmem:[#allocation31 + $0x38] sm:$0xf]
        %v1562 = vld [vmem:[#allocation31 + $0x3c] sm:$0xf]
        %v1563 = vld [vmem:[#allocation32] sm:$0x1]
        %v1564 = vld [vmem:[#allocation34] sm:$0xff]
        %v1565 = vld [vmem:[#allocation34 + $0x8] sm:$0xff]
        %v1566 = vld [vmem:[#allocation34 + $0x10] sm:$0xff]
        %v1567 = vld [vmem:[#allocation34 + $0x18] sm:$0xff]
        %v1568 = vld [vmem:[#allocation34 + $0x20] sm:$0xff]
        %v1569 = vld [vmem:[#allocation34 + $0x28] sm:$0xff]
        %v1570 = vld [vmem:[#allocation34 + $0x30] sm:$0xff]
        %v1571 = vld [vmem:[#allocation34 + $0x38] sm:$0xff]
        %v1572 = vld [vmem:[#allocation34 + $0x40] sm:$0xff]
        %v1573 = vld [vmem:[#allocation34 + $0x48] sm:$0xff]
        %v1574 = vld [vmem:[#allocation34 + $0x50] sm:$0xff]
        %v1575 = vld [vmem:[#allocation34 + $0x58] sm:$0xff]
        %v1576 = vld [vmem:[#allocation34 + $0x60] sm:$0xff]
        %v1577 = vld [vmem:[#allocation34 + $0x68] sm:$0xff]
        %v1578 = vld [vmem:[#allocation34 + $0x70] sm:$0xff]
        %v1579 = vld [vmem:[#allocation34 + $0x78] sm:$0xff]
        %v1580 = vld [vmem:[#allocation35] sm:$0x3]
        %v1581 = vld [vmem:[#allocation37] sm:$0xf]
        %v1582 = vld [vmem:[#allocation37 + $0x4] sm:$0xf]
        %v1583 = vld [vmem:[#allocation37 + $0x8] sm:$0xf]
        %v1584 = vld [vmem:[#allocation37 + $0xc] sm:$0xf]
        %v1585 = vld [vmem:[#allocation37 + $0x10] sm:$0xf]
        %v1586 = vld [vmem:[#allocation37 + $0x14] sm:$0xf]
        %v1587 = vld [vmem:[#allocation37 + $0x18] sm:$0xf]
        %v1588 = vld [vmem:[#allocation37 + $0x1c] sm:$0xf]
        %v1589 = vld [vmem:[#allocation37 + $0x20] sm:$0xf]
        %v1590 = vld [vmem:[#allocation37 + $0x24] sm:$0xf]
        %v1591 = vld [vmem:[#allocation37 + $0x28] sm:$0xf]
        %v1592 = vld [vmem:[#allocation37 + $0x2c] sm:$0xf]
        %v1593 = vld [vmem:[#allocation37 + $0x30] sm:$0xf]
        %v1594 = vld [vmem:[#allocation37 + $0x34] sm:$0xf]
        %v1595 = vld [vmem:[#allocation37 + $0x38] sm:$0xf]
        %v1596 = vld [vmem:[#allocation37 + $0x3c] sm:$0xf]
        %v1597 = vld [vmem:[#allocation37 + $0x40] sm:$0xf]
        %v1598 = vld [vmem:[#allocation37 + $0x44] sm:$0xf]
        %v1599 = vld [vmem:[#allocation37 + $0x48] sm:$0xf]
        %v1600 = vld [vmem:[#allocation37 + $0x4c] sm:$0xf]
        %v1601 = vld [vmem:[#allocation37 + $0x50] sm:$0xf]
        %v1602 = vld [vmem:[#allocation37 + $0x54] sm:$0xf]
        %v1603 = vld [vmem:[#allocation37 + $0x58] sm:$0xf]
        %v1604 = vld [vmem:[#allocation37 + $0x5c] sm:$0xf]
        %v1605 = vld [vmem:[#allocation37 + $0x60] sm:$0xf]
        %v1606 = vld [vmem:[#allocation37 + $0x64] sm:$0xf]
        %v1607 = vld [vmem:[#allocation37 + $0x68] sm:$0xf]
        %v1608 = vld [vmem:[#allocation37 + $0x6c] sm:$0xf]
        %v1609 = vld [vmem:[#allocation37 + $0x70] sm:$0xf]
        %v1610 = vld [vmem:[#allocation37 + $0x74] sm:$0xf]
        %v1611 = vld [vmem:[#allocation37 + $0x78] sm:$0xf]
        %v1612 = vld [vmem:[#allocation37 + $0x7c] sm:$0xf]
        %v1613 = vld [vmem:[#allocation38] sm:$0x1]
        %v1614 = vld [vmem:[#allocation40] sm:$0x1]
        %v1615 = vld [vmem:[#allocation41] sm:$0x1]
        %v1616 = vld [vmem:[#allocation43] sm:$0x1]
        %v1617 = vld [vmem:[#allocation44] sm:$0x1]
        %v1618 = vld [vmem:[#allocation46] sm:$0x1]
        %v1619 = vld [vmem:[#allocation47] sm:$0x1]
        %v1620 = vld [vmem:[%s1204] sm:$0xff]
        %v1621 = vld [vmem:[%s1213] sm:$0xff]
        %v1622 = vld [vmem:[%s1213 + $0x8] sm:$0xff]
        %v1623 = vld [vmem:[%s1222] sm:$0xff]
        %v1624 = vld [vmem:[%s1222 + $0x8] sm:$0xff]
        %v1625 = vld [vmem:[%s1231] sm:$0xff]
        %vm1626 = vcmp.ne.f32.partialorder %v1625, 0.0
        %v1627 = vpack.c.bf16 %v1620, %v1620
        %v1628 = vpack.c.bf16 %v1622, %v1621
        %v1630 = vlaneseq
        %v1631 = vshrl.u32 %v1630, 7
        %v1632 = vsub.s32 0, %v1631
        %v1633 = vrot.slane %v1444, %v1632
        %v1651 = vunpack.c.l.b16 %v1428
        %v1652 = vunpack.c.l.b16 %v1429
        %v1653 = vunpack.c.l.b16 %v1430
        %v1654 = vunpack.c.l.b16 %v1431
        %v1655 = vunpack.c.l.b16 %v1432
        %v1656 = vunpack.c.l.b16 %v1433
        %v1657 = vunpack.c.l.b16 %v1434
        %v1658 = vunpack.c.l.b16 %v1435
        %v1659 = vunpack.c.l.b16 %v1436
        %v1660 = vunpack.c.l.b16 %v1437
        %v1661 = vunpack.c.l.b16 %v1438
        %v1662 = vunpack.c.l.b16 %v1439
        %v1663 = vunpack.c.l.b16 %v1440
        %v1664 = vunpack.c.l.b16 %v1441
        %v1665 = vunpack.c.l.b16 %v1442
        %v1666 = vunpack.c.l.b16 %v1443
        %v1667 = vpack.c.b16 %v1652, %v1651
        %v1668 = vpack.c.b16 %v1654, %v1653
        %v1669 = vpack.c.b16 %v1656, %v1655
        %v1670 = vpack.c.b16 %v1658, %v1657
        %v1671 = vpack.c.b16 %v1660, %v1659
        %v1672 = vpack.c.b16 %v1662, %v1661
        %v1673 = vpack.c.b16 %v1664, %v1663
        %v1674 = vpack.c.b16 %v1666, %v1665
        %1683 = vmatprep.subr.bf16.mxu0 0
        %1684 = vmatpush1.bf16.msra.mxu0 %v1667
        %1685 = vmatprep.subr.bf16.mxu0 0
        %1686 = vmatpush1.bf16.msra.mxu0 %v1668
        %1687 = vmatprep.subr.bf16.mxu0 0
        %1688 = vmatpush1.bf16.msra.mxu0 %v1669
        %1689 = vmatprep.subr.bf16.mxu0 0
        %1690 = vmatpush1.bf16.msra.mxu0 %v1670
        %1691 = vmatprep.subr.bf16.mxu0 0
        %1692 = vmatpush1.bf16.msra.mxu0 %v1671
        %1693 = vmatprep.subr.bf16.mxu0 0
        %1694 = vmatpush1.bf16.msra.mxu0 %v1672
        %1695 = vmatprep.subr.bf16.mxu0 0
        %1696 = vmatpush1.bf16.msra.mxu0 %v1673
        %1697 = vmatprep.subr.bf16.mxu0 0
        %1698 = vmatpush1.bf16.msra.mxu0 %v1674
        %1699 = vmatprep.subr.bf16.mxu0 0
        %1700 = vmatpush1.bf16.msra.mxu0 0
        %1701 = vmatprep.subr.bf16.mxu0 0
        %1702 = vmatpush1.bf16.msra.mxu0 0
        %1703 = vmatprep.subr.bf16.mxu0 0
        %1704 = vmatpush1.bf16.msra.mxu0 0
        %1705 = vmatprep.subr.bf16.mxu0 0
        %1706 = vmatpush1.bf16.msra.mxu0 0
        %1707 = vmatprep.subr.bf16.mxu0 0
        %1708 = vmatpush1.bf16.msra.mxu0 0
        %1709 = vmatprep.subr.bf16.mxu0 0
        %1710 = vmatpush1.bf16.msra.mxu0 0
        %1711 = vmatprep.subr.bf16.mxu0 0
        %1712 = vmatpush1.bf16.msra.mxu0 0
        %1713 = vmatprep.subr.bf16.mxu0 0
        %1714 = vmatpush1.bf16.msra.mxu0 0
        %1715 = vmatprep.mubr.bf16.mxu0 0
        %1716 = vmatmul.mubr.bf16.gmra.mrb[0].mxu0 %v1627
        %v1717 = vpop.f32.mrb[0].mxu0
        %v1718 = vadd.f32 %v1633, %v1717
        %v1719 = vpop.f32.mrb[0].mxu0
        %v1720 = vpop.f32.mrb[0].mxu0
        %v1721 = vpop.f32.mrb[0].mxu0
        %1722 = vdwg.mxu0
        %v1723 = vpack.c.bf16 %v1718, %v1718
        %v1725 = vlaneseq
        %v1726 = vshrl.u32 %v1725, 7
        %v1727 = vsub.s32 0, %v1726
        %v1728 = vrot.slane %v1461, %v1727
        %v1746 = vunpack.c.l.b16 %v1445
        %v1747 = vunpack.c.l.b16 %v1446
        %v1748 = vunpack.c.l.b16 %v1447
        %v1749 = vunpack.c.l.b16 %v1448
        %v1750 = vunpack.c.l.b16 %v1449
        %v1751 = vunpack.c.l.b16 %v1450
        %v1752 = vunpack.c.l.b16 %v1451
        %v1753 = vunpack.c.l.b16 %v1452
        %v1754 = vunpack.c.l.b16 %v1453
        %v1755 = vunpack.c.l.b16 %v1454
        %v1756 = vunpack.c.l.b16 %v1455
        %v1757 = vunpack.c.l.b16 %v1456
        %v1758 = vunpack.c.l.b16 %v1457
        %v1759 = vunpack.c.l.b16 %v1458
        %v1760 = vunpack.c.l.b16 %v1459
        %v1761 = vunpack.c.l.b16 %v1460
        %v1762 = vpack.c.b16 %v1747, %v1746
        %v1763 = vpack.c.b16 %v1749, %v1748
        %v1764 = vpack.c.b16 %v1751, %v1750
        %v1765 = vpack.c.b16 %v1753, %v1752
        %v1766 = vpack.c.b16 %v1755, %v1754
        %v1767 = vpack.c.b16 %v1757, %v1756
        %v1768 = vpack.c.b16 %v1759, %v1758
        %v1769 = vpack.c.b16 %v1761, %v1760
        %1778 = vmatprep.subr.bf16.mxu0 0
        %1779 = vmatpush1.bf16.msra.mxu0 %v1762
        %1780 = vmatprep.subr.bf16.mxu0 0
        %1781 = vmatpush1.bf16.msra.mxu0 %v1763
        %1782 = vmatprep.subr.bf16.mxu0 0
        %1783 = vmatpush1.bf16.msra.mxu0 %v1764
        %1784 = vmatprep.subr.bf16.mxu0 0
        %1785 = vmatpush1.bf16.msra.mxu0 %v1765
        %1786 = vmatprep.subr.bf16.mxu0 0
        %1787 = vmatpush1.bf16.msra.mxu0 %v1766
        %1788 = vmatprep.subr.bf16.mxu0 0
        %1789 = vmatpush1.bf16.msra.mxu0 %v1767
        %1790 = vmatprep.subr.bf16.mxu0 0
        %1791 = vmatpush1.bf16.msra.mxu0 %v1768
        %1792 = vmatprep.subr.bf16.mxu0 0
        %1793 = vmatpush1.bf16.msra.mxu0 %v1769
        %1794 = vmatprep.subr.bf16.mxu0 0
        %1795 = vmatpush1.bf16.msra.mxu0 0
        %1796 = vmatprep.subr.bf16.mxu0 0
        %1797 = vmatpush1.bf16.msra.mxu0 0
        %1798 = vmatprep.subr.bf16.mxu0 0
        %1799 = vmatpush1.bf16.msra.mxu0 0
        %1800 = vmatprep.subr.bf16.mxu0 0
        %1801 = vmatpush1.bf16.msra.mxu0 0
        %1802 = vmatprep.subr.bf16.mxu0 0
        %1803 = vmatpush1.bf16.msra.mxu0 0
        %1804 = vmatprep.subr.bf16.mxu0 0
        %1805 = vmatpush1.bf16.msra.mxu0 0
        %1806 = vmatprep.subr.bf16.mxu0 0
        %1807 = vmatpush1.bf16.msra.mxu0 0
        %1808 = vmatprep.subr.bf16.mxu0 0
        %1809 = vmatpush1.bf16.msra.mxu0 0
        %1810 = vmatprep.mubr.bf16.mxu0 0
        %1811 = vmatmul.mubr.bf16.gmra.mrb[0].mxu0 %v1628
        %v1812 = vpop.f32.mrb[0].mxu0
        %v1813 = vadd.f32 %v1728, %v1812
        %v1814 = vpop.f32.mrb[0].mxu0
        %v1815 = vpop.f32.mrb[0].mxu0
        %v1816 = vadd.f32 %v1728, %v1815
        %v1817 = vpop.f32.mrb[0].mxu0
        %1818 = vdwg.mxu0
        %v1819 = vpack.c.bf16 %v1816, %v1813
        %v1821 = vlaneseq
        %v1822 = vshrl.u32 %v1821, 7
        %v1823 = vsub.s32 0, %v1822
        %v1824 = vrot.slane %v1478, %v1823
        %v1842 = vunpack.c.l.b16 %v1462
        %v1843 = vunpack.c.l.b16 %v1463
        %v1844 = vunpack.c.l.b16 %v1464
        %v1845 = vunpack.c.l.b16 %v1465
        %v1846 = vunpack.c.l.b16 %v1466
        %v1847 = vunpack.c.l.b16 %v1467
        %v1848 = vunpack.c.l.b16 %v1468
        %v1849 = vunpack.c.l.b16 %v1469
        %v1850 = vunpack.c.l.b16 %v1470
        %v1851 = vunpack.c.l.b16 %v1471
        %v1852 = vunpack.c.l.b16 %v1472
        %v1853 = vunpack.c.l.b16 %v1473
        %v1854 = vunpack.c.l.b16 %v1474
        %v1855 = vunpack.c.l.b16 %v1475
        %v1856 = vunpack.c.l.b16 %v1476
        %v1857 = vunpack.c.l.b16 %v1477
        %v1858 = vpack.c.b16 %v1843, %v1842
        %v1859 = vpack.c.b16 %v1845, %v1844
        %v1860 = vpack.c.b16 %v1847, %v1846
        %v1861 = vpack.c.b16 %v1849, %v1848
        %v1862 = vpack.c.b16 %v1851, %v1850
        %v1863 = vpack.c.b16 %v1853, %v1852
        %v1864 = vpack.c.b16 %v1855, %v1854
        %v1865 = vpack.c.b16 %v1857, %v1856
        %1874 = vmatprep.subr.bf16.mxu0 0
        %1875 = vmatpush1.bf16.msra.mxu0 %v1858
        %1876 = vmatprep.subr.bf16.mxu0 0
        %1877 = vmatpush1.bf16.msra.mxu0 %v1859
        %1878 = vmatprep.subr.bf16.mxu0 0
        %1879 = vmatpush1.bf16.msra.mxu0 %v1860
        %1880 = vmatprep.subr.bf16.mxu0 0
        %1881 = vmatpush1.bf16.msra.mxu0 %v1861
        %1882 = vmatprep.subr.bf16.mxu0 0
        %1883 = vmatpush1.bf16.msra.mxu0 %v1862
        %1884 = vmatprep.subr.bf16.mxu0 0
        %1885 = vmatpush1.bf16.msra.mxu0 %v1863
        %1886 = vmatprep.subr.bf16.mxu0 0
        %1887 = vmatpush1.bf16.msra.mxu0 %v1864
        %1888 = vmatprep.subr.bf16.mxu0 0
        %1889 = vmatpush1.bf16.msra.mxu0 %v1865
        %1890 = vmatprep.subr.bf16.mxu0 0
        %1891 = vmatpush1.bf16.msra.mxu0 0
        %1892 = vmatprep.subr.bf16.mxu0 0
        %1893 = vmatpush1.bf16.msra.mxu0 0
        %1894 = vmatprep.subr.bf16.mxu0 0
        %1895 = vmatpush1.bf16.msra.mxu0 0
        %1896 = vmatprep.subr.bf16.mxu0 0
        %1897 = vmatpush1.bf16.msra.mxu0 0
        %1898 = vmatprep.subr.bf16.mxu0 0
        %1899 = vmatpush1.bf16.msra.mxu0 0
        %1900 = vmatprep.subr.bf16.mxu0 0
        %1901 = vmatpush1.bf16.msra.mxu0 0
        %1902 = vmatprep.subr.bf16.mxu0 0
        %1903 = vmatpush1.bf16.msra.mxu0 0
        %1904 = vmatprep.subr.bf16.mxu0 0
        %1905 = vmatpush1.bf16.msra.mxu0 0
        %1906 = vmatprep.mubr.bf16.mxu0 0
        %1907 = vmatmul.mubr.bf16.gmra.mrb[0].mxu0 %v1628
        %v1908 = vpop.f32.mrb[0].mxu0
        %v1909 = vadd.f32 %v1824, %v1908
        %v1910 = vpop.f32.mrb[0].mxu0
        %v1911 = vpop.f32.mrb[0].mxu0
        %v1912 = vadd.f32 %v1824, %v1911
        %v1913 = vpop.f32.mrb[0].mxu0
        %1914 = vdwg.mxu0
        %v1915 = vpack.c.bf16 %v1912, %v1909
        %vm1916 = vcmask 261120
        %v1918 = vsel %vm1916, %v1723, 0
        %v1921 = vsel %vm1916, %v1819, 0
        %1923 = vmatprep.subr.bf16.mxu0 0
        %1924 = vmatpush1.bf16.xpose.msra.mxu0 %v1921
        %1925 = vmatprep.subr.bf16.mxu0 0
        %1926 = vmatpush1.bf16.xpose.msra.mxu0 0
        %1927 = vmatprep.subr.bf16.mxu0 0
        %1928 = vmatpush1.bf16.xpose.msra.mxu0 0
        %1929 = vmatprep.subr.bf16.mxu0 0
        %1930 = vmatpush1.bf16.xpose.msra.mxu0 0
        %1931 = vmatprep.subr.bf16.mxu0 0
        %1932 = vmatpush1.bf16.xpose.msra.mxu0 0
        %1933 = vmatprep.subr.bf16.mxu0 0
        %1934 = vmatpush1.bf16.xpose.msra.mxu0 0
        %1935 = vmatprep.subr.bf16.mxu0 0
        %1936 = vmatpush1.bf16.xpose.msra.mxu0 0
        %1937 = vmatprep.subr.bf16.mxu0 0
        %1938 = vmatpush1.bf16.xpose.msra.mxu0 0
        %1939 = vmatprep.subr.bf16.mxu0 0
        %1940 = vmatpush1.bf16.xpose.msra.mxu0 0
        %1941 = vmatprep.subr.bf16.mxu0 0
        %1942 = vmatpush1.bf16.xpose.msra.mxu0 0
        %1943 = vmatprep.subr.bf16.mxu0 0
        %1944 = vmatpush1.bf16.xpose.msra.mxu0 0
        %1945 = vmatprep.subr.bf16.mxu0 0
        %1946 = vmatpush1.bf16.xpose.msra.mxu0 0
        %1947 = vmatprep.subr.bf16.mxu0 0
        %1948 = vmatpush1.bf16.xpose.msra.mxu0 0
        %1949 = vmatprep.subr.bf16.mxu0 0
        %1950 = vmatpush1.bf16.xpose.msra.mxu0 0
        %1951 = vmatprep.subr.bf16.mxu0 0
        %1952 = vmatpush1.bf16.xpose.msra.mxu0 0
        %1953 = vmatprep.subr.bf16.mxu0 0
        %1954 = vmatpush1.bf16.xpose.msra.mxu0 0
        %1955 = vmatprep.mubr.bf16.mxu0 0
        %1956 = vmatmul.mubr.bf16.gmra.mrb[0].mxu0 %v1918
        %v1957 = vpop.f32.mrb[0].mxu0
        %v1958 = vadd.f32 0.0, %v1957
        %v1959 = vpop.f32.mrb[0].mxu0
        %v1960 = vpop.f32.mrb[0].mxu0
        %v1961 = vpop.f32.mrb[0].mxu0
        %1962 = vdwg.mxu0
        %v1963 = vmul.f32 %v1958, 0.17677669
        %v1964 = vsel %vm1626, %v1963, -1e+09
        %vm1965 = vcmask 130048
        %v1966 = vsel %vm1965, %v1964, -inf
        %1967 = vmax.xlane.f32.xlu0 %v1966
        %v1968 = vpop.xlane.xlu0 %1967
        %v1969 = vsub.f32 %v1964, %v1968
        %v1970 = vmul.f32 %v1969, 1.442695
        %v1971 = vpow.pop %v1970
        %v1972 = vsel %vm1965, %v1971, 0.0
        %1973 = vadd.xlane.f32.xlu0 %v1972
        %v1974 = vpop.xlane.xlu0 %1973
        %v1975 = vrcp.pop %v1974
        %v1976 = vmul.f32 %v1971, %v1975
        %v1977 = vpack.c.bf16 %v1976, %v1976
        %v1979 = vsel %vm1965, %v1977, 0
        %1981 = vmatprep.subr.bf16.mxu0 0
        %1982 = vmatpush1.bf16.msra.mxu0 %v1915
        %1983 = vmatprep.subr.bf16.mxu0 0
        %1984 = vmatpush1.bf16.msra.mxu0 0
        %1985 = vmatprep.subr.bf16.mxu0 0
        %1986 = vmatpush1.bf16.msra.mxu0 0
        %1987 = vmatprep.subr.bf16.mxu0 0
        %1988 = vmatpush1.bf16.msra.mxu0 0
        %1989 = vmatprep.subr.bf16.mxu0 0
        %1990 = vmatpush1.bf16.msra.mxu0 0
        %1991 = vmatprep.subr.bf16.mxu0 0
        %1992 = vmatpush1.bf16.msra.mxu0 0
        %1993 = vmatprep.subr.bf16.mxu0 0
        %1994 = vmatpush1.bf16.msra.mxu0 0
        %1995 = vmatprep.subr.bf16.mxu0 0
        %1996 = vmatpush1.bf16.msra.mxu0 0
        %1997 = vmatprep.subr.bf16.mxu0 0
        %1998 = vmatpush1.bf16.msra.mxu0 0
        %1999 = vmatprep.subr.bf16.mxu0 0
        %2000 = vmatpush1.bf16.msra.mxu0 0
        %2001 = vmatprep.subr.bf16.mxu0 0
        %2002 = vmatpush1.bf16.msra.mxu0 0
        %2003 = vmatprep.subr.bf16.mxu0 0
        %2004 = vmatpush1.bf16.msra.mxu0 0
        %2005 = vmatprep.subr.bf16.mxu0 0
        %2006 = vmatpush1.bf16.msra.mxu0 0
        %2007 = vmatprep.subr.bf16.mxu0 0
        %2008 = vmatpush1.bf16.msra.mxu0 0
        %2009 = vmatprep.subr.bf16.mxu0 0
        %2010 = vmatpush1.bf16.msra.mxu0 0
        %2011 = vmatprep.subr.bf16.mxu0 0
        %2012 = vmatpush1.bf16.msra.mxu0 0
        %2013 = vmatprep.mubr.bf16.mxu0 0
        %2014 = vmatmul.mubr.bf16.gmra.mrb[0].mxu0 %v1979
        %v2015 = vpop.f32.mrb[0].mxu0
        %v2016 = vadd.f32 0.0, %v2015
        %v2017 = vpop.f32.mrb[0].mxu0
        %v2018 = vpop.f32.mrb[0].mxu0
        %v2019 = vpop.f32.mrb[0].mxu0
        %2020 = vdwg.mxu0
        %v2021 = vpack.c.bf16 %v2016, %v2016
        %2023 = vrot.lane.b32.xlu0 %v1723, 96
        %v2024 = vpop.permute.xlu0 %2023
        %2026 = vrot.lane.b32.xlu0 %v1819, 96
        %v2027 = vpop.permute.xlu0 %2026
        %v2029 = vsel %vm1916, %v2024, 0
        %v2032 = vsel %vm1916, %v2027, 0
        %2034 = vmatprep.subr.bf16.mxu0 0
        %2035 = vmatpush1.bf16.xpose.msra.mxu0 %v2032
        %2036 = vmatprep.subr.bf16.mxu0 0
        %2037 = vmatpush1.bf16.xpose.msra.mxu0 0
        %2038 = vmatprep.subr.bf16.mxu0 0
        %2039 = vmatpush1.bf16.xpose.msra.mxu0 0
        %2040 = vmatprep.subr.bf16.mxu0 0
        %2041 = vmatpush1.bf16.xpose.msra.mxu0 0
        %2042 = vmatprep.subr.bf16.mxu0 0
        %2043 = vmatpush1.bf16.xpose.msra.mxu0 0
        %2044 = vmatprep.subr.bf16.mxu0 0
        %2045 = vmatpush1.bf16.xpose.msra.mxu0 0
        %2046 = vmatprep.subr.bf16.mxu0 0
        %2047 = vmatpush1.bf16.xpose.msra.mxu0 0
        %2048 = vmatprep.subr.bf16.mxu0 0
        %2049 = vmatpush1.bf16.xpose.msra.mxu0 0
        %2050 = vmatprep.subr.bf16.mxu0 0
        %2051 = vmatpush1.bf16.xpose.msra.mxu0 0
        %2052 = vmatprep.subr.bf16.mxu0 0
        %2053 = vmatpush1.bf16.xpose.msra.mxu0 0
        %2054 = vmatprep.subr.bf16.mxu0 0
        %2055 = vmatpush1.bf16.xpose.msra.mxu0 0
        %2056 = vmatprep.subr.bf16.mxu0 0
        %2057 = vmatpush1.bf16.xpose.msra.mxu0 0
        %2058 = vmatprep.subr.bf16.mxu0 0
        %2059 = vmatpush1.bf16.xpose.msra.mxu0 0
        %2060 = vmatprep.subr.bf16.mxu0 0
        %2061 = vmatpush1.bf16.xpose.msra.mxu0 0
        %2062 = vmatprep.subr.bf16.mxu0 0
        %2063 = vmatpush1.bf16.xpose.msra.mxu0 0
        %2064 = vmatprep.subr.bf16.mxu0 0
        %2065 = vmatpush1.bf16.xpose.msra.mxu0 0
        %2066 = vmatprep.mubr.bf16.mxu0 0
        %2067 = vmatmul.mubr.bf16.gmra.mrb[0].mxu0 %v2029
        %v2068 = vpop.f32.mrb[0].mxu0
        %v2069 = vadd.f32 0.0, %v2068
        %v2070 = vpop.f32.mrb[0].mxu0
        %v2071 = vpop.f32.mrb[0].mxu0
        %v2072 = vpop.f32.mrb[0].mxu0
        %2073 = vdwg.mxu0
        %v2074 = vmul.f32 %v2069, 0.17677669
        %v2075 = vsel %vm1626, %v2074, -1e+09
        %v2076 = vsel %vm1965, %v2075, -inf
        %2077 = vmax.xlane.f32.xlu0 %v2076
        %v2078 = vpop.xlane.xlu0 %2077
        %v2079 = vsub.f32 %v2075, %v2078
        %v2080 = vmul.f32 %v2079, 1.442695
        %v2081 = vpow.pop %v2080
        %v2082 = vsel %vm1965, %v2081, 0.0
        %2083 = vadd.xlane.f32.xlu0 %v2082
        %v2084 = vpop.xlane.xlu0 %2083
        %v2085 = vrcp.pop %v2084
        %v2086 = vmul.f32 %v2081, %v2085
        %v2087 = vpack.c.bf16 %v2086, %v2086
        %2089 = vrot.lane.b32.xlu0 %v1915, 96
        %v2090 = vpop.permute.xlu0 %2089
        %v2093 = vsel %vm1965, %v2087, 0
        %2095 = vmatprep.subr.bf16.mxu0 0
        %2096 = vmatpush1.bf16.msra.mxu0 %v2090
        %2097 = vmatprep.subr.bf16.mxu0 0
        %2098 = vmatpush1.bf16.msra.mxu0 0
        %2099 = vmatprep.subr.bf16.mxu0 0
        %2100 = vmatpush1.bf16.msra.mxu0 0
        %2101 = vmatprep.subr.bf16.mxu0 0
        %2102 = vmatpush1.bf16.msra.mxu0 0
        %2103 = vmatprep.subr.bf16.mxu0 0
        %2104 = vmatpush1.bf16.msra.mxu0 0
        %2105 = vmatprep.subr.bf16.mxu0 0
        %2106 = vmatpush1.bf16.msra.mxu0 0
        %2107 = vmatprep.subr.bf16.mxu0 0
        %2108 = vmatpush1.bf16.msra.mxu0 0
        %2109 = vmatprep.subr.bf16.mxu0 0
        %2110 = vmatpush1.bf16.msra.mxu0 0
        %2111 = vmatprep.subr.bf16.mxu0 0
        %2112 = vmatpush1.bf16.msra.mxu0 0
        %2113 = vmatprep.subr.bf16.mxu0 0
        %2114 = vmatpush1.bf16.msra.mxu0 0
        %2115 = vmatprep.subr.bf16.mxu0 0
        %2116 = vmatpush1.bf16.msra.mxu0 0
        %2117 = vmatprep.subr.bf16.mxu0 0
        %2118 = vmatpush1.bf16.msra.mxu0 0
        %2119 = vmatprep.subr.bf16.mxu0 0
        %2120 = vmatpush1.bf16.msra.mxu0 0
        %2121 = vmatprep.subr.bf16.mxu0 0
        %2122 = vmatpush1.bf16.msra.mxu0 0
        %2123 = vmatprep.subr.bf16.mxu0 0
        %2124 = vmatpush1.bf16.msra.mxu0 0
        %2125 = vmatprep.subr.bf16.mxu0 0
        %2126 = vmatpush1.bf16.msra.mxu0 0
        %2127 = vmatprep.mubr.bf16.mxu0 0
        %2128 = vmatmul.mubr.bf16.gmra.mrb[0].mxu0 %v2093
        %v2129 = vpop.f32.mrb[0].mxu0
        %v2130 = vadd.f32 0.0, %v2129
        %v2131 = vpop.f32.mrb[0].mxu0
        %v2132 = vpop.f32.mrb[0].mxu0
        %v2133 = vpop.f32.mrb[0].mxu0
        %2134 = vdwg.mxu0
        %v2135 = vpack.c.bf16 %v2130, %v2130
        %v2140 = vunpack.c.l.b16 %v1483
        %v2141 = vunpack.c.l.b16 %v1484
        %v2142 = vunpack.c.l.b16 %v1485
        %v2143 = vunpack.c.l.b16 %v1486
        %v2144 = vpack.c.b16 %v2141, %v2140
        %v2145 = vpack.c.b16 %v2143, %v2142
        %v2149 = vsel %vm1916, %v2135, 0
        %2151 = vmatprep.subr.bf16.mxu0 0
        %2152 = vmatpush1.bf16.msra.mxu0 %v2144
        %2153 = vmatprep.subr.bf16.mxu0 0
        %2154 = vmatpush1.bf16.msra.mxu0 %v2145
        %2155 = vmatprep.subr.bf16.mxu0 0
        %2156 = vmatpush1.bf16.msra.mxu0 0
        %2157 = vmatprep.subr.bf16.mxu0 0
        %2158 = vmatpush1.bf16.msra.mxu0 0
        %2159 = vmatprep.subr.bf16.mxu0 0
        %2160 = vmatpush1.bf16.msra.mxu0 0
        %2161 = vmatprep.subr.bf16.mxu0 0
        %2162 = vmatpush1.bf16.msra.mxu0 0
        %2163 = vmatprep.subr.bf16.mxu0 0
        %2164 = vmatpush1.bf16.msra.mxu0 0
        %2165 = vmatprep.subr.bf16.mxu0 0
        %2166 = vmatpush1.bf16.msra.mxu0 0
        %2167 = vmatprep.subr.bf16.mxu0 0
        %2168 = vmatpush1.bf16.msra.mxu0 0
        %2169 = vmatprep.subr.bf16.mxu0 0
        %2170 = vmatpush1.bf16.msra.mxu0 0
        %2171 = vmatprep.subr.bf16.mxu0 0
        %2172 = vmatpush1.bf16.msra.mxu0 0
        %2173 = vmatprep.subr.bf16.mxu0 0
        %2174 = vmatpush1.bf16.msra.mxu0 0
        %2175 = vmatprep.subr.bf16.mxu0 0
        %2176 = vmatpush1.bf16.msra.mxu0 0
        %2177 = vmatprep.subr.bf16.mxu0 0
        %2178 = vmatpush1.bf16.msra.mxu0 0
        %2179 = vmatprep.subr.bf16.mxu0 0
        %2180 = vmatpush1.bf16.msra.mxu0 0
        %2181 = vmatprep.subr.bf16.mxu0 0
        %2182 = vmatpush1.bf16.msra.mxu0 0
        %2183 = vmatprep.mubr.bf16.mxu0 0
        %2184 = vmatmul.mubr.bf16.gmra.mrb[0].mxu0 %v2149
        %v2185 = vpop.f32.mrb[0].mxu0
        %v2186 = vadd.f32 0.0, %v2185
        %v2187 = vpop.f32.mrb[0].mxu0
        %v2188 = vpop.f32.mrb[0].mxu0
        %v2189 = vpop.f32.mrb[0].mxu0
        %2190 = vdwg.mxu0
        %v2195 = vunpack.c.l.b16 %v1479
        %v2196 = vunpack.c.l.b16 %v1480
        %v2197 = vunpack.c.l.b16 %v1481
        %v2198 = vunpack.c.l.b16 %v1482
        %v2199 = vpack.c.b16 %v2196, %v2195
        %v2200 = vpack.c.b16 %v2198, %v2197
        %v2204 = vsel %vm1916, %v2021, 0
        %2206 = vmatprep.subr.bf16.mxu0 0
        %2207 = vmatpush1.bf16.msra.mxu0 %v2199
        %2208 = vmatprep.subr.bf16.mxu0 0
        %2209 = vmatpush1.bf16.msra.mxu0 %v2200
        %2210 = vmatprep.subr.bf16.mxu0 0
        %2211 = vmatpush1.bf16.msra.mxu0 0
        %2212 = vmatprep.subr.bf16.mxu0 0
        %2213 = vmatpush1.bf16.msra.mxu0 0
        %2214 = vmatprep.subr.bf16.mxu0 0
        %2215 = vmatpush1.bf16.msra.mxu0 0
        %2216 = vmatprep.subr.bf16.mxu0 0
        %2217 = vmatpush1.bf16.msra.mxu0 0
        %2218 = vmatprep.subr.bf16.mxu0 0
        %2219 = vmatpush1.bf16.msra.mxu0 0
        %2220 = vmatprep.subr.bf16.mxu0 0
        %2221 = vmatpush1.bf16.msra.mxu0 0
        %2222 = vmatprep.subr.bf16.mxu0 0
        %2223 = vmatpush1.bf16.msra.mxu0 0
        %2224 = vmatprep.subr.bf16.mxu0 0
        %2225 = vmatpush1.bf16.msra.mxu0 0
        %2226 = vmatprep.subr.bf16.mxu0 0
        %2227 = vmatpush1.bf16.msra.mxu0 0
        %2228 = vmatprep.subr.bf16.mxu0 0
        %2229 = vmatpush1.bf16.msra.mxu0 0
        %2230 = vmatprep.subr.bf16.mxu0 0
        %2231 = vmatpush1.bf16.msra.mxu0 0
        %2232 = vmatprep.subr.bf16.mxu0 0
        %2233 = vmatpush1.bf16.msra.mxu0 0
        %2234 = vmatprep.subr.bf16.mxu0 0
        %2235 = vmatpush1.bf16.msra.mxu0 0
        %2236 = vmatprep.subr.bf16.mxu0 0
        %2237 = vmatpush1.bf16.msra.mxu0 0
        %2238 = vmatprep.mubr.bf16.mxu0 0
        %2239 = vmatmul.mubr.bf16.gmra.mrb[0].mxu0 %v2204
        %v2240 = vpop.f32.mrb[0].mxu0
        %v2241 = vadd.f32 %v2186, %v2240
        %v2242 = vpop.f32.mrb[0].mxu0
        %v2243 = vpop.f32.mrb[0].mxu0
        %v2244 = vpop.f32.mrb[0].mxu0
        %2245 = vdwg.mxu0
        %2246 = vrot.lane.b32.xlu0 %v1723, 64
        %v2247 = vpop.permute.xlu0 %2246
        %2248 = vrot.lane.b32.xlu0 %v1819, 64
        %v2249 = vpop.permute.xlu0 %2248
        %v2251 = vsel %vm1916, %v2247, 0
        %v2254 = vsel %vm1916, %v2249, 0
        %2256 = vmatprep.subr.bf16.mxu0 0
        %2257 = vmatpush1.bf16.xpose.msra.mxu0 %v2254
        %2258 = vmatprep.subr.bf16.mxu0 0
        %2259 = vmatpush1.bf16.xpose.msra.mxu0 0
        %2260 = vmatprep.subr.bf16.mxu0 0
        %2261 = vmatpush1.bf16.xpose.msra.mxu0 0
        %2262 = vmatprep.subr.bf16.mxu0 0
        %2263 = vmatpush1.bf16.xpose.msra.mxu0 0
        %2264 = vmatprep.subr.bf16.mxu0 0
        %2265 = vmatpush1.bf16.xpose.msra.mxu0 0
        %2266 = vmatprep.subr.bf16.mxu0 0
        %2267 = vmatpush1.bf16.xpose.msra.mxu0 0
        %2268 = vmatprep.subr.bf16.mxu0 0
        %2269 = vmatpush1.bf16.xpose.msra.mxu0 0
        %2270 = vmatprep.subr.bf16.mxu0 0
        %2271 = vmatpush1.bf16.xpose.msra.mxu0 0
        %2272 = vmatprep.subr.bf16.mxu0 0
        %2273 = vmatpush1.bf16.xpose.msra.mxu0 0
        %2274 = vmatprep.subr.bf16.mxu0 0
        %2275 = vmatpush1.bf16.xpose.msra.mxu0 0
        %2276 = vmatprep.subr.bf16.mxu0 0
        %2277 = vmatpush1.bf16.xpose.msra.mxu0 0
        %2278 = vmatprep.subr.bf16.mxu0 0
        %2279 = vmatpush1.bf16.xpose.msra.mxu0 0
        %2280 = vmatprep.subr.bf16.mxu0 0
        %2281 = vmatpush1.bf16.xpose.msra.mxu0 0
        %2282 = vmatprep.subr.bf16.mxu0 0
        %2283 = vmatpush1.bf16.xpose.msra.mxu0 0
        %2284 = vmatprep.subr.bf16.mxu0 0
        %2285 = vmatpush1.bf16.xpose.msra.mxu0 0
        %2286 = vmatprep.subr.bf16.mxu0 0
        %2287 = vmatpush1.bf16.xpose.msra.mxu0 0
        %2288 = vmatprep.mubr.bf16.mxu0 0
        %2289 = vmatmul.mubr.bf16.gmra.mrb[0].mxu0 %v2251
        %v2290 = vpop.f32.mrb[0].mxu0
        %v2291 = vadd.f32 0.0, %v2290
        %v2292 = vpop.f32.mrb[0].mxu0
        %v2293 = vpop.f32.mrb[0].mxu0
        %v2294 = vpop.f32.mrb[0].mxu0
        %2295 = vdwg.mxu0
        %v2296 = vmul.f32 %v2291, 0.17677669
        %v2297 = vsel %vm1626, %v2296, -1e+09
        %v2298 = vsel %vm1965, %v2297, -inf
        %2299 = vmax.xlane.f32.xlu0 %v2298
        %v2300 = vpop.xlane.xlu0 %2299
        %v2301 = vsub.f32 %v2297, %v2300
        %v2302 = vmul.f32 %v2301, 1.442695
        %v2303 = vpow.pop %v2302
        %v2304 = vsel %vm1965, %v2303, 0.0
        %2305 = vadd.xlane.f32.xlu0 %v2304
        %v2306 = vpop.xlane.xlu0 %2305
        %v2307 = vrcp.pop %v2306
        %v2308 = vmul.f32 %v2303, %v2307
        %v2309 = vpack.c.bf16 %v2308, %v2308
        %2310 = vrot.lane.b32.xlu0 %v1915, 64
        %v2311 = vpop.permute.xlu0 %2310
        %v2314 = vsel %vm1965, %v2309, 0
        %2316 = vmatprep.subr.bf16.mxu0 0
        %2317 = vmatpush1.bf16.msra.mxu0 %v2311
        %2318 = vmatprep.subr.bf16.mxu0 0
        %2319 = vmatpush1.bf16.msra.mxu0 0
        %2320 = vmatprep.subr.bf16.mxu0 0
        %2321 = vmatpush1.bf16.msra.mxu0 0
        %2322 = vmatprep.subr.bf16.mxu0 0
        %2323 = vmatpush1.bf16.msra.mxu0 0
        %2324 = vmatprep.subr.bf16.mxu0 0
        %2325 = vmatpush1.bf16.msra.mxu0 0
        %2326 = vmatprep.subr.bf16.mxu0 0
        %2327 = vmatpush1.bf16.msra.mxu0 0
        %2328 = vmatprep.subr.bf16.mxu0 0
        %2329 = vmatpush1.bf16.msra.mxu0 0
        %2330 = vmatprep.subr.bf16.mxu0 0
        %2331 = vmatpush1.bf16.msra.mxu0 0
        %2332 = vmatprep.subr.bf16.mxu0 0
        %2333 = vmatpush1.bf16.msra.mxu0 0
        %2334 = vmatprep.subr.bf16.mxu0 0
        %2335 = vmatpush1.bf16.msra.mxu0 0
        %2336 = vmatprep.subr.bf16.mxu0 0
        %2337 = vmatpush1.bf16.msra.mxu0 0
        %2338 = vmatprep.subr.bf16.mxu0 0
        %2339 = vmatpush1.bf16.msra.mxu0 0
        %2340 = vmatprep.subr.bf16.mxu0 0
        %2341 = vmatpush1.bf16.msra.mxu0 0
        %2342 = vmatprep.subr.bf16.mxu0 0
        %2343 = vmatpush1.bf16.msra.mxu0 0
        %2344 = vmatprep.subr.bf16.mxu0 0
        %2345 = vmatpush1.bf16.msra.mxu0 0
        %2346 = vmatprep.subr.bf16.mxu0 0
        %2347 = vmatpush1.bf16.msra.mxu0 0
        %2348 = vmatprep.mubr.bf16.mxu0 0
        %2349 = vmatmul.mubr.bf16.gmra.mrb[0].mxu0 %v2314
        %v2350 = vpop.f32.mrb[0].mxu0
        %v2351 = vadd.f32 0.0, %v2350
        %v2352 = vpop.f32.mrb[0].mxu0
        %v2353 = vpop.f32.mrb[0].mxu0
        %v2354 = vpop.f32.mrb[0].mxu0
        %2355 = vdwg.mxu0
        %v2356 = vpack.c.bf16 %v2351, %v2351
        %v2361 = vunpack.c.l.b16 %v1487
        %v2362 = vunpack.c.l.b16 %v1488
        %v2363 = vunpack.c.l.b16 %v1489
        %v2364 = vunpack.c.l.b16 %v1490
        %v2365 = vpack.c.b16 %v2362, %v2361
        %v2366 = vpack.c.b16 %v2364, %v2363
        %v2370 = vsel %vm1916, %v2356, 0
        %2372 = vmatprep.subr.bf16.mxu0 0
        %2373 = vmatpush1.bf16.msra.mxu0 %v2365
        %2374 = vmatprep.subr.bf16.mxu0 0
        %2375 = vmatpush1.bf16.msra.mxu0 %v2366
        %2376 = vmatprep.subr.bf16.mxu0 0
        %2377 = vmatpush1.bf16.msra.mxu0 0
        %2378 = vmatprep.subr.bf16.mxu0 0
        %2379 = vmatpush1.bf16.msra.mxu0 0
        %2380 = vmatprep.subr.bf16.mxu0 0
        %2381 = vmatpush1.bf16.msra.mxu0 0
        %2382 = vmatprep.subr.bf16.mxu0 0
        %2383 = vmatpush1.bf16.msra.mxu0 0
        %2384 = vmatprep.subr.bf16.mxu0 0
        %2385 = vmatpush1.bf16.msra.mxu0 0
        %2386 = vmatprep.subr.bf16.mxu0 0
        %2387 = vmatpush1.bf16.msra.mxu0 0
        %2388 = vmatprep.subr.bf16.mxu0 0
        %2389 = vmatpush1.bf16.msra.mxu0 0
        %2390 = vmatprep.subr.bf16.mxu0 0
        %2391 = vmatpush1.bf16.msra.mxu0 0
        %2392 = vmatprep.subr.bf16.mxu0 0
        %2393 = vmatpush1.bf16.msra.mxu0 0
        %2394 = vmatprep.subr.bf16.mxu0 0
        %2395 = vmatpush1.bf16.msra.mxu0 0
        %2396 = vmatprep.subr.bf16.mxu0 0
        %2397 = vmatpush1.bf16.msra.mxu0 0
        %2398 = vmatprep.subr.bf16.mxu0 0
        %2399 = vmatpush1.bf16.msra.mxu0 0
        %2400 = vmatprep.subr.bf16.mxu0 0
        %2401 = vmatpush1.bf16.msra.mxu0 0
        %2402 = vmatprep.subr.bf16.mxu0 0
        %2403 = vmatpush1.bf16.msra.mxu0 0
        %2404 = vmatprep.mubr.bf16.mxu0 0
        %2405 = vmatmul.mubr.bf16.gmra.mrb[0].mxu0 %v2370
        %v2406 = vpop.f32.mrb[0].mxu0
        %v2407 = vadd.f32 0.0, %v2406
        %v2408 = vpop.f32.mrb[0].mxu0
        %v2409 = vpop.f32.mrb[0].mxu0
        %v2410 = vpop.f32.mrb[0].mxu0
        %2411 = vdwg.mxu0
        %v2412 = vadd.f32 %v2241, %v2407
        %2413 = vrot.lane.b32.xlu0 %v1723, 32
        %v2414 = vpop.permute.xlu0 %2413
        %2415 = vrot.lane.b32.xlu0 %v1819, 32
        %v2416 = vpop.permute.xlu0 %2415
        %v2418 = vsel %vm1916, %v2414, 0
        %v2421 = vsel %vm1916, %v2416, 0
        %2423 = vmatprep.subr.bf16.mxu0 0
        %2424 = vmatpush1.bf16.xpose.msra.mxu0 %v2421
        %2425 = vmatprep.subr.bf16.mxu0 0
        %2426 = vmatpush1.bf16.xpose.msra.mxu0 0
        %2427 = vmatprep.subr.bf16.mxu0 0
        %2428 = vmatpush1.bf16.xpose.msra.mxu0 0
        %2429 = vmatprep.subr.bf16.mxu0 0
        %2430 = vmatpush1.bf16.xpose.msra.mxu0 0
        %2431 = vmatprep.subr.bf16.mxu0 0
        %2432 = vmatpush1.bf16.xpose.msra.mxu0 0
        %2433 = vmatprep.subr.bf16.mxu0 0
        %2434 = vmatpush1.bf16.xpose.msra.mxu0 0
        %2435 = vmatprep.subr.bf16.mxu0 0
        %2436 = vmatpush1.bf16.xpose.msra.mxu0 0
        %2437 = vmatprep.subr.bf16.mxu0 0
        %2438 = vmatpush1.bf16.xpose.msra.mxu0 0
        %2439 = vmatprep.subr.bf16.mxu0 0
        %2440 = vmatpush1.bf16.xpose.msra.mxu0 0
        %2441 = vmatprep.subr.bf16.mxu0 0
        %2442 = vmatpush1.bf16.xpose.msra.mxu0 0
        %2443 = vmatprep.subr.bf16.mxu0 0
        %2444 = vmatpush1.bf16.xpose.msra.mxu0 0
        %2445 = vmatprep.subr.bf16.mxu0 0
        %2446 = vmatpush1.bf16.xpose.msra.mxu0 0
        %2447 = vmatprep.subr.bf16.mxu0 0
        %2448 = vmatpush1.bf16.xpose.msra.mxu0 0
        %2449 = vmatprep.subr.bf16.mxu0 0
        %2450 = vmatpush1.bf16.xpose.msra.mxu0 0
        %2451 = vmatprep.subr.bf16.mxu0 0
        %2452 = vmatpush1.bf16.xpose.msra.mxu0 0
        %2453 = vmatprep.subr.bf16.mxu0 0
        %2454 = vmatpush1.bf16.xpose.msra.mxu0 0
        %2455 = vmatprep.mubr.bf16.mxu0 0
        %2456 = vmatmul.mubr.bf16.gmra.mrb[0].mxu0 %v2418
        %v2457 = vpop.f32.mrb[0].mxu0
        %v2458 = vadd.f32 0.0, %v2457
        %v2459 = vpop.f32.mrb[0].mxu0
        %v2460 = vpop.f32.mrb[0].mxu0
        %v2461 = vpop.f32.mrb[0].mxu0
        %2462 = vdwg.mxu0
        %v2463 = vmul.f32 %v2458, 0.17677669
        %v2464 = vsel %vm1626, %v2463, -1e+09
        %v2465 = vsel %vm1965, %v2464, -inf
        %2466 = vmax.xlane.f32.xlu0 %v2465
        %v2467 = vpop.xlane.xlu0 %2466
        %v2468 = vsub.f32 %v2464, %v2467
        %v2469 = vmul.f32 %v2468, 1.442695
        %v2470 = vpow.pop %v2469
        %v2471 = vsel %vm1965, %v2470, 0.0
        %2472 = vadd.xlane.f32.xlu0 %v2471
        %v2473 = vpop.xlane.xlu0 %2472
        %v2474 = vrcp.pop %v2473
        %v2475 = vmul.f32 %v2470, %v2474
        %v2476 = vpack.c.bf16 %v2475, %v2475
        %2477 = vrot.lane.b32.xlu0 %v1915, 32
        %v2478 = vpop.permute.xlu0 %2477
        %v2481 = vsel %vm1965, %v2476, 0
        %2483 = vmatprep.subr.bf16.mxu0 0
        %2484 = vmatpush1.bf16.msra.mxu0 %v2478
        %2485 = vmatprep.subr.bf16.mxu0 0
        %2486 = vmatpush1.bf16.msra.mxu0 0
        %2487 = vmatprep.subr.bf16.mxu0 0
        %2488 = vmatpush1.bf16.msra.mxu0 0
        %2489 = vmatprep.subr.bf16.mxu0 0
        %2490 = vmatpush1.bf16.msra.mxu0 0
        %2491 = vmatprep.subr.bf16.mxu0 0
        %2492 = vmatpush1.bf16.msra.mxu0 0
        %2493 = vmatprep.subr.bf16.mxu0 0
        %2494 = vmatpush1.bf16.msra.mxu0 0
        %2495 = vmatprep.subr.bf16.mxu0 0
        %2496 = vmatpush1.bf16.msra.mxu0 0
        %2497 = vmatprep.subr.bf16.mxu0 0
        %2498 = vmatpush1.bf16.msra.mxu0 0
        %2499 = vmatprep.subr.bf16.mxu0 0
        %2500 = vmatpush1.bf16.msra.mxu0 0
        %2501 = vmatprep.subr.bf16.mxu0 0
        %2502 = vmatpush1.bf16.msra.mxu0 0
        %2503 = vmatprep.subr.bf16.mxu0 0
        %2504 = vmatpush1.bf16.msra.mxu0 0
        %2505 = vmatprep.subr.bf16.mxu0 0
        %2506 = vmatpush1.bf16.msra.mxu0 0
        %2507 = vmatprep.subr.bf16.mxu0 0
        %2508 = vmatpush1.bf16.msra.mxu0 0
        %2509 = vmatprep.subr.bf16.mxu0 0
        %2510 = vmatpush1.bf16.msra.mxu0 0
        %2511 = vmatprep.subr.bf16.mxu0 0
        %2512 = vmatpush1.bf16.msra.mxu0 0
        %2513 = vmatprep.subr.bf16.mxu0 0
        %2514 = vmatpush1.bf16.msra.mxu0 0
        %2515 = vmatprep.mubr.bf16.mxu0 0
        %2516 = vmatmul.mubr.bf16.gmra.mrb[0].mxu0 %v2481
        %v2517 = vpop.f32.mrb[0].mxu0
        %v2518 = vadd.f32 0.0, %v2517
        %v2519 = vpop.f32.mrb[0].mxu0
        %v2520 = vpop.f32.mrb[0].mxu0
        %v2521 = vpop.f32.mrb[0].mxu0
        %2522 = vdwg.mxu0
        %v2523 = vpack.c.bf16 %v2518, %v2518
        %v2528 = vunpack.c.l.b16 %v1491
        %v2529 = vunpack.c.l.b16 %v1492
        %v2530 = vunpack.c.l.b16 %v1493
        %v2531 = vunpack.c.l.b16 %v1494
        %v2532 = vpack.c.b16 %v2529, %v2528
        %v2533 = vpack.c.b16 %v2531, %v2530
        %v2537 = vsel %vm1916, %v2523, 0
        %2539 = vmatprep.subr.bf16.mxu0 0
        %2540 = vmatpush1.bf16.msra.mxu0 %v2532
        %2541 = vmatprep.subr.bf16.mxu0 0
        %2542 = vmatpush1.bf16.msra.mxu0 %v2533
        %2543 = vmatprep.subr.bf16.mxu0 0
        %2544 = vmatpush1.bf16.msra.mxu0 0
        %2545 = vmatprep.subr.bf16.mxu0 0
        %2546 = vmatpush1.bf16.msra.mxu0 0
        %2547 = vmatprep.subr.bf16.mxu0 0
        %2548 = vmatpush1.bf16.msra.mxu0 0
        %2549 = vmatprep.subr.bf16.mxu0 0
        %2550 = vmatpush1.bf16.msra.mxu0 0
        %2551 = vmatprep.subr.bf16.mxu0 0
        %2552 = vmatpush1.bf16.msra.mxu0 0
        %2553 = vmatprep.subr.bf16.mxu0 0
        %2554 = vmatpush1.bf16.msra.mxu0 0
        %2555 = vmatprep.subr.bf16.mxu0 0
        %2556 = vmatpush1.bf16.msra.mxu0 0
        %2557 = vmatprep.subr.bf16.mxu0 0
        %2558 = vmatpush1.bf16.msra.mxu0 0
        %2559 = vmatprep.subr.bf16.mxu0 0
        %2560 = vmatpush1.bf16.msra.mxu0 0
        %2561 = vmatprep.subr.bf16.mxu0 0
        %2562 = vmatpush1.bf16.msra.mxu0 0
        %2563 = vmatprep.subr.bf16.mxu0 0
        %2564 = vmatpush1.bf16.msra.mxu0 0
        %2565 = vmatprep.subr.bf16.mxu0 0
        %2566 = vmatpush1.bf16.msra.mxu0 0
        %2567 = vmatprep.subr.bf16.mxu0 0
        %2568 = vmatpush1.bf16.msra.mxu0 0
        %2569 = vmatprep.subr.bf16.mxu0 0
        %2570 = vmatpush1.bf16.msra.mxu0 0
        %2571 = vmatprep.mubr.bf16.mxu0 0
        %2572 = vmatmul.mubr.bf16.gmra.mrb[0].mxu0 %v2537
        %v2573 = vpop.f32.mrb[0].mxu0
        %v2574 = vadd.f32 0.0, %v2573
        %v2575 = vpop.f32.mrb[0].mxu0
        %v2576 = vpop.f32.mrb[0].mxu0
        %v2577 = vpop.f32.mrb[0].mxu0
        %2578 = vdwg.mxu0
        %v2579 = vadd.f32 %v2412, %v2574
        %v2581 = vlaneseq
        %v2582 = vshrl.u32 %v2581, 7
        %v2583 = vsub.s32 0, %v2582
        %v2584 = vrot.slane %v1495, %v2583
        %v2586 = vadd.f32 %v2579, %v2584
        %v2587 = vadd.f32 %v1620, %v2586
        %2588 = vadd.xlane.f32.xlu0 %v2587
        %v2589 = vpop.xlane.xlu0 %2588
        %v2590 = vrcp.pop 128.0
        %v2591 = vmul.f32 %v2589, %v2590
        %v2592 = vsub.f32 %v2587, %v2591
        %v2593 = vmul.f32 %v2592, %v2592
        %2594 = vadd.xlane.f32.xlu0 %v2593
        %v2595 = vpop.xlane.xlu0 %2594
        %v2596 = vmul.f32 %v2595, %v2590
        %v2597 = vadd.f32 %v2596, 1e-05
        %v2598 = vrsqrt.pop %v2597
        %v2599 = vmul.f32 %v2592, %v2598
        %v2601 = vlaneseq
        %v2602 = vshrl.u32 %v2601, 7
        %v2603 = vsub.s32 0, %v2602
        %v2604 = vrot.slane %v1614, %v2603
        %v2606 = vmul.f32 %v2599, %v2604
        %v2608 = vlaneseq
        %v2609 = vshrl.u32 %v2608, 7
        %v2610 = vsub.s32 0, %v2609
        %v2611 = vrot.slane %v1615, %v2610
        %v2613 = vadd.f32 %v2606, %v2611
        %v2614 = vpack.c.bf16 %v2613, %v2613
        %v2615 = vpack.c.bf16 %v1624, %v1623
        %v2617 = vlaneseq
        %v2618 = vshrl.u32 %v2617, 7
        %v2619 = vsub.s32 0, %v2618
        %v2620 = vrot.slane %v1512, %v2619
        %v2638 = vunpack.c.l.b16 %v1496
        %v2639 = vunpack.c.l.b16 %v1497
        %v2640 = vunpack.c.l.b16 %v1498
        %v2641 = vunpack.c.l.b16 %v1499
        %v2642 = vunpack.c.l.b16 %v1500
        %v2643 = vunpack.c.l.b16 %v1501
        %v2644 = vunpack.c.l.b16 %v1502
        %v2645 = vunpack.c.l.b16 %v1503
        %v2646 = vunpack.c.l.b16 %v1504
        %v2647 = vunpack.c.l.b16 %v1505
        %v2648 = vunpack.c.l.b16 %v1506
        %v2649 = vunpack.c.l.b16 %v1507
        %v2650 = vunpack.c.l.b16 %v1508
        %v2651 = vunpack.c.l.b16 %v1509
        %v2652 = vunpack.c.l.b16 %v1510
        %v2653 = vunpack.c.l.b16 %v1511
        %v2654 = vpack.c.b16 %v2639, %v2638
        %v2655 = vpack.c.b16 %v2641, %v2640
        %v2656 = vpack.c.b16 %v2643, %v2642
        %v2657 = vpack.c.b16 %v2645, %v2644
        %v2658 = vpack.c.b16 %v2647, %v2646
        %v2659 = vpack.c.b16 %v2649, %v2648
        %v2660 = vpack.c.b16 %v2651, %v2650
        %v2661 = vpack.c.b16 %v2653, %v2652
        %2670 = vmatprep.subr.bf16.mxu0 0
        %2671 = vmatpush1.bf16.msra.mxu0 %v2654
        %2672 = vmatprep.subr.bf16.mxu0 0
        %2673 = vmatpush1.bf16.msra.mxu0 %v2655
        %2674 = vmatprep.subr.bf16.mxu0 0
        %2675 = vmatpush1.bf16.msra.mxu0 %v2656
        %2676 = vmatprep.subr.bf16.mxu0 0
        %2677 = vmatpush1.bf16.msra.mxu0 %v2657
        %2678 = vmatprep.subr.bf16.mxu0 0
        %2679 = vmatpush1.bf16.msra.mxu0 %v2658
        %2680 = vmatprep.subr.bf16.mxu0 0
        %2681 = vmatpush1.bf16.msra.mxu0 %v2659
        %2682 = vmatprep.subr.bf16.mxu0 0
        %2683 = vmatpush1.bf16.msra.mxu0 %v2660
        %2684 = vmatprep.subr.bf16.mxu0 0
        %2685 = vmatpush1.bf16.msra.mxu0 %v2661
        %2686 = vmatprep.subr.bf16.mxu0 0
        %2687 = vmatpush1.bf16.msra.mxu0 0
        %2688 = vmatprep.subr.bf16.mxu0 0
        %2689 = vmatpush1.bf16.msra.mxu0 0
        %2690 = vmatprep.subr.bf16.mxu0 0
        %2691 = vmatpush1.bf16.msra.mxu0 0
        %2692 = vmatprep.subr.bf16.mxu0 0
        %2693 = vmatpush1.bf16.msra.mxu0 0
        %2694 = vmatprep.subr.bf16.mxu0 0
        %2695 = vmatpush1.bf16.msra.mxu0 0
        %2696 = vmatprep.subr.bf16.mxu0 0
        %2697 = vmatpush1.bf16.msra.mxu0 0
        %2698 = vmatprep.subr.bf16.mxu0 0
        %2699 = vmatpush1.bf16.msra.mxu0 0
        %2700 = vmatprep.subr.bf16.mxu0 0
        %2701 = vmatpush1.bf16.msra.mxu0 0
        %2702 = vmatprep.mubr.bf16.mxu0 0
        %2703 = vmatmul.mubr.bf16.gmra.mrb[0].mxu0 %v2614
        %v2704 = vpop.f32.mrb[0].mxu0
        %v2705 = vadd.f32 %v2620, %v2704
        %v2706 = vpop.f32.mrb[0].mxu0
        %v2707 = vpop.f32.mrb[0].mxu0
        %v2708 = vpop.f32.mrb[0].mxu0
        %2709 = vdwg.mxu0
        %v2710 = vpack.c.bf16 %v2705, %v2705
        %v2712 = vlaneseq
        %v2713 = vshrl.u32 %v2712, 7
        %v2714 = vsub.s32 0, %v2713
        %v2715 = vrot.slane %v1529, %v2714
        %v2733 = vunpack.c.l.b16 %v1513
        %v2734 = vunpack.c.l.b16 %v1514
        %v2735 = vunpack.c.l.b16 %v1515
        %v2736 = vunpack.c.l.b16 %v1516
        %v2737 = vunpack.c.l.b16 %v1517
        %v2738 = vunpack.c.l.b16 %v1518
        %v2739 = vunpack.c.l.b16 %v1519
        %v2740 = vunpack.c.l.b16 %v1520
        %v2741 = vunpack.c.l.b16 %v1521
        %v2742 = vunpack.c.l.b16 %v1522
        %v2743 = vunpack.c.l.b16 %v1523
        %v2744 = vunpack.c.l.b16 %v1524
        %v2745 = vunpack.c.l.b16 %v1525
        %v2746 = vunpack.c.l.b16 %v1526
        %v2747 = vunpack.c.l.b16 %v1527
        %v2748 = vunpack.c.l.b16 %v1528
        %v2749 = vpack.c.b16 %v2734, %v2733
        %v2750 = vpack.c.b16 %v2736, %v2735
        %v2751 = vpack.c.b16 %v2738, %v2737
        %v2752 = vpack.c.b16 %v2740, %v2739
        %v2753 = vpack.c.b16 %v2742, %v2741
        %v2754 = vpack.c.b16 %v2744, %v2743
        %v2755 = vpack.c.b16 %v2746, %v2745
        %v2756 = vpack.c.b16 %v2748, %v2747
        %2765 = vmatprep.subr.bf16.mxu0 0
        %2766 = vmatpush1.bf16.msra.mxu0 %v2749
        %2767 = vmatprep.subr.bf16.mxu0 0
        %2768 = vmatpush1.bf16.msra.mxu0 %v2750
        %2769 = vmatprep.subr.bf16.mxu0 0
        %2770 = vmatpush1.bf16.msra.mxu0 %v2751
        %2771 = vmatprep.subr.bf16.mxu0 0
        %2772 = vmatpush1.bf16.msra.mxu0 %v2752
        %2773 = vmatprep.subr.bf16.mxu0 0
        %2774 = vmatpush1.bf16.msra.mxu0 %v2753
        %2775 = vmatprep.subr.bf16.mxu0 0
        %2776 = vmatpush1.bf16.msra.mxu0 %v2754
        %2777 = vmatprep.subr.bf16.mxu0 0
        %2778 = vmatpush1.bf16.msra.mxu0 %v2755
        %2779 = vmatprep.subr.bf16.mxu0 0
        %2780 = vmatpush1.bf16.msra.mxu0 %v2756
        %2781 = vmatprep.subr.bf16.mxu0 0
        %2782 = vmatpush1.bf16.msra.mxu0 0
        %2783 = vmatprep.subr.bf16.mxu0 0
        %2784 = vmatpush1.bf16.msra.mxu0 0
        %2785 = vmatprep.subr.bf16.mxu0 0
        %2786 = vmatpush1.bf16.msra.mxu0 0
        %2787 = vmatprep.subr.bf16.mxu0 0
        %2788 = vmatpush1.bf16.msra.mxu0 0
        %2789 = vmatprep.subr.bf16.mxu0 0
        %2790 = vmatpush1.bf16.msra.mxu0 0
        %2791 = vmatprep.subr.bf16.mxu0 0
        %2792 = vmatpush1.bf16.msra.mxu0 0
        %2793 = vmatprep.subr.bf16.mxu0 0
        %2794 = vmatpush1.bf16.msra.mxu0 0
        %2795 = vmatprep.subr.bf16.mxu0 0
        %2796 = vmatpush1.bf16.msra.mxu0 0
        %2797 = vmatprep.mubr.bf16.mxu0 0
        %2798 = vmatmul.mubr.bf16.gmra.mrb[0].mxu0 %v2615
        %v2799 = vpop.f32.mrb[0].mxu0
        %v2800 = vadd.f32 %v2715, %v2799
        %v2801 = vpop.f32.mrb[0].mxu0
        %v2802 = vpop.f32.mrb[0].mxu0
        %v2803 = vadd.f32 %v2715, %v2802
        %v2804 = vpop.f32.mrb[0].mxu0
        %2805 = vdwg.mxu0
        %v2806 = vpack.c.bf16 %v2803, %v2800
        %v2808 = vlaneseq
        %v2809 = vshrl.u32 %v2808, 7
        %v2810 = vsub.s32 0, %v2809
        %v2811 = vrot.slane %v1546, %v2810
        %v2829 = vunpack.c.l.b16 %v1530
        %v2830 = vunpack.c.l.b16 %v1531
        %v2831 = vunpack.c.l.b16 %v1532
        %v2832 = vunpack.c.l.b16 %v1533
        %v2833 = vunpack.c.l.b16 %v1534
        %v2834 = vunpack.c.l.b16 %v1535
        %v2835 = vunpack.c.l.b16 %v1536
        %v2836 = vunpack.c.l.b16 %v1537
        %v2837 = vunpack.c.l.b16 %v1538
        %v2838 = vunpack.c.l.b16 %v1539
        %v2839 = vunpack.c.l.b16 %v1540
        %v2840 = vunpack.c.l.b16 %v1541
        %v2841 = vunpack.c.l.b16 %v1542
        %v2842 = vunpack.c.l.b16 %v1543
        %v2843 = vunpack.c.l.b16 %v1544
        %v2844 = vunpack.c.l.b16 %v1545
        %v2845 = vpack.c.b16 %v2830, %v2829
        %v2846 = vpack.c.b16 %v2832, %v2831
        %v2847 = vpack.c.b16 %v2834, %v2833
        %v2848 = vpack.c.b16 %v2836, %v2835
        %v2849 = vpack.c.b16 %v2838, %v2837
        %v2850 = vpack.c.b16 %v2840, %v2839
        %v2851 = vpack.c.b16 %v2842, %v2841
        %v2852 = vpack.c.b16 %v2844, %v2843
        %2861 = vmatprep.subr.bf16.mxu0 0
        %2862 = vmatpush1.bf16.msra.mxu0 %v2845
        %2863 = vmatprep.subr.bf16.mxu0 0
        %2864 = vmatpush1.bf16.msra.mxu0 %v2846
        %2865 = vmatprep.subr.bf16.mxu0 0
        %2866 = vmatpush1.bf16.msra.mxu0 %v2847
        %2867 = vmatprep.subr.bf16.mxu0 0
        %2868 = vmatpush1.bf16.msra.mxu0 %v2848
        %2869 = vmatprep.subr.bf16.mxu0 0
        %2870 = vmatpush1.bf16.msra.mxu0 %v2849
        %2871 = vmatprep.subr.bf16.mxu0 0
        %2872 = vmatpush1.bf16.msra.mxu0 %v2850
        %2873 = vmatprep.subr.bf16.mxu0 0
        %2874 = vmatpush1.bf16.msra.mxu0 %v2851
        %2875 = vmatprep.subr.bf16.mxu0 0
        %2876 = vmatpush1.bf16.msra.mxu0 %v2852
        %2877 = vmatprep.subr.bf16.mxu0 0
        %2878 = vmatpush1.bf16.msra.mxu0 0
        %2879 = vmatprep.subr.bf16.mxu0 0
        %2880 = vmatpush1.bf16.msra.mxu0 0
        %2881 = vmatprep.subr.bf16.mxu0 0
        %2882 = vmatpush1.bf16.msra.mxu0 0
        %2883 = vmatprep.subr.bf16.mxu0 0
        %2884 = vmatpush1.bf16.msra.mxu0 0
        %2885 = vmatprep.subr.bf16.mxu0 0
        %2886 = vmatpush1.bf16.msra.mxu0 0
        %2887 = vmatprep.subr.bf16.mxu0 0
        %2888 = vmatpush1.bf16.msra.mxu0 0
        %2889 = vmatprep.subr.bf16.mxu0 0
        %2890 = vmatpush1.bf16.msra.mxu0 0
        %2891 = vmatprep.subr.bf16.mxu0 0
        %2892 = vmatpush1.bf16.msra.mxu0 0
        %2893 = vmatprep.mubr.bf16.mxu0 0
        %2894 = vmatmul.mubr.bf16.gmra.mrb[0].mxu0 %v2615
        %v2895 = vpop.f32.mrb[0].mxu0
        %v2896 = vadd.f32 %v2811, %v2895
        %v2897 = vpop.f32.mrb[0].mxu0
        %v2898 = vpop.f32.mrb[0].mxu0
        %v2899 = vadd.f32 %v2811, %v2898
        %v2900 = vpop.f32.mrb[0].mxu0
        %2901 = vdwg.mxu0
        %v2902 = vpack.c.bf16 %v2899, %v2896
        %v2904 = vsel %vm1916, %v2710, 0
        %v2907 = vsel %vm1916, %v2806, 0
        %2909 = vmatprep.subr.bf16.mxu0 0
        %2910 = vmatpush1.bf16.xpose.msra.mxu0 %v2907
        %2911 = vmatprep.subr.bf16.mxu0 0
        %2912 = vmatpush1.bf16.xpose.msra.mxu0 0
        %2913 = vmatprep.subr.bf16.mxu0 0
        %2914 = vmatpush1.bf16.xpose.msra.mxu0 0
        %2915 = vmatprep.subr.bf16.mxu0 0
        %2916 = vmatpush1.bf16.xpose.msra.mxu0 0
        %2917 = vmatprep.subr.bf16.mxu0 0
        %2918 = vmatpush1.bf16.xpose.msra.mxu0 0
        %2919 = vmatprep.subr.bf16.mxu0 0
        %2920 = vmatpush1.bf16.xpose.msra.mxu0 0
        %2921 = vmatprep.subr.bf16.mxu0 0
        %2922 = vmatpush1.bf16.xpose.msra.mxu0 0
        %2923 = vmatprep.subr.bf16.mxu0 0
        %2924 = vmatpush1.bf16.xpose.msra.mxu0 0
        %2925 = vmatprep.subr.bf16.mxu0 0
        %2926 = vmatpush1.bf16.xpose.msra.mxu0 0
        %2927 = vmatprep.subr.bf16.mxu0 0
        %2928 = vmatpush1.bf16.xpose.msra.mxu0 0
        %2929 = vmatprep.subr.bf16.mxu0 0
        %2930 = vmatpush1.bf16.xpose.msra.mxu0 0
        %2931 = vmatprep.subr.bf16.mxu0 0
        %2932 = vmatpush1.bf16.xpose.msra.mxu0 0
        %2933 = vmatprep.subr.bf16.mxu0 0
        %2934 = vmatpush1.bf16.xpose.msra.mxu0 0
        %2935 = vmatprep.subr.bf16.mxu0 0
        %2936 = vmatpush1.bf16.xpose.msra.mxu0 0
        %2937 = vmatprep.subr.bf16.mxu0 0
        %2938 = vmatpush1.bf16.xpose.msra.mxu0 0
        %2939 = vmatprep.subr.bf16.mxu0 0
        %2940 = vmatpush1.bf16.xpose.msra.mxu0 0
        %2941 = vmatprep.mubr.bf16.mxu0 0
        %2942 = vmatmul.mubr.bf16.gmra.mrb[0].mxu0 %v2904
        %v2943 = vpop.f32.mrb[0].mxu0
        %v2944 = vadd.f32 0.0, %v2943
        %v2945 = vpop.f32.mrb[0].mxu0
        %v2946 = vpop.f32.mrb[0].mxu0
        %v2947 = vpop.f32.mrb[0].mxu0
        %2948 = vdwg.mxu0
        %v2949 = vmul.f32 %v2944, 0.17677669
        %v2950 = vsel %vm1965, %v2949, -inf
        %2951 = vmax.xlane.f32.xlu0 %v2950
        %v2952 = vpop.xlane.xlu0 %2951
        %v2953 = vsub.f32 %v2949, %v2952
        %v2954 = vmul.f32 %v2953, 1.442695
        %v2955 = vpow.pop %v2954
        %v2956 = vsel %vm1965, %v2955, 0.0
        %2957 = vadd.xlane.f32.xlu0 %v2956
        %v2958 = vpop.xlane.xlu0 %2957
        %v2959 = vrcp.pop %v2958
        %v2960 = vmul.f32 %v2955, %v2959
        %v2961 = vpack.c.bf16 %v2960, %v2960
        %v2963 = vsel %vm1965, %v2961, 0
        %2965 = vmatprep.subr.bf16.mxu0 0
        %2966 = vmatpush1.bf16.msra.mxu0 %v2902
        %2967 = vmatprep.subr.bf16.mxu0 0
        %2968 = vmatpush1.bf16.msra.mxu0 0
        %2969 = vmatprep.subr.bf16.mxu0 0
        %2970 = vmatpush1.bf16.msra.mxu0 0
        %2971 = vmatprep.subr.bf16.mxu0 0
        %2972 = vmatpush1.bf16.msra.mxu0 0
        %2973 = vmatprep.subr.bf16.mxu0 0
        %2974 = vmatpush1.bf16.msra.mxu0 0
        %2975 = vmatprep.subr.bf16.mxu0 0
        %2976 = vmatpush1.bf16.msra.mxu0 0
        %2977 = vmatprep.subr.bf16.mxu0 0
        %2978 = vmatpush1.bf16.msra.mxu0 0
        %2979 = vmatprep.subr.bf16.mxu0 0
        %2980 = vmatpush1.bf16.msra.mxu0 0
        %2981 = vmatprep.subr.bf16.mxu0 0
        %2982 = vmatpush1.bf16.msra.mxu0 0
        %2983 = vmatprep.subr.bf16.mxu0 0
        %2984 = vmatpush1.bf16.msra.mxu0 0
        %2985 = vmatprep.subr.bf16.mxu0 0
        %2986 = vmatpush1.bf16.msra.mxu0 0
        %2987 = vmatprep.subr.bf16.mxu0 0
        %2988 = vmatpush1.bf16.msra.mxu0 0
        %2989 = vmatprep.subr.bf16.mxu0 0
        %2990 = vmatpush1.bf16.msra.mxu0 0
        %2991 = vmatprep.subr.bf16.mxu0 0
        %2992 = vmatpush1.bf16.msra.mxu0 0
        %2993 = vmatprep.subr.bf16.mxu0 0
        %2994 = vmatpush1.bf16.msra.mxu0 0
        %2995 = vmatprep.subr.bf16.mxu0 0
        %2996 = vmatpush1.bf16.msra.mxu0 0
        %2997 = vmatprep.mubr.bf16.mxu0 0
        %2998 = vmatmul.mubr.bf16.gmra.mrb[0].mxu0 %v2963
        %v2999 = vpop.f32.mrb[0].mxu0
        %v3000 = vadd.f32 0.0, %v2999
        %v3001 = vpop.f32.mrb[0].mxu0
        %v3002 = vpop.f32.mrb[0].mxu0
        %v3003 = vpop.f32.mrb[0].mxu0
        %3004 = vdwg.mxu0
        %v3005 = vpack.c.bf16 %v3000, %v3000
        %3007 = vrot.lane.b32.xlu0 %v2710, 96
        %v3008 = vpop.permute.xlu0 %3007
        %3010 = vrot.lane.b32.xlu0 %v2806, 96
        %v3011 = vpop.permute.xlu0 %3010
        %v3013 = vsel %vm1916, %v3008, 0
        %v3016 = vsel %vm1916, %v3011, 0
        %3018 = vmatprep.subr.bf16.mxu0 0
        %3019 = vmatpush1.bf16.xpose.msra.mxu0 %v3016
        %3020 = vmatprep.subr.bf16.mxu0 0
        %3021 = vmatpush1.bf16.xpose.msra.mxu0 0
        %3022 = vmatprep.subr.bf16.mxu0 0
        %3023 = vmatpush1.bf16.xpose.msra.mxu0 0
        %3024 = vmatprep.subr.bf16.mxu0 0
        %3025 = vmatpush1.bf16.xpose.msra.mxu0 0
        %3026 = vmatprep.subr.bf16.mxu0 0
        %3027 = vmatpush1.bf16.xpose.msra.mxu0 0
        %3028 = vmatprep.subr.bf16.mxu0 0
        %3029 = vmatpush1.bf16.xpose.msra.mxu0 0
        %3030 = vmatprep.subr.bf16.mxu0 0
        %3031 = vmatpush1.bf16.xpose.msra.mxu0 0
        %3032 = vmatprep.subr.bf16.mxu0 0
        %3033 = vmatpush1.bf16.xpose.msra.mxu0 0
        %3034 = vmatprep.subr.bf16.mxu0 0
        %3035 = vmatpush1.bf16.xpose.msra.mxu0 0
        %3036 = vmatprep.subr.bf16.mxu0 0
        %3037 = vmatpush1.bf16.xpose.msra.mxu0 0
        %3038 = vmatprep.subr.bf16.mxu0 0
        %3039 = vmatpush1.bf16.xpose.msra.mxu0 0
        %3040 = vmatprep.subr.bf16.mxu0 0
        %3041 = vmatpush1.bf16.xpose.msra.mxu0 0
        %3042 = vmatprep.subr.bf16.mxu0 0
        %3043 = vmatpush1.bf16.xpose.msra.mxu0 0
        %3044 = vmatprep.subr.bf16.mxu0 0
        %3045 = vmatpush1.bf16.xpose.msra.mxu0 0
        %3046 = vmatprep.subr.bf16.mxu0 0
        %3047 = vmatpush1.bf16.xpose.msra.mxu0 0
        %3048 = vmatprep.subr.bf16.mxu0 0
        %3049 = vmatpush1.bf16.xpose.msra.mxu0 0
        %3050 = vmatprep.mubr.bf16.mxu0 0
        %3051 = vmatmul.mubr.bf16.gmra.mrb[0].mxu0 %v3013
        %v3052 = vpop.f32.mrb[0].mxu0
        %v3053 = vadd.f32 0.0, %v3052
        %v3054 = vpop.f32.mrb[0].mxu0
        %v3055 = vpop.f32.mrb[0].mxu0
        %v3056 = vpop.f32.mrb[0].mxu0
        %3057 = vdwg.mxu0
        %v3058 = vmul.f32 %v3053, 0.17677669
        %v3059 = vsel %vm1965, %v3058, -inf
        %3060 = vmax.xlane.f32.xlu0 %v3059
        %v3061 = vpop.xlane.xlu0 %3060
        %v3062 = vsub.f32 %v3058, %v3061
        %v3063 = vmul.f32 %v3062, 1.442695
        %v3064 = vpow.pop %v3063
        %v3065 = vsel %vm1965, %v3064, 0.0
        %3066 = vadd.xlane.f32.xlu0 %v3065
        %v3067 = vpop.xlane.xlu0 %3066
        %v3068 = vrcp.pop %v3067
        %v3069 = vmul.f32 %v3064, %v3068
        %v3070 = vpack.c.bf16 %v3069, %v3069
        %3072 = vrot.lane.b32.xlu0 %v2902, 96
        %v3073 = vpop.permute.xlu0 %3072
        %v3076 = vsel %vm1965, %v3070, 0
        %3078 = vmatprep.subr.bf16.mxu0 0
        %3079 = vmatpush1.bf16.msra.mxu0 %v3073
        %3080 = vmatprep.subr.bf16.mxu0 0
        %3081 = vmatpush1.bf16.msra.mxu0 0
        %3082 = vmatprep.subr.bf16.mxu0 0
        %3083 = vmatpush1.bf16.msra.mxu0 0
        %3084 = vmatprep.subr.bf16.mxu0 0
        %3085 = vmatpush1.bf16.msra.mxu0 0
        %3086 = vmatprep.subr.bf16.mxu0 0
        %3087 = vmatpush1.bf16.msra.mxu0 0
        %3088 = vmatprep.subr.bf16.mxu0 0
        %3089 = vmatpush1.bf16.msra.mxu0 0
        %3090 = vmatprep.subr.bf16.mxu0 0
        %3091 = vmatpush1.bf16.msra.mxu0 0
        %3092 = vmatprep.subr.bf16.mxu0 0
        %3093 = vmatpush1.bf16.msra.mxu0 0
        %3094 = vmatprep.subr.bf16.mxu0 0
        %3095 = vmatpush1.bf16.msra.mxu0 0
        %3096 = vmatprep.subr.bf16.mxu0 0
        %3097 = vmatpush1.bf16.msra.mxu0 0
        %3098 = vmatprep.subr.bf16.mxu0 0
        %3099 = vmatpush1.bf16.msra.mxu0 0
        %3100 = vmatprep.subr.bf16.mxu0 0
        %3101 = vmatpush1.bf16.msra.mxu0 0
        %3102 = vmatprep.subr.bf16.mxu0 0
        %3103 = vmatpush1.bf16.msra.mxu0 0
        %3104 = vmatprep.subr.bf16.mxu0 0
        %3105 = vmatpush1.bf16.msra.mxu0 0
        %3106 = vmatprep.subr.bf16.mxu0 0
        %3107 = vmatpush1.bf16.msra.mxu0 0
        %3108 = vmatprep.subr.bf16.mxu0 0
        %3109 = vmatpush1.bf16.msra.mxu0 0
        %3110 = vmatprep.mubr.bf16.mxu0 0
        %3111 = vmatmul.mubr.bf16.gmra.mrb[0].mxu0 %v3076
        %v3112 = vpop.f32.mrb[0].mxu0
        %v3113 = vadd.f32 0.0, %v3112
        %v3114 = vpop.f32.mrb[0].mxu0
        %v3115 = vpop.f32.mrb[0].mxu0
        %v3116 = vpop.f32.mrb[0].mxu0
        %3117 = vdwg.mxu0
        %v3118 = vpack.c.bf16 %v3113, %v3113
        %v3123 = vunpack.c.l.b16 %v1551
        %v3124 = vunpack.c.l.b16 %v1552
        %v3125 = vunpack.c.l.b16 %v1553
        %v3126 = vunpack.c.l.b16 %v1554
        %v3127 = vpack.c.b16 %v3124, %v3123
        %v3128 = vpack.c.b16 %v3126, %v3125
        %v3132 = vsel %vm1916, %v3118, 0
        %3134 = vmatprep.subr.bf16.mxu0 0
        %3135 = vmatpush1.bf16.msra.mxu0 %v3127
        %3136 = vmatprep.subr.bf16.mxu0 0
        %3137 = vmatpush1.bf16.msra.mxu0 %v3128
        %3138 = vmatprep.subr.bf16.mxu0 0
        %3139 = vmatpush1.bf16.msra.mxu0 0
        %3140 = vmatprep.subr.bf16.mxu0 0
        %3141 = vmatpush1.bf16.msra.mxu0 0
        %3142 = vmatprep.subr.bf16.mxu0 0
        %3143 = vmatpush1.bf16.msra.mxu0 0
        %3144 = vmatprep.subr.bf16.mxu0 0
        %3145 = vmatpush1.bf16.msra.mxu0 0
        %3146 = vmatprep.subr.bf16.mxu0 0
        %3147 = vmatpush1.bf16.msra.mxu0 0
        %3148 = vmatprep.subr.bf16.mxu0 0
        %3149 = vmatpush1.bf16.msra.mxu0 0
        %3150 = vmatprep.subr.bf16.mxu0 0
        %3151 = vmatpush1.bf16.msra.mxu0 0
        %3152 = vmatprep.subr.bf16.mxu0 0
        %3153 = vmatpush1.bf16.msra.mxu0 0
        %3154 = vmatprep.subr.bf16.mxu0 0
        %3155 = vmatpush1.bf16.msra.mxu0 0
        %3156 = vmatprep.subr.bf16.mxu0 0
        %3157 = vmatpush1.bf16.msra.mxu0 0
        %3158 = vmatprep.subr.bf16.mxu0 0
        %3159 = vmatpush1.bf16.msra.mxu0 0
        %3160 = vmatprep.subr.bf16.mxu0 0
        %3161 = vmatpush1.bf16.msra.mxu0 0
        %3162 = vmatprep.subr.bf16.mxu0 0
        %3163 = vmatpush1.bf16.msra.mxu0 0
        %3164 = vmatprep.subr.bf16.mxu0 0
        %3165 = vmatpush1.bf16.msra.mxu0 0
        %3166 = vmatprep.mubr.bf16.mxu0 0
        %3167 = vmatmul.mubr.bf16.gmra.mrb[0].mxu0 %v3132
        %v3168 = vpop.f32.mrb[0].mxu0
        %v3169 = vadd.f32 0.0, %v3168
        %v3170 = vpop.f32.mrb[0].mxu0
        %v3171 = vpop.f32.mrb[0].mxu0
        %v3172 = vpop.f32.mrb[0].mxu0
        %3173 = vdwg.mxu0
        %v3178 = vunpack.c.l.b16 %v1547
        %v3179 = vunpack.c.l.b16 %v1548
        %v3180 = vunpack.c.l.b16 %v1549
        %v3181 = vunpack.c.l.b16 %v1550
        %v3182 = vpack.c.b16 %v3179, %v3178
        %v3183 = vpack.c.b16 %v3181, %v3180
        %v3187 = vsel %vm1916, %v3005, 0
        %3189 = vmatprep.subr.bf16.mxu0 0
        %3190 = vmatpush1.bf16.msra.mxu0 %v3182
        %3191 = vmatprep.subr.bf16.mxu0 0
        %3192 = vmatpush1.bf16.msra.mxu0 %v3183
        %3193 = vmatprep.subr.bf16.mxu0 0
        %3194 = vmatpush1.bf16.msra.mxu0 0
        %3195 = vmatprep.subr.bf16.mxu0 0
        %3196 = vmatpush1.bf16.msra.mxu0 0
        %3197 = vmatprep.subr.bf16.mxu0 0
        %3198 = vmatpush1.bf16.msra.mxu0 0
        %3199 = vmatprep.subr.bf16.mxu0 0
        %3200 = vmatpush1.bf16.msra.mxu0 0
        %3201 = vmatprep.subr.bf16.mxu0 0
        %3202 = vmatpush1.bf16.msra.mxu0 0
        %3203 = vmatprep.subr.bf16.mxu0 0
        %3204 = vmatpush1.bf16.msra.mxu0 0
        %3205 = vmatprep.subr.bf16.mxu0 0
        %3206 = vmatpush1.bf16.msra.mxu0 0
        %3207 = vmatprep.subr.bf16.mxu0 0
        %3208 = vmatpush1.bf16.msra.mxu0 0
        %3209 = vmatprep.subr.bf16.mxu0 0
        %3210 = vmatpush1.bf16.msra.mxu0 0
        %3211 = vmatprep.subr.bf16.mxu0 0
        %3212 = vmatpush1.bf16.msra.mxu0 0
        %3213 = vmatprep.subr.bf16.mxu0 0
        %3214 = vmatpush1.bf16.msra.mxu0 0
        %3215 = vmatprep.subr.bf16.mxu0 0
        %3216 = vmatpush1.bf16.msra.mxu0 0
        %3217 = vmatprep.subr.bf16.mxu0 0
        %3218 = vmatpush1.bf16.msra.mxu0 0
        %3219 = vmatprep.subr.bf16.mxu0 0
        %3220 = vmatpush1.bf16.msra.mxu0 0
        %3221 = vmatprep.mubr.bf16.mxu0 0
        %3222 = vmatmul.mubr.bf16.gmra.mrb[0].mxu0 %v3187
        %v3223 = vpop.f32.mrb[0].mxu0
        %v3224 = vadd.f32 %v3169, %v3223
        %v3225 = vpop.f32.mrb[0].mxu0
        %v3226 = vpop.f32.mrb[0].mxu0
        %v3227 = vpop.f32.mrb[0].mxu0
        %3228 = vdwg.mxu0
        %3229 = vrot.lane.b32.xlu0 %v2710, 64
        %v3230 = vpop.permute.xlu0 %3229
        %3231 = vrot.lane.b32.xlu0 %v2806, 64
        %v3232 = vpop.permute.xlu0 %3231
        %v3234 = vsel %vm1916, %v3230, 0
        %v3237 = vsel %vm1916, %v3232, 0
        %3239 = vmatprep.subr.bf16.mxu0 0
        %3240 = vmatpush1.bf16.xpose.msra.mxu0 %v3237
        %3241 = vmatprep.subr.bf16.mxu0 0
        %3242 = vmatpush1.bf16.xpose.msra.mxu0 0
        %3243 = vmatprep.subr.bf16.mxu0 0
        %3244 = vmatpush1.bf16.xpose.msra.mxu0 0
        %3245 = vmatprep.subr.bf16.mxu0 0
        %3246 = vmatpush1.bf16.xpose.msra.mxu0 0
        %3247 = vmatprep.subr.bf16.mxu0 0
        %3248 = vmatpush1.bf16.xpose.msra.mxu0 0
        %3249 = vmatprep.subr.bf16.mxu0 0
        %3250 = vmatpush1.bf16.xpose.msra.mxu0 0
        %3251 = vmatprep.subr.bf16.mxu0 0
        %3252 = vmatpush1.bf16.xpose.msra.mxu0 0
        %3253 = vmatprep.subr.bf16.mxu0 0
        %3254 = vmatpush1.bf16.xpose.msra.mxu0 0
        %3255 = vmatprep.subr.bf16.mxu0 0
        %3256 = vmatpush1.bf16.xpose.msra.mxu0 0
        %3257 = vmatprep.subr.bf16.mxu0 0
        %3258 = vmatpush1.bf16.xpose.msra.mxu0 0
        %3259 = vmatprep.subr.bf16.mxu0 0
        %3260 = vmatpush1.bf16.xpose.msra.mxu0 0
        %3261 = vmatprep.subr.bf16.mxu0 0
        %3262 = vmatpush1.bf16.xpose.msra.mxu0 0
        %3263 = vmatprep.subr.bf16.mxu0 0
        %3264 = vmatpush1.bf16.xpose.msra.mxu0 0
        %3265 = vmatprep.subr.bf16.mxu0 0
        %3266 = vmatpush1.bf16.xpose.msra.mxu0 0
        %3267 = vmatprep.subr.bf16.mxu0 0
        %3268 = vmatpush1.bf16.xpose.msra.mxu0 0
        %3269 = vmatprep.subr.bf16.mxu0 0
        %3270 = vmatpush1.bf16.xpose.msra.mxu0 0
        %3271 = vmatprep.mubr.bf16.mxu0 0
        %3272 = vmatmul.mubr.bf16.gmra.mrb[0].mxu0 %v3234
        %v3273 = vpop.f32.mrb[0].mxu0
        %v3274 = vadd.f32 0.0, %v3273
        %v3275 = vpop.f32.mrb[0].mxu0
        %v3276 = vpop.f32.mrb[0].mxu0
        %v3277 = vpop.f32.mrb[0].mxu0
        %3278 = vdwg.mxu0
        %v3279 = vmul.f32 %v3274, 0.17677669
        %v3280 = vsel %vm1965, %v3279, -inf
        %3281 = vmax.xlane.f32.xlu0 %v3280
        %v3282 = vpop.xlane.xlu0 %3281
        %v3283 = vsub.f32 %v3279, %v3282
        %v3284 = vmul.f32 %v3283, 1.442695
        %v3285 = vpow.pop %v3284
        %v3286 = vsel %vm1965, %v3285, 0.0
        %3287 = vadd.xlane.f32.xlu0 %v3286
        %v3288 = vpop.xlane.xlu0 %3287
        %v3289 = vrcp.pop %v3288
        %v3290 = vmul.f32 %v3285, %v3289
        %v3291 = vpack.c.bf16 %v3290, %v3290
        %3292 = vrot.lane.b32.xlu0 %v2902, 64
        %v3293 = vpop.permute.xlu0 %3292
        %v3296 = vsel %vm1965, %v3291, 0
        %3298 = vmatprep.subr.bf16.mxu0 0
        %3299 = vmatpush1.bf16.msra.mxu0 %v3293
        %3300 = vmatprep.subr.bf16.mxu0 0
        %3301 = vmatpush1.bf16.msra.mxu0 0
        %3302 = vmatprep.subr.bf16.mxu0 0
        %3303 = vmatpush1.bf16.msra.mxu0 0
        %3304 = vmatprep.subr.bf16.mxu0 0
        %3305 = vmatpush1.bf16.msra.mxu0 0
        %3306 = vmatprep.subr.bf16.mxu0 0
        %3307 = vmatpush1.bf16.msra.mxu0 0
        %3308 = vmatprep.subr.bf16.mxu0 0
        %3309 = vmatpush1.bf16.msra.mxu0 0
        %3310 = vmatprep.subr.bf16.mxu0 0
        %3311 = vmatpush1.bf16.msra.mxu0 0
        %3312 = vmatprep.subr.bf16.mxu0 0
        %3313 = vmatpush1.bf16.msra.mxu0 0
        %3314 = vmatprep.subr.bf16.mxu0 0
        %3315 = vmatpush1.bf16.msra.mxu0 0
        %3316 = vmatprep.subr.bf16.mxu0 0
        %3317 = vmatpush1.bf16.msra.mxu0 0
        %3318 = vmatprep.subr.bf16.mxu0 0
        %3319 = vmatpush1.bf16.msra.mxu0 0
        %3320 = vmatprep.subr.bf16.mxu0 0
        %3321 = vmatpush1.bf16.msra.mxu0 0
        %3322 = vmatprep.subr.bf16.mxu0 0
        %3323 = vmatpush1.bf16.msra.mxu0 0
        %3324 = vmatprep.subr.bf16.mxu0 0
        %3325 = vmatpush1.bf16.msra.mxu0 0
        %3326 = vmatprep.subr.bf16.mxu0 0
        %3327 = vmatpush1.bf16.msra.mxu0 0
        %3328 = vmatprep.subr.bf16.mxu0 0
        %3329 = vmatpush1.bf16.msra.mxu0 0
        %3330 = vmatprep.mubr.bf16.mxu0 0
        %3331 = vmatmul.mubr.bf16.gmra.mrb[0].mxu0 %v3296
        %v3332 = vpop.f32.mrb[0].mxu0
        %v3333 = vadd.f32 0.0, %v3332
        %v3334 = vpop.f32.mrb[0].mxu0
        %v3335 = vpop.f32.mrb[0].mxu0
        %v3336 = vpop.f32.mrb[0].mxu0
        %3337 = vdwg.mxu0
        %v3338 = vpack.c.bf16 %v3333, %v3333
        %v3343 = vunpack.c.l.b16 %v1555
        %v3344 = vunpack.c.l.b16 %v1556
        %v3345 = vunpack.c.l.b16 %v1557
        %v3346 = vunpack.c.l.b16 %v1558
        %v3347 = vpack.c.b16 %v3344, %v3343
        %v3348 = vpack.c.b16 %v3346, %v3345
        %v3352 = vsel %vm1916, %v3338, 0
        %3354 = vmatprep.subr.bf16.mxu0 0
        %3355 = vmatpush1.bf16.msra.mxu0 %v3347
        %3356 = vmatprep.subr.bf16.mxu0 0
        %3357 = vmatpush1.bf16.msra.mxu0 %v3348
        %3358 = vmatprep.subr.bf16.mxu0 0
        %3359 = vmatpush1.bf16.msra.mxu0 0
        %3360 = vmatprep.subr.bf16.mxu0 0
        %3361 = vmatpush1.bf16.msra.mxu0 0
        %3362 = vmatprep.subr.bf16.mxu0 0
        %3363 = vmatpush1.bf16.msra.mxu0 0
        %3364 = vmatprep.subr.bf16.mxu0 0
        %3365 = vmatpush1.bf16.msra.mxu0 0
        %3366 = vmatprep.subr.bf16.mxu0 0
        %3367 = vmatpush1.bf16.msra.mxu0 0
        %3368 = vmatprep.subr.bf16.mxu0 0
        %3369 = vmatpush1.bf16.msra.mxu0 0
        %3370 = vmatprep.subr.bf16.mxu0 0
        %3371 = vmatpush1.bf16.msra.mxu0 0
        %3372 = vmatprep.subr.bf16.mxu0 0
        %3373 = vmatpush1.bf16.msra.mxu0 0
        %3374 = vmatprep.subr.bf16.mxu0 0
        %3375 = vmatpush1.bf16.msra.mxu0 0
        %3376 = vmatprep.subr.bf16.mxu0 0
        %3377 = vmatpush1.bf16.msra.mxu0 0
        %3378 = vmatprep.subr.bf16.mxu0 0
        %3379 = vmatpush1.bf16.msra.mxu0 0
        %3380 = vmatprep.subr.bf16.mxu0 0
        %3381 = vmatpush1.bf16.msra.mxu0 0
        %3382 = vmatprep.subr.bf16.mxu0 0
        %3383 = vmatpush1.bf16.msra.mxu0 0
        %3384 = vmatprep.subr.bf16.mxu0 0
        %3385 = vmatpush1.bf16.msra.mxu0 0
        %3386 = vmatprep.mubr.bf16.mxu0 0
        %3387 = vmatmul.mubr.bf16.gmra.mrb[0].mxu0 %v3352
        %v3388 = vpop.f32.mrb[0].mxu0
        %v3389 = vadd.f32 0.0, %v3388
        %v3390 = vpop.f32.mrb[0].mxu0
        %v3391 = vpop.f32.mrb[0].mxu0
        %v3392 = vpop.f32.mrb[0].mxu0
        %3393 = vdwg.mxu0
        %v3394 = vadd.f32 %v3224, %v3389
        %3395 = vrot.lane.b32.xlu0 %v2710, 32
        %v3396 = vpop.permute.xlu0 %3395
        %3397 = vrot.lane.b32.xlu0 %v2806, 32
        %v3398 = vpop.permute.xlu0 %3397
        %v3400 = vsel %vm1916, %v3396, 0
        %v3403 = vsel %vm1916, %v3398, 0
        %3405 = vmatprep.subr.bf16.mxu0 0
        %3406 = vmatpush1.bf16.xpose.msra.mxu0 %v3403
        %3407 = vmatprep.subr.bf16.mxu0 0
        %3408 = vmatpush1.bf16.xpose.msra.mxu0 0
        %3409 = vmatprep.subr.bf16.mxu0 0
        %3410 = vmatpush1.bf16.xpose.msra.mxu0 0
        %3411 = vmatprep.subr.bf16.mxu0 0
        %3412 = vmatpush1.bf16.xpose.msra.mxu0 0
        %3413 = vmatprep.subr.bf16.mxu0 0
        %3414 = vmatpush1.bf16.xpose.msra.mxu0 0
        %3415 = vmatprep.subr.bf16.mxu0 0
        %3416 = vmatpush1.bf16.xpose.msra.mxu0 0
        %3417 = vmatprep.subr.bf16.mxu0 0
        %3418 = vmatpush1.bf16.xpose.msra.mxu0 0
        %3419 = vmatprep.subr.bf16.mxu0 0
        %3420 = vmatpush1.bf16.xpose.msra.mxu0 0
        %3421 = vmatprep.subr.bf16.mxu0 0
        %3422 = vmatpush1.bf16.xpose.msra.mxu0 0
        %3423 = vmatprep.subr.bf16.mxu0 0
        %3424 = vmatpush1.bf16.xpose.msra.mxu0 0
        %3425 = vmatprep.subr.bf16.mxu0 0
        %3426 = vmatpush1.bf16.xpose.msra.mxu0 0
        %3427 = vmatprep.subr.bf16.mxu0 0
        %3428 = vmatpush1.bf16.xpose.msra.mxu0 0
        %3429 = vmatprep.subr.bf16.mxu0 0
        %3430 = vmatpush1.bf16.xpose.msra.mxu0 0
        %3431 = vmatprep.subr.bf16.mxu0 0
        %3432 = vmatpush1.bf16.xpose.msra.mxu0 0
        %3433 = vmatprep.subr.bf16.mxu0 0
        %3434 = vmatpush1.bf16.xpose.msra.mxu0 0
        %3435 = vmatprep.subr.bf16.mxu0 0
        %3436 = vmatpush1.bf16.xpose.msra.mxu0 0
        %3437 = vmatprep.mubr.bf16.mxu0 0
        %3438 = vmatmul.mubr.bf16.gmra.mrb[0].mxu0 %v3400
        %v3439 = vpop.f32.mrb[0].mxu0
        %v3440 = vadd.f32 0.0, %v3439
        %v3441 = vpop.f32.mrb[0].mxu0
        %v3442 = vpop.f32.mrb[0].mxu0
        %v3443 = vpop.f32.mrb[0].mxu0
        %3444 = vdwg.mxu0
        %v3445 = vmul.f32 %v3440, 0.17677669
        %v3446 = vsel %vm1965, %v3445, -inf
        %3447 = vmax.xlane.f32.xlu0 %v3446
        %v3448 = vpop.xlane.xlu0 %3447
        %v3449 = vsub.f32 %v3445, %v3448
        %v3450 = vmul.f32 %v3449, 1.442695
        %v3451 = vpow.pop %v3450
        %v3452 = vsel %vm1965, %v3451, 0.0
        %3453 = vadd.xlane.f32.xlu0 %v3452
        %v3454 = vpop.xlane.xlu0 %3453
        %v3455 = vrcp.pop %v3454
        %v3456 = vmul.f32 %v3451, %v3455
        %v3457 = vpack.c.bf16 %v3456, %v3456
        %3458 = vrot.lane.b32.xlu0 %v2902, 32
        %v3459 = vpop.permute.xlu0 %3458
        %v3462 = vsel %vm1965, %v3457, 0
        %3464 = vmatprep.subr.bf16.mxu0 0
        %3465 = vmatpush1.bf16.msra.mxu0 %v3459
        %3466 = vmatprep.subr.bf16.mxu0 0
        %3467 = vmatpush1.bf16.msra.mxu0 0
        %3468 = vmatprep.subr.bf16.mxu0 0
        %3469 = vmatpush1.bf16.msra.mxu0 0
        %3470 = vmatprep.subr.bf16.mxu0 0
        %3471 = vmatpush1.bf16.msra.mxu0 0
        %3472 = vmatprep.subr.bf16.mxu0 0
        %3473 = vmatpush1.bf16.msra.mxu0 0
        %3474 = vmatprep.subr.bf16.mxu0 0
        %3475 = vmatpush1.bf16.msra.mxu0 0
        %3476 = vmatprep.subr.bf16.mxu0 0
        %3477 = vmatpush1.bf16.msra.mxu0 0
        %3478 = vmatprep.subr.bf16.mxu0 0
        %3479 = vmatpush1.bf16.msra.mxu0 0
        %3480 = vmatprep.subr.bf16.mxu0 0
        %3481 = vmatpush1.bf16.msra.mxu0 0
        %3482 = vmatprep.subr.bf16.mxu0 0
        %3483 = vmatpush1.bf16.msra.mxu0 0
        %3484 = vmatprep.subr.bf16.mxu0 0
        %3485 = vmatpush1.bf16.msra.mxu0 0
        %3486 = vmatprep.subr.bf16.mxu0 0
        %3487 = vmatpush1.bf16.msra.mxu0 0
        %3488 = vmatprep.subr.bf16.mxu0 0
        %3489 = vmatpush1.bf16.msra.mxu0 0
        %3490 = vmatprep.subr.bf16.mxu0 0
        %3491 = vmatpush1.bf16.msra.mxu0 0
        %3492 = vmatprep.subr.bf16.mxu0 0
        %3493 = vmatpush1.bf16.msra.mxu0 0
        %3494 = vmatprep.subr.bf16.mxu0 0
        %3495 = vmatpush1.bf16.msra.mxu0 0
        %3496 = vmatprep.mubr.bf16.mxu0 0
        %3497 = vmatmul.mubr.bf16.gmra.mrb[0].mxu0 %v3462
        %v3498 = vpop.f32.mrb[0].mxu0
        %v3499 = vadd.f32 0.0, %v3498
        %v3500 = vpop.f32.mrb[0].mxu0
        %v3501 = vpop.f32.mrb[0].mxu0
        %v3502 = vpop.f32.mrb[0].mxu0
        %3503 = vdwg.mxu0
        %v3504 = vpack.c.bf16 %v3499, %v3499
        %v3509 = vunpack.c.l.b16 %v1559
        %v3510 = vunpack.c.l.b16 %v1560
        %v3511 = vunpack.c.l.b16 %v1561
        %v3512 = vunpack.c.l.b16 %v1562
        %v3513 = vpack.c.b16 %v3510, %v3509
        %v3514 = vpack.c.b16 %v3512, %v3511
        %v3518 = vsel %vm1916, %v3504, 0
        %3520 = vmatprep.subr.bf16.mxu0 0
        %3521 = vmatpush1.bf16.msra.mxu0 %v3513
        %3522 = vmatprep.subr.bf16.mxu0 0
        %3523 = vmatpush1.bf16.msra.mxu0 %v3514
        %3524 = vmatprep.subr.bf16.mxu0 0
        %3525 = vmatpush1.bf16.msra.mxu0 0
        %3526 = vmatprep.subr.bf16.mxu0 0
        %3527 = vmatpush1.bf16.msra.mxu0 0
        %3528 = vmatprep.subr.bf16.mxu0 0
        %3529 = vmatpush1.bf16.msra.mxu0 0
        %3530 = vmatprep.subr.bf16.mxu0 0
        %3531 = vmatpush1.bf16.msra.mxu0 0
        %3532 = vmatprep.subr.bf16.mxu0 0
        %3533 = vmatpush1.bf16.msra.mxu0 0
        %3534 = vmatprep.subr.bf16.mxu0 0
        %3535 = vmatpush1.bf16.msra.mxu0 0
        %3536 = vmatprep.subr.bf16.mxu0 0
        %3537 = vmatpush1.bf16.msra.mxu0 0
        %3538 = vmatprep.subr.bf16.mxu0 0
        %3539 = vmatpush1.bf16.msra.mxu0 0
        %3540 = vmatprep.subr.bf16.mxu0 0
        %3541 = vmatpush1.bf16.msra.mxu0 0
        %3542 = vmatprep.subr.bf16.mxu0 0
        %3543 = vmatpush1.bf16.msra.mxu0 0
        %3544 = vmatprep.subr.bf16.mxu0 0
        %3545 = vmatpush1.bf16.msra.mxu0 0
        %3546 = vmatprep.subr.bf16.mxu0 0
        %3547 = vmatpush1.bf16.msra.mxu0 0
        %3548 = vmatprep.subr.bf16.mxu0 0
        %3549 = vmatpush1.bf16.msra.mxu0 0
        %3550 = vmatprep.subr.bf16.mxu0 0
        %3551 = vmatpush1.bf16.msra.mxu0 0
        %3552 = vmatprep.mubr.bf16.mxu0 0
        %3553 = vmatmul.mubr.bf16.gmra.mrb[0].mxu0 %v3518
        %v3554 = vpop.f32.mrb[0].mxu0
        %v3555 = vadd.f32 0.0, %v3554
        %v3556 = vpop.f32.mrb[0].mxu0
        %v3557 = vpop.f32.mrb[0].mxu0
        %v3558 = vpop.f32.mrb[0].mxu0
        %3559 = vdwg.mxu0
        %v3560 = vadd.f32 %v3394, %v3555
        %v3562 = vlaneseq
        %v3563 = vshrl.u32 %v3562, 7
        %v3564 = vsub.s32 0, %v3563
        %v3565 = vrot.slane %v1563, %v3564
        %v3567 = vadd.f32 %v3560, %v3565
        %v3568 = vadd.f32 %v2613, %v3567
        %3569 = vadd.xlane.f32.xlu0 %v3568
        %v3570 = vpop.xlane.xlu0 %3569
        %v3571 = vmul.f32 %v3570, %v2590
        %v3572 = vsub.f32 %v3568, %v3571
        %v3573 = vmul.f32 %v3572, %v3572
        %3574 = vadd.xlane.f32.xlu0 %v3573
        %v3575 = vpop.xlane.xlu0 %3574
        %v3576 = vmul.f32 %v3575, %v2590
        %v3577 = vadd.f32 %v3576, 1e-05
        %v3578 = vrsqrt.pop %v3577
        %v3579 = vmul.f32 %v3572, %v3578
        %v3581 = vlaneseq
        %v3582 = vshrl.u32 %v3581, 7
        %v3583 = vsub.s32 0, %v3582
        %v3584 = vrot.slane %v1616, %v3583
        %v3586 = vmul.f32 %v3579, %v3584
        %v3588 = vlaneseq
        %v3589 = vshrl.u32 %v3588, 7
        %v3590 = vsub.s32 0, %v3589
        %v3591 = vrot.slane %v1617, %v3590
        %v3593 = vadd.f32 %v3586, %v3591
        %v3594 = vpack.c.bf16 %v3593, %v3593
        %v3596 = vlaneseq
        %v3597 = vshrl.u32 %v3596, 7
        %v3598 = vsub.s32 0, %v3597
        %v3599 = vrot.slane %v1580, %v3598
        %v3600 = vlaneseq
        %v3601 = vshrl.u32 %v3600, 7
        %v3602 = vsub.s32 1, %v3601
        %v3603 = vrot.slane %v1580, %v3602
        %v3622 = vunpack.c.l.b16 %v1564
        %v3623 = vunpack.c.h.b16 %v1564
        %v3624 = vunpack.c.l.b16 %v1565
        %v3625 = vunpack.c.h.b16 %v1565
        %v3626 = vunpack.c.l.b16 %v1566
        %v3627 = vunpack.c.h.b16 %v1566
        %v3628 = vunpack.c.l.b16 %v1567
        %v3629 = vunpack.c.h.b16 %v1567
        %v3630 = vunpack.c.l.b16 %v1568
        %v3631 = vunpack.c.h.b16 %v1568
        %v3632 = vunpack.c.l.b16 %v1569
        %v3633 = vunpack.c.h.b16 %v1569
        %v3634 = vunpack.c.l.b16 %v1570
        %v3635 = vunpack.c.h.b16 %v1570
        %v3636 = vunpack.c.l.b16 %v1571
        %v3637 = vunpack.c.h.b16 %v1571
        %v3638 = vunpack.c.l.b16 %v1572
        %v3639 = vunpack.c.h.b16 %v1572
        %v3640 = vunpack.c.l.b16 %v1573
        %v3641 = vunpack.c.h.b16 %v1573
        %v3642 = vunpack.c.l.b16 %v1574
        %v3643 = vunpack.c.h.b16 %v1574
        %v3644 = vunpack.c.l.b16 %v1575
        %v3645 = vunpack.c.h.b16 %v1575
        %v3646 = vunpack.c.l.b16 %v1576
        %v3647 = vunpack.c.h.b16 %v1576
        %v3648 = vunpack.c.l.b16 %v1577
        %v3649 = vunpack.c.h.b16 %v1577
        %v3650 = vunpack.c.l.b16 %v1578
        %v3651 = vunpack.c.h.b16 %v1578
        %v3652 = vunpack.c.l.b16 %v1579
        %v3653 = vunpack.c.h.b16 %v1579
        %v3654 = vpack.c.b16 %v3624, %v3622
        %v3655 = vpack.c.b16 %v3625, %v3623
        %v3656 = vpack.c.b16 %v3628, %v3626
        %v3657 = vpack.c.b16 %v3629, %v3627
        %v3658 = vpack.c.b16 %v3632, %v3630
        %v3659 = vpack.c.b16 %v3633, %v3631
        %v3660 = vpack.c.b16 %v3636, %v3634
        %v3661 = vpack.c.b16 %v3637, %v3635
        %v3662 = vpack.c.b16 %v3640, %v3638
        %v3663 = vpack.c.b16 %v3641, %v3639
        %v3664 = vpack.c.b16 %v3644, %v3642
        %v3665 = vpack.c.b16 %v3645, %v3643
        %v3666 = vpack.c.b16 %v3648, %v3646
        %v3667 = vpack.c.b16 %v3649, %v3647
        %v3668 = vpack.c.b16 %v3652, %v3650
        %v3669 = vpack.c.b16 %v3653, %v3651
        %3686 = vmatprep.subr.bf16.mxu0 %v3655
        %3687 = vmatpush1.bf16.msra.mxu0 %v3654
        %3688 = vmatprep.subr.bf16.mxu0 %v3657
        %3689 = vmatpush1.bf16.msra.mxu0 %v3656
        %3690 = vmatprep.subr.bf16.mxu0 %v3659
        %3691 = vmatpush1.bf16.msra.mxu0 %v3658
        %3692 = vmatprep.subr.bf16.mxu0 %v3661
        %3693 = vmatpush1.bf16.msra.mxu0 %v3660
        %3694 = vmatprep.subr.bf16.mxu0 %v3663
        %3695 = vmatpush1.bf16.msra.mxu0 %v3662
        %3696 = vmatprep.subr.bf16.mxu0 %v3665
        %3697 = vmatpush1.bf16.msra.mxu0 %v3664
        %3698 = vmatprep.subr.bf16.mxu0 %v3667
        %3699 = vmatpush1.bf16.msra.mxu0 %v3666
        %3700 = vmatprep.subr.bf16.mxu0 %v3669
        %3701 = vmatpush1.bf16.msra.mxu0 %v3668
        %3702 = vmatprep.subr.bf16.mxu0 0
        %3703 = vmatpush1.bf16.msra.mxu0 0
        %3704 = vmatprep.subr.bf16.mxu0 0
        %3705 = vmatpush1.bf16.msra.mxu0 0
        %3706 = vmatprep.subr.bf16.mxu0 0
        %3707 = vmatpush1.bf16.msra.mxu0 0
        %3708 = vmatprep.subr.bf16.mxu0 0
        %3709 = vmatpush1.bf16.msra.mxu0 0
        %3710 = vmatprep.subr.bf16.mxu0 0
        %3711 = vmatpush1.bf16.msra.mxu0 0
        %3712 = vmatprep.subr.bf16.mxu0 0
        %3713 = vmatpush1.bf16.msra.mxu0 0
        %3714 = vmatprep.subr.bf16.mxu0 0
        %3715 = vmatpush1.bf16.msra.mxu0 0
        %3716 = vmatprep.subr.bf16.mxu0 0
        %3717 = vmatpush1.bf16.msra.mxu0 0
        %3718 = vmatprep.mubr.bf16.mxu0 0
        %3719 = vmatmul.mubr.bf16.gmra.mrb[0].mxu0 %v3594
        %v3720 = vpop.f32.mrb[0].mxu0
        %v3721 = vadd.f32 %v3599, %v3720
        %v3722 = vpop.f32.mrb[0].mxu0
        %v3723 = vadd.f32 %v3603, %v3722
        %v3724 = vpop.f32.mrb[0].mxu0
        %v3725 = vpop.f32.mrb[0].mxu0
        %3726 = vdwg.mxu0
        %v3727 = vmax.f32 %v3721, 0.0
        %v3728 = vmax.f32 %v3723, 0.0
        %v3729 = vpack.c.bf16 %v3727, %v3727
        %v3730 = vpack.c.bf16 %v3728, %v3728
        %v3732 = vlaneseq
        %v3733 = vshrl.u32 %v3732, 7
        %v3734 = vsub.s32 0, %v3733
        %v3735 = vrot.slane %v1613, %v3734
        %v3769 = vunpack.c.l.b16 %v1581
        %v3770 = vunpack.c.l.b16 %v1582
        %v3771 = vunpack.c.l.b16 %v1583
        %v3772 = vunpack.c.l.b16 %v1584
        %v3773 = vunpack.c.l.b16 %v1585
        %v3774 = vunpack.c.l.b16 %v1586
        %v3775 = vunpack.c.l.b16 %v1587
        %v3776 = vunpack.c.l.b16 %v1588
        %v3777 = vunpack.c.l.b16 %v1589
        %v3778 = vunpack.c.l.b16 %v1590
        %v3779 = vunpack.c.l.b16 %v1591
        %v3780 = vunpack.c.l.b16 %v1592
        %v3781 = vunpack.c.l.b16 %v1593
        %v3782 = vunpack.c.l.b16 %v1594
        %v3783 = vunpack.c.l.b16 %v1595
        %v3784 = vunpack.c.l.b16 %v1596
        %v3785 = vunpack.c.l.b16 %v1597
        %v3786 = vunpack.c.l.b16 %v1598
        %v3787 = vunpack.c.l.b16 %v1599
        %v3788 = vunpack.c.l.b16 %v1600
        %v3789 = vunpack.c.l.b16 %v1601
        %v3790 = vunpack.c.l.b16 %v1602
        %v3791 = vunpack.c.l.b16 %v1603
        %v3792 = vunpack.c.l.b16 %v1604
        %v3793 = vunpack.c.l.b16 %v1605
        %v3794 = vunpack.c.l.b16 %v1606
        %v3795 = vunpack.c.l.b16 %v1607
        %v3796 = vunpack.c.l.b16 %v1608
        %v3797 = vunpack.c.l.b16 %v1609
        %v3798 = vunpack.c.l.b16 %v1610
        %v3799 = vunpack.c.l.b16 %v1611
        %v3800 = vunpack.c.l.b16 %v1612
        %v3801 = vpack.c.b16 %v3770, %v3769
        %v3802 = vpack.c.b16 %v3772, %v3771
        %v3803 = vpack.c.b16 %v3774, %v3773
        %v3804 = vpack.c.b16 %v3776, %v3775
        %v3805 = vpack.c.b16 %v3778, %v3777
        %v3806 = vpack.c.b16 %v3780, %v3779
        %v3807 = vpack.c.b16 %v3782, %v3781
        %v3808 = vpack.c.b16 %v3784, %v3783
        %v3809 = vpack.c.b16 %v3786, %v3785
        %v3810 = vpack.c.b16 %v3788, %v3787
        %v3811 = vpack.c.b16 %v3790, %v3789
        %v3812 = vpack.c.b16 %v3792, %v3791
        %v3813 = vpack.c.b16 %v3794, %v3793
        %v3814 = vpack.c.b16 %v3796, %v3795
        %v3815 = vpack.c.b16 %v3798, %v3797
        %v3816 = vpack.c.b16 %v3800, %v3799
        %3833 = vmatprep.subr.bf16.mxu0 0
        %3834 = vmatpush1.bf16.msra.mxu0 %v3801
        %3835 = vmatprep.subr.bf16.mxu0 0
        %3836 = vmatpush1.bf16.msra.mxu0 %v3802
        %3837 = vmatprep.subr.bf16.mxu0 0
        %3838 = vmatpush1.bf16.msra.mxu0 %v3803
        %3839 = vmatprep.subr.bf16.mxu0 0
        %3840 = vmatpush1.bf16.msra.mxu0 %v3804
        %3841 = vmatprep.subr.bf16.mxu0 0
        %3842 = vmatpush1.bf16.msra.mxu0 %v3805
        %3843 = vmatprep.subr.bf16.mxu0 0
        %3844 = vmatpush1.bf16.msra.mxu0 %v3806
        %3845 = vmatprep.subr.bf16.mxu0 0
        %3846 = vmatpush1.bf16.msra.mxu0 %v3807
        %3847 = vmatprep.subr.bf16.mxu0 0
        %3848 = vmatpush1.bf16.msra.mxu0 %v3808
        %3849 = vmatprep.subr.bf16.mxu0 0
        %3850 = vmatpush1.bf16.msra.mxu0 %v3809
        %3851 = vmatprep.subr.bf16.mxu0 0
        %3852 = vmatpush1.bf16.msra.mxu0 %v3810
        %3853 = vmatprep.subr.bf16.mxu0 0
        %3854 = vmatpush1.bf16.msra.mxu0 %v3811
        %3855 = vmatprep.subr.bf16.mxu0 0
        %3856 = vmatpush1.bf16.msra.mxu0 %v3812
        %3857 = vmatprep.subr.bf16.mxu0 0
        %3858 = vmatpush1.bf16.msra.mxu0 %v3813
        %3859 = vmatprep.subr.bf16.mxu0 0
        %3860 = vmatpush1.bf16.msra.mxu0 %v3814
        %3861 = vmatprep.subr.bf16.mxu0 0
        %3862 = vmatpush1.bf16.msra.mxu0 %v3815
        %3863 = vmatprep.subr.bf16.mxu0 0
        %3864 = vmatpush1.bf16.msra.mxu0 %v3816
        %3865 = vmatprep.mubr.bf16.mxu0 %v3730
        %3866 = vmatmul.mubr.bf16.gmra.mrb[0].mxu0 %v3729
        %v3867 = vpop.f32.mrb[0].mxu0
        %v3868 = vadd.f32 %v3735, %v3867
        %v3869 = vpop.f32.mrb[0].mxu0
        %v3870 = vpop.f32.mrb[0].mxu0
        %v3871 = vpop.f32.mrb[0].mxu0
        %3872 = vdwg.mxu0
        %v3873 = vadd.f32 %v3593, %v3868
        %3874 = vadd.xlane.f32.xlu0 %v3873
        %v3875 = vpop.xlane.xlu0 %3874
        %v3876 = vmul.f32 %v3875, %v2590
        %v3877 = vsub.f32 %v3873, %v3876
        %v3878 = vmul.f32 %v3877, %v3877
        %3879 = vadd.xlane.f32.xlu0 %v3878
        %v3880 = vpop.xlane.xlu0 %3879
        %v3881 = vmul.f32 %v3880, %v2590
        %v3882 = vadd.f32 %v3881, 1e-05
        %v3883 = vrsqrt.pop %v3882
        %v3884 = vmul.f32 %v3877, %v3883
        %v3886 = vlaneseq
        %v3887 = vshrl.u32 %v3886, 7
        %v3888 = vsub.s32 0, %v3887
        %v3889 = vrot.slane %v1618, %v3888
        %v3891 = vmul.f32 %v3884, %v3889
        %v3893 = vlaneseq
        %v3894 = vshrl.u32 %v3893, 7
        %v3895 = vsub.s32 0, %v3894
        %v3896 = vrot.slane %v1619, %v3895
        %v3898 = vadd.f32 %v3891, %v3896
        %3899 = vst [vmem:[%s1426] sm:$0xff] %v3898
        %s3900 = sand.u32 %s773, 1
        %s3901 = scalar_lea.sflag [#allocation4], %s3900
        %s3902 = sand.u32 %s773, 1
        %s3903 = smul.addr %s3902, 8
        %s3904 = scalar_lea.vmem [#allocation49], %s3903
        // Predicated region
        $region261: #{tpu_custom_call.1} parent=139 // pred_check
          %p3905 = pneg %p783
        $region262: #{tpu_custom_call.1} parent=139 // pred_check_branch
          %3907 = sbr.rel (%p3905) target = $region264
        $region263: #{tpu_custom_call.1} parent=139 // pred_region
          %s3909 = ssub.s32 128, 128
          %3910 = vsyncadd %s3901, %s3909
          %s3911 = smul.addr %s101, 2
          %s3912 = sadd.s32 %s102, %s3911
          %s3913 = smul.addr %s3912, 128
          %s3914 = scalar_lea.hbm %s61, %s3913
          %s3916 = sshll.u32 %s3904, 4
          %s3917 = int_to_ptr.vmem [resolvable:$true] %s3916
          %3919 = dma.vmem_to_hbm [thread:$0]  %s3917, 128, %s3914, %s3901
        $region264: #{tpu_custom_call.1} parent=139 // pred_fallthru
          _
      $region140: #{tpu_custom_call.1} parent=5 // pred_fallthru
        _
      %p3920 = scmp.le.s32.totalorder 2, %s92
      // Predicated region
      $region265: #{tpu_custom_call.1} parent=5 // pred_check
        %p3921 = pneg %p3920
      $region266: #{tpu_custom_call.1} parent=5 // pred_check_branch
        %3923 = sbr.rel (%p3921) target = $region268
      $region267: #{tpu_custom_call.1} parent=5 // pred_region
        %s3924 = ssub.s32 %s92, 2
        // Predicated region
        $region269: #{tpu_custom_call.1} parent=267 // pred_check
          %p3925 = pneg %p789
        $region270: #{tpu_custom_call.1} parent=267 // pred_check_branch
          %3927 = sbr.rel (%p3925) target = $region272
        $region271: #{tpu_custom_call.1} parent=267 // pred_region
          %s3928 = sand.u32 %s774, 1
          %s3929 = scalar_lea.sflag [#allocation4], %s3928
          %s3930 = sand.u32 %s774, 1
          %s3931 = smul.addr %s3930, 8
          %s3932 = scalar_lea.vmem [#allocation49], %s3931
          %3933 = dma.done %s3929, 128
        $region272: #{tpu_custom_call.1} parent=267 // pred_fallthru
          _
      $region268: #{tpu_custom_call.1} parent=5 // pred_fallthru
        _
    $region6: #{tpu_custom_call.1} parent=1 // loop_footer
      %s96 = sadd.s32 1, %s92
    $region7: #{tpu_custom_call.1} parent=1 // loop_footer_branch
      %91 = sbr.rel target = $region3
    $region8: #{tpu_custom_call.1} parent=1 // loop_exit
      _
    %3934 = vsyncpa [#allocation3], 1
    %s3935 = scalar_lea.sflag [#allocation3], 1
    %3936 = vsyncpa %s3935, 1
    %3937 = vsyncpa [#allocation6], 1
    %s3938 = scalar_lea.sflag [#allocation6], 1
    %3939 = vsyncpa %s3938, 1
    %3940 = vsyncpa [#allocation9], 1
    %s3941 = scalar_lea.sflag [#allocation9], 1
    %3942 = vsyncpa %s3941, 1
    %3943 = vsyncpa [#allocation12], 1
    %3944 = vsyncpa [#allocation15], 1
    %3945 = vsyncpa [#allocation18], 1
    %3946 = vsyncpa [#allocation21], 1
    %3947 = vsyncpa [#allocation24], 1
    %3948 = vsyncpa [#allocation27], 1
    %3949 = vsyncpa [#allocation30], 1
    %3950 = vsyncpa [#allocation33], 1
    %3951 = vsyncpa [#allocation36], 1
    %3952 = vsyncpa [#allocation39], 1
    %3953 = vsyncpa [#allocation42], 1
    %3954 = vsyncpa [#allocation45], 1
    %3955 = vsyncpa [#allocation48], 1
    %3956 = vsyncpa [#allocation4], 1
    %s3957 = scalar_lea.sflag [#allocation4], 1
    %3958 = vsyncpa %s3957, 1

</llo_original>
